<compile_context>
chip_gen: v7x
topology: tpu7x:2x2x1
jax: 0.10.0
libtpu: 0.0.40
codegen_flags: <defaults>
</compile_context>

<pallas_src>
import math

import jax
import jax.numpy as jnp
from jax import lax
from jax.experimental import pallas as pl
from jax.experimental.pallas import tpu as pltpu

MIN_NORM = 1e-15                              # hgcn min_norm clamp
PROJ_EPS = 4e-3                               # PoincareBall.eps[float32]
C = 1.0                                       # curvature args.c
SQRT_C = C ** 0.5
MAX_TANH = 1.0 - PROJ_EPS                     # sqrt_c * ball radius
_ARTANH_LIM = math.atanh(MAX_TANH)
MAXNORM = MAX_TANH / SQRT_C                   # proj clamp radius


# ---------------------------- shared numeric helpers ----------------------------

def _inv_and_norm(sumsq):
    """(1/||x||, ||x||) from a sum-of-squares with hgcn MIN_NORM clamps (one rsqrt, no divide)."""
    inv = lax.rsqrt(jnp.maximum(sumsq, MIN_NORM * MIN_NORM))
    norm = jnp.maximum(sumsq * inv, MIN_NORM)
    return inv, norm


def _artanh(x):
    # Safety-net clip; after any proj the argument is <= 1 - PROJ_EPS so it never fires.
    x = jnp.clip(x, -1.0 + 1e-7, 1.0 - 1e-7)
    return 0.5 * (jnp.log1p(x) - jnp.log1p(-x))


def _rowsum(v):
    """sum(v, -1, keepdims=True) as an (N,H)@(H,1) MXU dot to keep the XLU free."""
    ones = jnp.ones((v.shape[-1], 1), jnp.float32)
    return jnp.dot(v, ones, preferred_element_type=jnp.float32)


def _expmap0_proj_host(u, c):
    """proj(expmap0(u)) in plain JAX (wrapper-side constants only)."""
    sqrt_c = c ** 0.5
    sumsq = jnp.sum(u * u, axis=-1, keepdims=True)
    inv, norm = _inv_and_norm(sumsq)
    t = jnp.minimum(jnp.tanh(sqrt_c * norm), MAX_TANH)
    return (t * (inv / sqrt_c)) * u


# ---------------------------- Pallas kernel: whole forward ----------------------------

def hyp_gcn3_kernel(cy2_ref,                                  # SMEM (3,): c*||hb_l||^2
                    x_ref, adj_ref, pool_ref,
                    w1t_ref, hb1_ref, whb1_ref,
                    w2t_ref, hb2_ref, whb2_ref,
                    w3t_ref, hb3_ref, whb3_ref,
                    lwt_ref, lb_ref, out_ref):
    c = C
    sqrt_c = SQRT_C
    adj = adj_ref[...]                                        # bf16 (N, N)
    pool = pool_ref[...]                                      # bf16 (G, N)

    # manifold.proj(expmap0(proj_tan0(x))); proj_tan0 is identity on the Poincare ball.
    x0 = x_ref[...]
    inv_x0, x0_norm = _inv_and_norm(_rowsum(x0 * x0))
    t0 = jnp.minimum(jnp.tanh(sqrt_c * x0_norm), MAX_TANH)
    h = (t0 * (inv_x0 / sqrt_c)) * x0
    h_sumsq = (t0 / sqrt_c) ** 2                              # analytic ||h||^2, carried forward

    def hgcn_layer(h, h_sumsq, wt, hb, whb, c_y2, need_next):
        # ---- HypLinear: proj(mobius_matvec(W, h)), then mobius_add with the constant bias ----
        inv_hn, h_norm = _inv_and_norm(h_sumsq)
        mx = jnp.dot(h, wt, preferred_element_type=jnp.float32)
        inv_mxn, mx_norm = _inv_and_norm(_rowsum(mx * mx))
        tmv = jnp.minimum(jnp.tanh(mx_norm * inv_hn * _artanh(sqrt_c * h_norm)), MAX_TANH)
        mv_scale = tmv * (inv_mxn / sqrt_c)                   # mv = mv_scale * mx (mult deferred)
        mv_sumsq = (tmv / sqrt_c) ** 2                        # analytic ||mv||^2 (no extra reduce)

        # mobius_add(mv, hyp_bias): y2 hoisted (SMEM scalar), <mv,hb> = mv_scale * (h @ W^T hb^T).
        xy = mv_scale * jnp.dot(h, whb, preferred_element_type=jnp.float32)
        two_cxy = (2.0 * c) * xy
        denom = 1.0 + two_cxy + (c * c_y2) * mv_sumsq
        recip = pl.reciprocal(jnp.maximum(denom, MIN_NORM), approx=True)
        res = ((1.0 + two_cxy + c_y2) * (mv_scale * recip)) * mx \
              + ((1.0 - c * mv_sumsq) * recip) * hb

        # ---- HypAgg (use_att=False): logmap0(proj(res)) fused, tangent aggregation with adj ----
        inv_rn, r_norm = _inv_and_norm(_rowsum(res * res))
        lscale = _artanh(sqrt_c * jnp.minimum(r_norm, MAXNORM)) * (inv_rn / sqrt_c)
        xt = lscale * res
        support = jnp.dot(adj, xt.astype(adj.dtype), preferred_element_type=jnp.float32)

        # logmap0(proj(expmap0(support))) collapses to a clamp; ReLU in tangent space (HypAct).
        inv_sn, s_norm = _inv_and_norm(_rowsum(support * support))
        s_clamp = sqrt_c * s_norm > _ARTANH_LIM
        ht = jnp.maximum(
            jnp.where(s_clamp, (_ARTANH_LIM / sqrt_c) * inv_sn, 1.0) * support, 0.0)

        # Readout tangent = logmap0(proj(expmap0(ht))): clamp-only path, no transcendental.
        inv_tn, t_norm = _inv_and_norm(_rowsum(ht * ht))
        t_clamp = sqrt_c * t_norm > _ARTANH_LIM
        tan = jnp.where(t_clamp, (_ARTANH_LIM / sqrt_c) * inv_tn, 1.0) * ht

        if not need_next:
            return None, None, tan                            # layer 3: tangent-only (no tanh)

        # HypAct expmap0+proj -> next layer's hyperbolic point, with analytic ||.||^2.
        tt = jnp.minimum(jnp.tanh(sqrt_c * t_norm), MAX_TANH)
        h_next = (tt * (inv_tn / sqrt_c)) * ht
        return h_next, (tt / sqrt_c) ** 2, tan

    # TODO(synk): hyplayers.NewPool source unavailable; treated as identity (it must keep N
    # unchanged since `adj` is reused by the next HGCN layer in the original forward).
    h1, h1_sq, t1 = hgcn_layer(h, h_sumsq, w1t_ref[...], hb1_ref[...], whb1_ref[...],
                               cy2_ref[0], True)
    h2, h2_sq, t2 = hgcn_layer(h1, h1_sq, w2t_ref[...], hb2_ref[...], whb2_ref[...],
                               cy2_ref[1], True)
    _, _, t3 = hgcn_layer(h2, h2_sq, w3t_ref[...], hb3_ref[...], whb3_ref[...],
                          cy2_ref[2], False)

    # Graph readout (global_add_pool x3): three MXU dots, no lane-axis concat.
    p1 = jnp.dot(pool, t1.astype(pool.dtype), preferred_element_type=jnp.float32)
    p2 = jnp.dot(pool, t2.astype(pool.dtype), preferred_element_type=jnp.float32)
    p3 = jnp.dot(pool, t3.astype(pool.dtype), preferred_element_type=jnp.float32)
    feat = jnp.maximum(p1, 0.0) + jnp.maximum(p2, 0.0) + jnp.maximum(p3, 0.0)

    logits = jnp.dot(feat, lwt_ref[...], preferred_element_type=jnp.float32) + lb_ref[...]

    # log_softmax along the class dim (divide-free form).
    z = logits - jnp.max(logits, axis=-1, keepdims=True)
    out_ref[...] = z - jnp.log(jnp.sum(jnp.exp(z), axis=-1, keepdims=True))


# ---------------------------- wrapper (adj/pool construction, constants, pallas_call) ---------

def hyp_gcn3_forward(x, edge_index, batch, params, num_graphs):
    N = x.shape[0]
    row, col = edge_index[0], edge_index[1]
    # edge_to_adj: weights = (x[row].sum(-1) + x[col].sum(-1)) / 2, scattered into NxN.
    weights = (jnp.sum(x[row], axis=-1) + jnp.sum(x[col], axis=-1)) / 2.0
    adj = jnp.zeros((N, N), jnp.float32).at[row, col].set(weights)
    pool = (batch[None, :] == jnp.arange(num_graphs)[:, None]).astype(jnp.float32)

    # bf16 operands for the O(N^2)/O(G*N) matmul inputs (f32 accumulation inside the kernel).
    adj_bf16 = adj.astype(jnp.bfloat16)
    pool_bf16 = pool.astype(jnp.bfloat16)

    # Constant (eval-mode) bias terms hoisted out of the kernel:
    #   hb  = proj(expmap0(b))                    (1, Hout)
    #   cy2 = c * ||hb||^2                        scalar (SMEM)
    #   whb = W^T @ hb^T so that <mobius_matvec(W,h), hb> = scale * (h @ whb)   (Hin, 1)
    def bias_consts(w, b):
        hb = _expmap0_proj_host(b[None, :].astype(jnp.float32), C)
        cy2 = C * jnp.sum(hb * hb)
        whb = w.T.astype(jnp.float32) @ hb.T
        return hb, cy2, whb

    hb1, cy2_1, whb1 = bias_consts(params["w1"], params["b1"])
    hb2, cy2_2, whb2 = bias_consts(params["w2"], params["b2"])
    hb3, cy2_3, whb3 = bias_consts(params["w3"], params["b3"])
    cy2 = jnp.stack([cy2_1, cy2_2, cy2_3]).astype(jnp.float32)          # (3,) -> SMEM

    inputs = (
        cy2,
        x.astype(jnp.float32), adj_bf16, pool_bf16,
        params["w1"].T.astype(jnp.float32), hb1, whb1,
        params["w2"].T.astype(jnp.float32), hb2, whb2,
        params["w3"].T.astype(jnp.float32), hb3, whb3,
        params["lw"].T.astype(jnp.float32), params["lb"][None, :].astype(jnp.float32),
    )
    vmem = pl.BlockSpec(memory_space=pltpu.MemorySpace.VMEM)
    smem = pl.BlockSpec(memory_space=pltpu.MemorySpace.SMEM)
    nclass = params["lw"].shape[0]

    # TODO(synk): for realistic N, replace this gridless whole-resident call with per-layer
    # row-block "parallel" grids (v7x megacore) + in-kernel adj construction via scalar prefetch.
    return pl.pallas_call(
        hyp_gcn3_kernel,
        out_shape=jax.ShapeDtypeStruct((num_graphs, nclass), jnp.float32),
        in_specs=[smem] + [vmem] * (len(inputs) - 1),
        out_specs=vmem,
        compiler_params=pltpu.CompilerParams(vmem_limit_bytes=32 * 1024 * 1024),
    )(*inputs)


if __name__ == "__main__":
    N, NFEAT, NHID, NCLASS, G = 8, 16, 32, 4, 2

    key = jax.random.PRNGKey(0)
    ks = jax.random.split(key, 10)

    x = 0.5 * jax.random.normal(ks[0], (N, NFEAT), jnp.float32)
    edge_list = [(0, 1), (1, 0), (1, 2), (2, 1), (2, 3), (3, 2), (3, 0), (0, 3),
                 (4, 5), (5, 4), (5, 6), (6, 5), (6, 7), (7, 6), (7, 4), (4, 7)]
    edge_index = jnp.array(edge_list, jnp.int32).T          # (2, E)
    batch = jnp.array([0, 0, 0, 0, 1, 1, 1, 1], jnp.int32)  # node -> graph id

    def init(k, shape, scale):
        return scale * jax.random.normal(k, shape, jnp.float32)

    params = {
        "w1": init(ks[1], (NHID, NFEAT), 0.1),   # HypLinear: (out, in)
        "b1": init(ks[2], (NHID,), 0.01),
        "w2": init(ks[3], (NHID, NHID), 0.1),
        "b2": init(ks[4], (NHID,), 0.01),
        "w3": init(ks[5], (NHID, NHID), 0.1),
        "b3": init(ks[6], (NHID,), 0.01),
        "lw": init(ks[7], (NCLASS, NHID), 0.1),  # lin3: (out, in)
        "lb": init(ks[8], (NCLASS,), 0.01),
    }

    out = hyp_gcn3_forward(x, edge_index, batch, params, G)
    out = jax.block_until_ready(out)
    assert out.shape == (G, NCLASS)
    assert bool(jnp.all(jnp.isfinite(out)))
    print("KERNEL_OK")
</pallas_src>

<mosaic_0001>
module attributes {stable_mosaic.version = 11 : i64} {
  func.func @hyp_gcn3_kernel(%arg0: memref<3xf32, #tpu.memory_space<smem>>, %arg1: memref<8x16xf32, #tpu.memory_space<vmem>>, %arg2: memref<8x8xbf16, #tpu.memory_space<vmem>>, %arg3: memref<2x8xbf16, #tpu.memory_space<vmem>>, %arg4: memref<16x32xf32, #tpu.memory_space<vmem>>, %arg5: memref<1x32xf32, #tpu.memory_space<vmem>>, %arg6: memref<16x1xf32, #tpu.memory_space<vmem>>, %arg7: memref<32x32xf32, #tpu.memory_space<vmem>>, %arg8: memref<1x32xf32, #tpu.memory_space<vmem>>, %arg9: memref<32x1xf32, #tpu.memory_space<vmem>>, %arg10: memref<32x32xf32, #tpu.memory_space<vmem>>, %arg11: memref<1x32xf32, #tpu.memory_space<vmem>>, %arg12: memref<32x1xf32, #tpu.memory_space<vmem>>, %arg13: memref<32x4xf32, #tpu.memory_space<vmem>>, %arg14: memref<1x4xf32, #tpu.memory_space<vmem>>, %arg15: memref<2x4xf32, #tpu.memory_space<vmem>>) attributes {dimension_semantics = [], scalar_prefetch = 0 : i64, scratch_operands = 0 : i64, tpu.core_type = #tpu.core_type<tc>} {
    %c0 = arith.constant 0 : index
    %c0_0 = arith.constant 0 : index
    %0 = vector.load %arg2[%c0, %c0_0] : memref<8x8xbf16, #tpu.memory_space<vmem>>, vector<8x8xbf16>
    %c0_1 = arith.constant 0 : index
    %c0_2 = arith.constant 0 : index
    %1 = vector.load %arg3[%c0_1, %c0_2] : memref<2x8xbf16, #tpu.memory_space<vmem>>, vector<2x8xbf16>
    %c0_3 = arith.constant 0 : index
    %c0_4 = arith.constant 0 : index
    %2 = vector.load %arg1[%c0_3, %c0_4] : memref<8x16xf32, #tpu.memory_space<vmem>>, vector<8x16xf32>
    %3 = arith.mulf %2, %2 : vector<8x16xf32>
    %cst = arith.constant 1.000000e+00 : f32
    %4 = vector.broadcast %cst : f32 to vector<16x1xf32>
    %cst_5 = arith.constant dense<0.000000e+00> : vector<8x1xf32>
    %5 = tpu.matmul %3, %4, %cst_5 {dimension_numbers = #tpu.dot_dimension_numbers<[1], [0], [0], [1], [0, 0, 1, 1], [], []>} : vector<8x16xf32>, vector<16x1xf32>, vector<8x1xf32> -> vector<8x1xf32>
    %cst_6 = arith.constant 1.000000e-30 : f32
    %6 = vector.broadcast %cst_6 : f32 to vector<8x1xf32>
    %7 = arith.maximumf %5, %6 : vector<8x1xf32>
    %8 = math.rsqrt %7 : vector<8x1xf32>
    %9 = arith.mulf %5, %8 : vector<8x1xf32>
    %cst_7 = arith.constant 1.000000e-15 : f32
    %10 = vector.broadcast %cst_7 : f32 to vector<8x1xf32>
    %11 = arith.maximumf %9, %10 : vector<8x1xf32>
    %cst_8 = arith.constant 1.000000e+00 : f32
    %12 = vector.broadcast %cst_8 : f32 to vector<8x1xf32>
    %13 = arith.mulf %12, %11 : vector<8x1xf32>
    %14 = math.tanh %13 : vector<8x1xf32>
    %cst_9 = arith.constant 0.995999991 : f32
    %15 = vector.broadcast %cst_9 : f32 to vector<8x1xf32>
    %16 = arith.minimumf %14, %15 : vector<8x1xf32>
    %cst_10 = arith.constant 1.000000e+00 : f32
    %17 = vector.broadcast %cst_10 : f32 to vector<8x1xf32>
    %18 = arith.divf %8, %17 : vector<8x1xf32>
    %19 = arith.mulf %16, %18 : vector<8x1xf32>
    %20 = vector.broadcast %19 : vector<8x1xf32> to vector<8x16xf32>
    %21 = arith.mulf %20, %2 : vector<8x16xf32>
    %cst_11 = arith.constant 1.000000e+00 : f32
    %22 = vector.broadcast %cst_11 : f32 to vector<8x1xf32>
    %23 = arith.divf %16, %22 : vector<8x1xf32>
    %24 = arith.mulf %23, %23 : vector<8x1xf32>
    %c0_12 = arith.constant 0 : index
    %c0_13 = arith.constant 0 : index
    %25 = vector.load %arg4[%c0_12, %c0_13] : memref<16x32xf32, #tpu.memory_space<vmem>>, vector<16x32xf32>
    %c0_14 = arith.constant 0 : index
    %c0_15 = arith.constant 0 : index
    %26 = vector.load %arg5[%c0_14, %c0_15] : memref<1x32xf32, #tpu.memory_space<vmem>>, vector<1x32xf32>
    %c0_16 = arith.constant 0 : index
    %c0_17 = arith.constant 0 : index
    %27 = vector.load %arg6[%c0_16, %c0_17] : memref<16x1xf32, #tpu.memory_space<vmem>>, vector<16x1xf32>
    %c0_18 = arith.constant 0 : index
    %28 = memref.load %arg0[%c0_18] : memref<3xf32, #tpu.memory_space<smem>>
    %cst_19 = arith.constant 1.000000e-30 : f32
    %29 = vector.broadcast %cst_19 : f32 to vector<8x1xf32>
    %30 = arith.maximumf %24, %29 : vector<8x1xf32>
    %31 = math.rsqrt %30 : vector<8x1xf32>
    %32 = arith.mulf %24, %31 : vector<8x1xf32>
    %cst_20 = arith.constant 1.000000e-15 : f32
    %33 = vector.broadcast %cst_20 : f32 to vector<8x1xf32>
    %34 = arith.maximumf %32, %33 : vector<8x1xf32>
    %cst_21 = arith.constant dense<0.000000e+00> : vector<8x32xf32>
    %35 = tpu.matmul %21, %25, %cst_21 {dimension_numbers = #tpu.dot_dimension_numbers<[1], [0], [0], [1], [0, 0, 1, 1], [], []>} : vector<8x16xf32>, vector<16x32xf32>, vector<8x32xf32> -> vector<8x32xf32>
    %36 = arith.mulf %35, %35 : vector<8x32xf32>
    %cst_22 = arith.constant 1.000000e+00 : f32
    %37 = vector.broadcast %cst_22 : f32 to vector<32x1xf32>
    %cst_23 = arith.constant dense<0.000000e+00> : vector<8x1xf32>
    %38 = tpu.matmul %36, %37, %cst_23 {dimension_numbers = #tpu.dot_dimension_numbers<[1], [0], [0], [1], [0, 0, 1, 1], [], []>} : vector<8x32xf32>, vector<32x1xf32>, vector<8x1xf32> -> vector<8x1xf32>
    %cst_24 = arith.constant 1.000000e-30 : f32
    %39 = vector.broadcast %cst_24 : f32 to vector<8x1xf32>
    %40 = arith.maximumf %38, %39 : vector<8x1xf32>
    %41 = math.rsqrt %40 : vector<8x1xf32>
    %42 = arith.mulf %38, %41 : vector<8x1xf32>
    %cst_25 = arith.constant 1.000000e-15 : f32
    %43 = vector.broadcast %cst_25 : f32 to vector<8x1xf32>
    %44 = arith.maximumf %42, %43 : vector<8x1xf32>
    %45 = arith.mulf %44, %31 : vector<8x1xf32>
    %cst_26 = arith.constant 1.000000e+00 : f32
    %46 = vector.broadcast %cst_26 : f32 to vector<8x1xf32>
    %47 = arith.mulf %46, %34 : vector<8x1xf32>
    %cst_27 = arith.constant -0.99999988 : f32
    %cst_28 = arith.constant 0.99999988 : f32
    %48 = vector.broadcast %cst_27 : f32 to vector<8x1xf32>
    %49 = arith.maximumf %48, %47 : vector<8x1xf32>
    %50 = vector.broadcast %cst_28 : f32 to vector<8x1xf32>
    %51 = arith.minimumf %50, %49 : vector<8x1xf32>
    %52 = math.log1p %51 : vector<8x1xf32>
    %cst_29 = arith.constant 0.000000e+00 : f32
    %53 = vector.broadcast %cst_29 : f32 to vector<8x1xf32>
    %54 = arith.subf %53, %51 : vector<8x1xf32>
    %55 = math.log1p %54 : vector<8x1xf32>
    %56 = arith.subf %52, %55 : vector<8x1xf32>
    %cst_30 = arith.constant 5.000000e-01 : f32
    %57 = vector.broadcast %cst_30 : f32 to vector<8x1xf32>
    %58 = arith.mulf %57, %56 : vector<8x1xf32>
    %59 = arith.mulf %45, %58 : vector<8x1xf32>
    %60 = math.tanh %59 : vector<8x1xf32>
    %cst_31 = arith.constant 0.995999991 : f32
    %61 = vector.broadcast %cst_31 : f32 to vector<8x1xf32>
    %62 = arith.minimumf %60, %61 : vector<8x1xf32>
    %cst_32 = arith.constant 1.000000e+00 : f32
    %63 = vector.broadcast %cst_32 : f32 to vector<8x1xf32>
    %64 = arith.divf %41, %63 : vector<8x1xf32>
    %65 = arith.mulf %62, %64 : vector<8x1xf32>
    %cst_33 = arith.constant 1.000000e+00 : f32
    %66 = vector.broadcast %cst_33 : f32 to vector<8x1xf32>
    %67 = arith.divf %62, %66 : vector<8x1xf32>
    %68 = arith.mulf %67, %67 : vector<8x1xf32>
    %cst_34 = arith.constant dense<0.000000e+00> : vector<8x1xf32>
    %69 = tpu.matmul %21, %27, %cst_34 {dimension_numbers = #tpu.dot_dimension_numbers<[1], [0], [0], [1], [0, 0, 1, 1], [], []>} : vector<8x16xf32>, vector<16x1xf32>, vector<8x1xf32> -> vector<8x1xf32>
    %70 = arith.mulf %65, %69 : vector<8x1xf32>
    %cst_35 = arith.constant 2.000000e+00 : f32
    %71 = vector.broadcast %cst_35 : f32 to vector<8x1xf32>
    %72 = arith.mulf %71, %70 : vector<8x1xf32>
    %cst_36 = arith.constant 1.000000e+00 : f32
    %73 = vector.broadcast %cst_36 : f32 to vector<8x1xf32>
    %74 = arith.addf %73, %72 : vector<8x1xf32>
    %cst_37 = arith.constant 1.000000e+00 : f32
    %75 = arith.mulf %cst_37, %28 : f32
    %76 = vector.broadcast %75 : f32 to vector<8x1xf32>
    %77 = arith.mulf %76, %68 : vector<8x1xf32>
    %78 = arith.addf %74, %77 : vector<8x1xf32>
    %cst_38 = arith.constant 1.000000e-15 : f32
    %79 = vector.broadcast %cst_38 : f32 to vector<8x1xf32>
    %80 = arith.maximumf %78, %79 : vector<8x1xf32>
    %81 = tpu.reciprocal %80 {approx = true} : vector<8x1xf32> -> vector<8x1xf32>
    %cst_39 = arith.constant 1.000000e+00 : f32
    %82 = vector.broadcast %cst_39 : f32 to vector<8x1xf32>
    %83 = arith.addf %82, %72 : vector<8x1xf32>
    %84 = vector.broadcast %28 : f32 to vector<8x1xf32>
    %85 = arith.addf %83, %84 : vector<8x1xf32>
    %86 = arith.mulf %65, %81 : vector<8x1xf32>
    %87 = arith.mulf %85, %86 : vector<8x1xf32>
    %88 = vector.broadcast %87 : vector<8x1xf32> to vector<8x32xf32>
    %89 = arith.mulf %88, %35 : vector<8x32xf32>
    %cst_40 = arith.constant 1.000000e+00 : f32
    %90 = vector.broadcast %cst_40 : f32 to vector<8x1xf32>
    %91 = arith.mulf %90, %68 : vector<8x1xf32>
    %cst_41 = arith.constant 1.000000e+00 : f32
    %92 = vector.broadcast %cst_41 : f32 to vector<8x1xf32>
    %93 = arith.subf %92, %91 : vector<8x1xf32>
    %94 = arith.mulf %93, %81 : vector<8x1xf32>
    %95 = vector.broadcast %94 : vector<8x1xf32> to vector<8x32xf32>
    %96 = vector.broadcast %26 : vector<1x32xf32> to vector<8x32xf32>
    %97 = arith.mulf %95, %96 : vector<8x32xf32>
    %98 = arith.addf %89, %97 : vector<8x32xf32>
    %99 = arith.mulf %98, %98 : vector<8x32xf32>
    %cst_42 = arith.constant 1.000000e+00 : f32
    %100 = vector.broadcast %cst_42 : f32 to vector<32x1xf32>
    %cst_43 = arith.constant dense<0.000000e+00> : vector<8x1xf32>
    %101 = tpu.matmul %99, %100, %cst_43 {dimension_numbers = #tpu.dot_dimension_numbers<[1], [0], [0], [1], [0, 0, 1, 1], [], []>} : vector<8x32xf32>, vector<32x1xf32>, vector<8x1xf32> -> vector<8x1xf32>
    %cst_44 = arith.constant 1.000000e-30 : f32
    %102 = vector.broadcast %cst_44 : f32 to vector<8x1xf32>
    %103 = arith.maximumf %101, %102 : vector<8x1xf32>
    %104 = math.rsqrt %103 : vector<8x1xf32>
    %105 = arith.mulf %101, %104 : vector<8x1xf32>
    %cst_45 = arith.constant 1.000000e-15 : f32
    %106 = vector.broadcast %cst_45 : f32 to vector<8x1xf32>
    %107 = arith.maximumf %105, %106 : vector<8x1xf32>
    %cst_46 = arith.constant 0.995999991 : f32
    %108 = vector.broadcast %cst_46 : f32 to vector<8x1xf32>
    %109 = arith.minimumf %107, %108 : vector<8x1xf32>
    %cst_47 = arith.constant 1.000000e+00 : f32
    %110 = vector.broadcast %cst_47 : f32 to vector<8x1xf32>
    %111 = arith.mulf %110, %109 : vector<8x1xf32>
    %cst_48 = arith.constant -0.99999988 : f32
    %cst_49 = arith.constant 0.99999988 : f32
    %112 = vector.broadcast %cst_48 : f32 to vector<8x1xf32>
    %113 = arith.maximumf %112, %111 : vector<8x1xf32>
    %114 = vector.broadcast %cst_49 : f32 to vector<8x1xf32>
    %115 = arith.minimumf %114, %113 : vector<8x1xf32>
    %116 = math.log1p %115 : vector<8x1xf32>
    %cst_50 = arith.constant 0.000000e+00 : f32
    %117 = vector.broadcast %cst_50 : f32 to vector<8x1xf32>
    %118 = arith.subf %117, %115 : vector<8x1xf32>
    %119 = math.log1p %118 : vector<8x1xf32>
    %120 = arith.subf %116, %119 : vector<8x1xf32>
    %cst_51 = arith.constant 5.000000e-01 : f32
    %121 = vector.broadcast %cst_51 : f32 to vector<8x1xf32>
    %122 = arith.mulf %121, %120 : vector<8x1xf32>
    %cst_52 = arith.constant 1.000000e+00 : f32
    %123 = vector.broadcast %cst_52 : f32 to vector<8x1xf32>
    %124 = arith.divf %104, %123 : vector<8x1xf32>
    %125 = arith.mulf %122, %124 : vector<8x1xf32>
    %126 = vector.broadcast %125 : vector<8x1xf32> to vector<8x32xf32>
    %127 = arith.mulf %126, %98 : vector<8x32xf32>
    %128 = arith.truncf %127 : vector<8x32xf32> to vector<8x32xbf16>
    %cst_53 = arith.constant dense<0.000000e+00> : vector<8x32xf32>
    %129 = tpu.matmul %0, %128, %cst_53 {dimension_numbers = #tpu.dot_dimension_numbers<[1], [0], [0], [1], [0, 0, 1, 1], [], []>} : vector<8x8xbf16>, vector<8x32xbf16>, vector<8x32xf32> -> vector<8x32xf32>
    %130 = arith.mulf %129, %129 : vector<8x32xf32>
    %cst_54 = arith.constant 1.000000e+00 : f32
    %131 = vector.broadcast %cst_54 : f32 to vector<32x1xf32>
    %cst_55 = arith.constant dense<0.000000e+00> : vector<8x1xf32>
    %132 = tpu.matmul %130, %131, %cst_55 {dimension_numbers = #tpu.dot_dimension_numbers<[1], [0], [0], [1], [0, 0, 1, 1], [], []>} : vector<8x32xf32>, vector<32x1xf32>, vector<8x1xf32> -> vector<8x1xf32>
    %cst_56 = arith.constant 1.000000e-30 : f32
    %133 = vector.broadcast %cst_56 : f32 to vector<8x1xf32>
    %134 = arith.maximumf %132, %133 : vector<8x1xf32>
    %135 = math.rsqrt %134 : vector<8x1xf32>
    %136 = arith.mulf %132, %135 : vector<8x1xf32>
    %cst_57 = arith.constant 1.000000e-15 : f32
    %137 = vector.broadcast %cst_57 : f32 to vector<8x1xf32>
    %138 = arith.maximumf %136, %137 : vector<8x1xf32>
    %cst_58 = arith.constant 1.000000e+00 : f32
    %139 = vector.broadcast %cst_58 : f32 to vector<8x1xf32>
    %140 = arith.mulf %139, %138 : vector<8x1xf32>
    %cst_59 = arith.constant 3.10630298 : f32
    %141 = vector.broadcast %cst_59 : f32 to vector<8x1xf32>
    %142 = arith.cmpf ogt, %140, %141 : vector<8x1xf32>
    %cst_60 = arith.constant 3.10630298 : f32
    %143 = vector.broadcast %cst_60 : f32 to vector<8x1xf32>
    %144 = arith.mulf %143, %135 : vector<8x1xf32>
    %cst_61 = arith.constant 1.000000e+00 : f32
    %145 = vector.broadcast %cst_61 : f32 to vector<8x1xf32>
    %146 = arith.select %142, %144, %145 : vector<8x1xi1>, vector<8x1xf32>
    %147 = vector.broadcast %146 : vector<8x1xf32> to vector<8x32xf32>
    %148 = arith.mulf %147, %129 : vector<8x32xf32>
    %cst_62 = arith.constant 0.000000e+00 : f32
    %149 = vector.broadcast %cst_62 : f32 to vector<8x32xf32>
    %150 = arith.maximumf %148, %149 : vector<8x32xf32>
    %151 = arith.mulf %150, %150 : vector<8x32xf32>
    %cst_63 = arith.constant 1.000000e+00 : f32
    %152 = vector.broadcast %cst_63 : f32 to vector<32x1xf32>
    %cst_64 = arith.constant dense<0.000000e+00> : vector<8x1xf32>
    %153 = tpu.matmul %151, %152, %cst_64 {dimension_numbers = #tpu.dot_dimension_numbers<[1], [0], [0], [1], [0, 0, 1, 1], [], []>} : vector<8x32xf32>, vector<32x1xf32>, vector<8x1xf32> -> vector<8x1xf32>
    %cst_65 = arith.constant 1.000000e-30 : f32
    %154 = vector.broadcast %cst_65 : f32 to vector<8x1xf32>
    %155 = arith.maximumf %153, %154 : vector<8x1xf32>
    %156 = math.rsqrt %155 : vector<8x1xf32>
    %157 = arith.mulf %153, %156 : vector<8x1xf32>
    %cst_66 = arith.constant 1.000000e-15 : f32
    %158 = vector.broadcast %cst_66 : f32 to vector<8x1xf32>
    %159 = arith.maximumf %157, %158 : vector<8x1xf32>
    %cst_67 = arith.constant 1.000000e+00 : f32
    %160 = vector.broadcast %cst_67 : f32 to vector<8x1xf32>
    %161 = arith.mulf %160, %159 : vector<8x1xf32>
    %cst_68 = arith.constant 3.10630298 : f32
    %162 = vector.broadcast %cst_68 : f32 to vector<8x1xf32>
    %163 = arith.cmpf ogt, %161, %162 : vector<8x1xf32>
    %cst_69 = arith.constant 3.10630298 : f32
    %164 = vector.broadcast %cst_69 : f32 to vector<8x1xf32>
    %165 = arith.mulf %164, %156 : vector<8x1xf32>
    %cst_70 = arith.constant 1.000000e+00 : f32
    %166 = vector.broadcast %cst_70 : f32 to vector<8x1xf32>
    %167 = arith.select %163, %165, %166 : vector<8x1xi1>, vector<8x1xf32>
    %168 = vector.broadcast %167 : vector<8x1xf32> to vector<8x32xf32>
    %169 = arith.mulf %168, %150 : vector<8x32xf32>
    %cst_71 = arith.constant 1.000000e+00 : f32
    %170 = vector.broadcast %cst_71 : f32 to vector<8x1xf32>
    %171 = arith.mulf %170, %159 : vector<8x1xf32>
    %172 = math.tanh %171 : vector<8x1xf32>
    %cst_72 = arith.constant 0.995999991 : f32
    %173 = vector.broadcast %cst_72 : f32 to vector<8x1xf32>
    %174 = arith.minimumf %172, %173 : vector<8x1xf32>
    %cst_73 = arith.constant 1.000000e+00 : f32
    %175 = vector.broadcast %cst_73 : f32 to vector<8x1xf32>
    %176 = arith.divf %156, %175 : vector<8x1xf32>
    %177 = arith.mulf %174, %176 : vector<8x1xf32>
    %178 = vector.broadcast %177 : vector<8x1xf32> to vector<8x32xf32>
    %179 = arith.mulf %178, %150 : vector<8x32xf32>
    %cst_74 = arith.constant 1.000000e+00 : f32
    %180 = vector.broadcast %cst_74 : f32 to vector<8x1xf32>
    %181 = arith.divf %174, %180 : vector<8x1xf32>
    %182 = arith.mulf %181, %181 : vector<8x1xf32>
    %c0_75 = arith.constant 0 : index
    %c0_76 = arith.constant 0 : index
    %183 = vector.load %arg7[%c0_75, %c0_76] : memref<32x32xf32, #tpu.memory_space<vmem>>, vector<32x32xf32>
    %c0_77 = arith.constant 0 : index
    %c0_78 = arith.constant 0 : index
    %184 = vector.load %arg8[%c0_77, %c0_78] : memref<1x32xf32, #tpu.memory_space<vmem>>, vector<1x32xf32>
    %c0_79 = arith.constant 0 : index
    %c0_80 = arith.constant 0 : index
    %185 = vector.load %arg9[%c0_79, %c0_80] : memref<32x1xf32, #tpu.memory_space<vmem>>, vector<32x1xf32>
    %c1 = arith.constant 1 : index
    %186 = memref.load %arg0[%c1] : memref<3xf32, #tpu.memory_space<smem>>
    %cst_81 = arith.constant 1.000000e-30 : f32
    %187 = vector.broadcast %cst_81 : f32 to vector<8x1xf32>
    %188 = arith.maximumf %182, %187 : vector<8x1xf32>
    %189 = math.rsqrt %188 : vector<8x1xf32>
    %190 = arith.mulf %182, %189 : vector<8x1xf32>
    %cst_82 = arith.constant 1.000000e-15 : f32
    %191 = vector.broadcast %cst_82 : f32 to vector<8x1xf32>
    %192 = arith.maximumf %190, %191 : vector<8x1xf32>
    %cst_83 = arith.constant dense<0.000000e+00> : vector<8x32xf32>
    %193 = tpu.matmul %179, %183, %cst_83 {dimension_numbers = #tpu.dot_dimension_numbers<[1], [0], [0], [1], [0, 0, 1, 1], [], []>} : vector<8x32xf32>, vector<32x32xf32>, vector<8x32xf32> -> vector<8x32xf32>
    %194 = arith.mulf %193, %193 : vector<8x32xf32>
    %cst_84 = arith.constant 1.000000e+00 : f32
    %195 = vector.broadcast %cst_84 : f32 to vector<32x1xf32>
    %cst_85 = arith.constant dense<0.000000e+00> : vector<8x1xf32>
    %196 = tpu.matmul %194, %195, %cst_85 {dimension_numbers = #tpu.dot_dimension_numbers<[1], [0], [0], [1], [0, 0, 1, 1], [], []>} : vector<8x32xf32>, vector<32x1xf32>, vector<8x1xf32> -> vector<8x1xf32>
    %cst_86 = arith.constant 1.000000e-30 : f32
    %197 = vector.broadcast %cst_86 : f32 to vector<8x1xf32>
    %198 = arith.maximumf %196, %197 : vector<8x1xf32>
    %199 = math.rsqrt %198 : vector<8x1xf32>
    %200 = arith.mulf %196, %199 : vector<8x1xf32>
    %cst_87 = arith.constant 1.000000e-15 : f32
    %201 = vector.broadcast %cst_87 : f32 to vector<8x1xf32>
    %202 = arith.maximumf %200, %201 : vector<8x1xf32>
    %203 = arith.mulf %202, %189 : vector<8x1xf32>
    %cst_88 = arith.constant 1.000000e+00 : f32
    %204 = vector.broadcast %cst_88 : f32 to vector<8x1xf32>
    %205 = arith.mulf %204, %192 : vector<8x1xf32>
    %cst_89 = arith.constant -0.99999988 : f32
    %cst_90 = arith.constant 0.99999988 : f32
    %206 = vector.broadcast %cst_89 : f32 to vector<8x1xf32>
    %207 = arith.maximumf %206, %205 : vector<8x1xf32>
    %208 = vector.broadcast %cst_90 : f32 to vector<8x1xf32>
    %209 = arith.minimumf %208, %207 : vector<8x1xf32>
    %210 = math.log1p %209 : vector<8x1xf32>
    %cst_91 = arith.constant 0.000000e+00 : f32
    %211 = vector.broadcast %cst_91 : f32 to vector<8x1xf32>
    %212 = arith.subf %211, %209 : vector<8x1xf32>
    %213 = math.log1p %212 : vector<8x1xf32>
    %214 = arith.subf %210, %213 : vector<8x1xf32>
    %cst_92 = arith.constant 5.000000e-01 : f32
    %215 = vector.broadcast %cst_92 : f32 to vector<8x1xf32>
    %216 = arith.mulf %215, %214 : vector<8x1xf32>
    %217 = arith.mulf %203, %216 : vector<8x1xf32>
    %218 = math.tanh %217 : vector<8x1xf32>
    %cst_93 = arith.constant 0.995999991 : f32
    %219 = vector.broadcast %cst_93 : f32 to vector<8x1xf32>
    %220 = arith.minimumf %218, %219 : vector<8x1xf32>
    %cst_94 = arith.constant 1.000000e+00 : f32
    %221 = vector.broadcast %cst_94 : f32 to vector<8x1xf32>
    %222 = arith.divf %199, %221 : vector<8x1xf32>
    %223 = arith.mulf %220, %222 : vector<8x1xf32>
    %cst_95 = arith.constant 1.000000e+00 : f32
    %224 = vector.broadcast %cst_95 : f32 to vector<8x1xf32>
    %225 = arith.divf %220, %224 : vector<8x1xf32>
    %226 = arith.mulf %225, %225 : vector<8x1xf32>
    %cst_96 = arith.constant dense<0.000000e+00> : vector<8x1xf32>
    %227 = tpu.matmul %179, %185, %cst_96 {dimension_numbers = #tpu.dot_dimension_numbers<[1], [0], [0], [1], [0, 0, 1, 1], [], []>} : vector<8x32xf32>, vector<32x1xf32>, vector<8x1xf32> -> vector<8x1xf32>
    %228 = arith.mulf %223, %227 : vector<8x1xf32>
    %cst_97 = arith.constant 2.000000e+00 : f32
    %229 = vector.broadcast %cst_97 : f32 to vector<8x1xf32>
    %230 = arith.mulf %229, %228 : vector<8x1xf32>
    %cst_98 = arith.constant 1.000000e+00 : f32
    %231 = vector.broadcast %cst_98 : f32 to vector<8x1xf32>
    %232 = arith.addf %231, %230 : vector<8x1xf32>
    %cst_99 = arith.constant 1.000000e+00 : f32
    %233 = arith.mulf %cst_99, %186 : f32
    %234 = vector.broadcast %233 : f32 to vector<8x1xf32>
    %235 = arith.mulf %234, %226 : vector<8x1xf32>
    %236 = arith.addf %232, %235 : vector<8x1xf32>
    %cst_100 = arith.constant 1.000000e-15 : f32
    %237 = vector.broadcast %cst_100 : f32 to vector<8x1xf32>
    %238 = arith.maximumf %236, %237 : vector<8x1xf32>
    %239 = tpu.reciprocal %238 {approx = true} : vector<8x1xf32> -> vector<8x1xf32>
    %cst_101 = arith.constant 1.000000e+00 : f32
    %240 = vector.broadcast %cst_101 : f32 to vector<8x1xf32>
    %241 = arith.addf %240, %230 : vector<8x1xf32>
    %242 = vector.broadcast %186 : f32 to vector<8x1xf32>
    %243 = arith.addf %241, %242 : vector<8x1xf32>
    %244 = arith.mulf %223, %239 : vector<8x1xf32>
    %245 = arith.mulf %243, %244 : vector<8x1xf32>
    %246 = vector.broadcast %245 : vector<8x1xf32> to vector<8x32xf32>
    %247 = arith.mulf %246, %193 : vector<8x32xf32>
    %cst_102 = arith.constant 1.000000e+00 : f32
    %248 = vector.broadcast %cst_102 : f32 to vector<8x1xf32>
    %249 = arith.mulf %248, %226 : vector<8x1xf32>
    %cst_103 = arith.constant 1.000000e+00 : f32
    %250 = vector.broadcast %cst_103 : f32 to vector<8x1xf32>
    %251 = arith.subf %250, %249 : vector<8x1xf32>
    %252 = arith.mulf %251, %239 : vector<8x1xf32>
    %253 = vector.broadcast %252 : vector<8x1xf32> to vector<8x32xf32>
    %254 = vector.broadcast %184 : vector<1x32xf32> to vector<8x32xf32>
    %255 = arith.mulf %253, %254 : vector<8x32xf32>
    %256 = arith.addf %247, %255 : vector<8x32xf32>
    %257 = arith.mulf %256, %256 : vector<8x32xf32>
    %cst_104 = arith.constant 1.000000e+00 : f32
    %258 = vector.broadcast %cst_104 : f32 to vector<32x1xf32>
    %cst_105 = arith.constant dense<0.000000e+00> : vector<8x1xf32>
    %259 = tpu.matmul %257, %258, %cst_105 {dimension_numbers = #tpu.dot_dimension_numbers<[1], [0], [0], [1], [0, 0, 1, 1], [], []>} : vector<8x32xf32>, vector<32x1xf32>, vector<8x1xf32> -> vector<8x1xf32>
    %cst_106 = arith.constant 1.000000e-30 : f32
    %260 = vector.broadcast %cst_106 : f32 to vector<8x1xf32>
    %261 = arith.maximumf %259, %260 : vector<8x1xf32>
    %262 = math.rsqrt %261 : vector<8x1xf32>
    %263 = arith.mulf %259, %262 : vector<8x1xf32>
    %cst_107 = arith.constant 1.000000e-15 : f32
    %264 = vector.broadcast %cst_107 : f32 to vector<8x1xf32>
    %265 = arith.maximumf %263, %264 : vector<8x1xf32>
    %cst_108 = arith.constant 0.995999991 : f32
    %266 = vector.broadcast %cst_108 : f32 to vector<8x1xf32>
    %267 = arith.minimumf %265, %266 : vector<8x1xf32>
    %cst_109 = arith.constant 1.000000e+00 : f32
    %268 = vector.broadcast %cst_109 : f32 to vector<8x1xf32>
    %269 = arith.mulf %268, %267 : vector<8x1xf32>
    %cst_110 = arith.constant -0.99999988 : f32
    %cst_111 = arith.constant 0.99999988 : f32
    %270 = vector.broadcast %cst_110 : f32 to vector<8x1xf32>
    %271 = arith.maximumf %270, %269 : vector<8x1xf32>
    %272 = vector.broadcast %cst_111 : f32 to vector<8x1xf32>
    %273 = arith.minimumf %272, %271 : vector<8x1xf32>
    %274 = math.log1p %273 : vector<8x1xf32>
    %cst_112 = arith.constant 0.000000e+00 : f32
    %275 = vector.broadcast %cst_112 : f32 to vector<8x1xf32>
    %276 = arith.subf %275, %273 : vector<8x1xf32>
    %277 = math.log1p %276 : vector<8x1xf32>
    %278 = arith.subf %274, %277 : vector<8x1xf32>
    %cst_113 = arith.constant 5.000000e-01 : f32
    %279 = vector.broadcast %cst_113 : f32 to vector<8x1xf32>
    %280 = arith.mulf %279, %278 : vector<8x1xf32>
    %cst_114 = arith.constant 1.000000e+00 : f32
    %281 = vector.broadcast %cst_114 : f32 to vector<8x1xf32>
    %282 = arith.divf %262, %281 : vector<8x1xf32>
    %283 = arith.mulf %280, %282 : vector<8x1xf32>
    %284 = vector.broadcast %283 : vector<8x1xf32> to vector<8x32xf32>
    %285 = arith.mulf %284, %256 : vector<8x32xf32>
    %286 = arith.truncf %285 : vector<8x32xf32> to vector<8x32xbf16>
    %cst_115 = arith.constant dense<0.000000e+00> : vector<8x32xf32>
    %287 = tpu.matmul %0, %286, %cst_115 {dimension_numbers = #tpu.dot_dimension_numbers<[1], [0], [0], [1], [0, 0, 1, 1], [], []>} : vector<8x8xbf16>, vector<8x32xbf16>, vector<8x32xf32> -> vector<8x32xf32>
    %288 = arith.mulf %287, %287 : vector<8x32xf32>
    %cst_116 = arith.constant 1.000000e+00 : f32
    %289 = vector.broadcast %cst_116 : f32 to vector<32x1xf32>
    %cst_117 = arith.constant dense<0.000000e+00> : vector<8x1xf32>
    %290 = tpu.matmul %288, %289, %cst_117 {dimension_numbers = #tpu.dot_dimension_numbers<[1], [0], [0], [1], [0, 0, 1, 1], [], []>} : vector<8x32xf32>, vector<32x1xf32>, vector<8x1xf32> -> vector<8x1xf32>
    %cst_118 = arith.constant 1.000000e-30 : f32
    %291 = vector.broadcast %cst_118 : f32 to vector<8x1xf32>
    %292 = arith.maximumf %290, %291 : vector<8x1xf32>
    %293 = math.rsqrt %292 : vector<8x1xf32>
    %294 = arith.mulf %290, %293 : vector<8x1xf32>
    %cst_119 = arith.constant 1.000000e-15 : f32
    %295 = vector.broadcast %cst_119 : f32 to vector<8x1xf32>
    %296 = arith.maximumf %294, %295 : vector<8x1xf32>
    %cst_120 = arith.constant 1.000000e+00 : f32
    %297 = vector.broadcast %cst_120 : f32 to vector<8x1xf32>
    %298 = arith.mulf %297, %296 : vector<8x1xf32>
    %cst_121 = arith.constant 3.10630298 : f32
    %299 = vector.broadcast %cst_121 : f32 to vector<8x1xf32>
    %300 = arith.cmpf ogt, %298, %299 : vector<8x1xf32>
    %cst_122 = arith.constant 3.10630298 : f32
    %301 = vector.broadcast %cst_122 : f32 to vector<8x1xf32>
    %302 = arith.mulf %301, %293 : vector<8x1xf32>
    %cst_123 = arith.constant 1.000000e+00 : f32
    %303 = vector.broadcast %cst_123 : f32 to vector<8x1xf32>
    %304 = arith.select %300, %302, %303 : vector<8x1xi1>, vector<8x1xf32>
    %305 = vector.broadcast %304 : vector<8x1xf32> to vector<8x32xf32>
    %306 = arith.mulf %305, %287 : vector<8x32xf32>
    %cst_124 = arith.constant 0.000000e+00 : f32
    %307 = vector.broadcast %cst_124 : f32 to vector<8x32xf32>
    %308 = arith.maximumf %306, %307 : vector<8x32xf32>
    %309 = arith.mulf %308, %308 : vector<8x32xf32>
    %cst_125 = arith.constant 1.000000e+00 : f32
    %310 = vector.broadcast %cst_125 : f32 to vector<32x1xf32>
    %cst_126 = arith.constant dense<0.000000e+00> : vector<8x1xf32>
    %311 = tpu.matmul %309, %310, %cst_126 {dimension_numbers = #tpu.dot_dimension_numbers<[1], [0], [0], [1], [0, 0, 1, 1], [], []>} : vector<8x32xf32>, vector<32x1xf32>, vector<8x1xf32> -> vector<8x1xf32>
    %cst_127 = arith.constant 1.000000e-30 : f32
    %312 = vector.broadcast %cst_127 : f32 to vector<8x1xf32>
    %313 = arith.maximumf %311, %312 : vector<8x1xf32>
    %314 = math.rsqrt %313 : vector<8x1xf32>
    %315 = arith.mulf %311, %314 : vector<8x1xf32>
    %cst_128 = arith.constant 1.000000e-15 : f32
    %316 = vector.broadcast %cst_128 : f32 to vector<8x1xf32>
    %317 = arith.maximumf %315, %316 : vector<8x1xf32>
    %cst_129 = arith.constant 1.000000e+00 : f32
    %318 = vector.broadcast %cst_129 : f32 to vector<8x1xf32>
    %319 = arith.mulf %318, %317 : vector<8x1xf32>
    %cst_130 = arith.constant 3.10630298 : f32
    %320 = vector.broadcast %cst_130 : f32 to vector<8x1xf32>
    %321 = arith.cmpf ogt, %319, %320 : vector<8x1xf32>
    %cst_131 = arith.constant 3.10630298 : f32
    %322 = vector.broadcast %cst_131 : f32 to vector<8x1xf32>
    %323 = arith.mulf %322, %314 : vector<8x1xf32>
    %cst_132 = arith.constant 1.000000e+00 : f32
    %324 = vector.broadcast %cst_132 : f32 to vector<8x1xf32>
    %325 = arith.select %321, %323, %324 : vector<8x1xi1>, vector<8x1xf32>
    %326 = vector.broadcast %325 : vector<8x1xf32> to vector<8x32xf32>
    %327 = arith.mulf %326, %308 : vector<8x32xf32>
    %cst_133 = arith.constant 1.000000e+00 : f32
    %328 = vector.broadcast %cst_133 : f32 to vector<8x1xf32>
    %329 = arith.mulf %328, %317 : vector<8x1xf32>
    %330 = math.tanh %329 : vector<8x1xf32>
    %cst_134 = arith.constant 0.995999991 : f32
    %331 = vector.broadcast %cst_134 : f32 to vector<8x1xf32>
    %332 = arith.minimumf %330, %331 : vector<8x1xf32>
    %cst_135 = arith.constant 1.000000e+00 : f32
    %333 = vector.broadcast %cst_135 : f32 to vector<8x1xf32>
    %334 = arith.divf %314, %333 : vector<8x1xf32>
    %335 = arith.mulf %332, %334 : vector<8x1xf32>
    %336 = vector.broadcast %335 : vector<8x1xf32> to vector<8x32xf32>
    %337 = arith.mulf %336, %308 : vector<8x32xf32>
    %cst_136 = arith.constant 1.000000e+00 : f32
    %338 = vector.broadcast %cst_136 : f32 to vector<8x1xf32>
    %339 = arith.divf %332, %338 : vector<8x1xf32>
    %340 = arith.mulf %339, %339 : vector<8x1xf32>
    %c0_137 = arith.constant 0 : index
    %c0_138 = arith.constant 0 : index
    %341 = vector.load %arg10[%c0_137, %c0_138] : memref<32x32xf32, #tpu.memory_space<vmem>>, vector<32x32xf32>
    %c0_139 = arith.constant 0 : index
    %c0_140 = arith.constant 0 : index
    %342 = vector.load %arg11[%c0_139, %c0_140] : memref<1x32xf32, #tpu.memory_space<vmem>>, vector<1x32xf32>
    %c0_141 = arith.constant 0 : index
    %c0_142 = arith.constant 0 : index
    %343 = vector.load %arg12[%c0_141, %c0_142] : memref<32x1xf32, #tpu.memory_space<vmem>>, vector<32x1xf32>
    %c2 = arith.constant 2 : index
    %344 = memref.load %arg0[%c2] : memref<3xf32, #tpu.memory_space<smem>>
    %cst_143 = arith.constant 1.000000e-30 : f32
    %345 = vector.broadcast %cst_143 : f32 to vector<8x1xf32>
    %346 = arith.maximumf %340, %345 : vector<8x1xf32>
    %347 = math.rsqrt %346 : vector<8x1xf32>
    %348 = arith.mulf %340, %347 : vector<8x1xf32>
    %cst_144 = arith.constant 1.000000e-15 : f32
    %349 = vector.broadcast %cst_144 : f32 to vector<8x1xf32>
    %350 = arith.maximumf %348, %349 : vector<8x1xf32>
    %cst_145 = arith.constant dense<0.000000e+00> : vector<8x32xf32>
    %351 = tpu.matmul %337, %341, %cst_145 {dimension_numbers = #tpu.dot_dimension_numbers<[1], [0], [0], [1], [0, 0, 1, 1], [], []>} : vector<8x32xf32>, vector<32x32xf32>, vector<8x32xf32> -> vector<8x32xf32>
    %352 = arith.mulf %351, %351 : vector<8x32xf32>
    %cst_146 = arith.constant 1.000000e+00 : f32
    %353 = vector.broadcast %cst_146 : f32 to vector<32x1xf32>
    %cst_147 = arith.constant dense<0.000000e+00> : vector<8x1xf32>
    %354 = tpu.matmul %352, %353, %cst_147 {dimension_numbers = #tpu.dot_dimension_numbers<[1], [0], [0], [1], [0, 0, 1, 1], [], []>} : vector<8x32xf32>, vector<32x1xf32>, vector<8x1xf32> -> vector<8x1xf32>
    %cst_148 = arith.constant 1.000000e-30 : f32
    %355 = vector.broadcast %cst_148 : f32 to vector<8x1xf32>
    %356 = arith.maximumf %354, %355 : vector<8x1xf32>
    %357 = math.rsqrt %356 : vector<8x1xf32>
    %358 = arith.mulf %354, %357 : vector<8x1xf32>
    %cst_149 = arith.constant 1.000000e-15 : f32
    %359 = vector.broadcast %cst_149 : f32 to vector<8x1xf32>
    %360 = arith.maximumf %358, %359 : vector<8x1xf32>
    %361 = arith.mulf %360, %347 : vector<8x1xf32>
    %cst_150 = arith.constant 1.000000e+00 : f32
    %362 = vector.broadcast %cst_150 : f32 to vector<8x1xf32>
    %363 = arith.mulf %362, %350 : vector<8x1xf32>
    %cst_151 = arith.constant -0.99999988 : f32
    %cst_152 = arith.constant 0.99999988 : f32
    %364 = vector.broadcast %cst_151 : f32 to vector<8x1xf32>
    %365 = arith.maximumf %364, %363 : vector<8x1xf32>
    %366 = vector.broadcast %cst_152 : f32 to vector<8x1xf32>
    %367 = arith.minimumf %366, %365 : vector<8x1xf32>
    %368 = math.log1p %367 : vector<8x1xf32>
    %cst_153 = arith.constant 0.000000e+00 : f32
    %369 = vector.broadcast %cst_153 : f32 to vector<8x1xf32>
    %370 = arith.subf %369, %367 : vector<8x1xf32>
    %371 = math.log1p %370 : vector<8x1xf32>
    %372 = arith.subf %368, %371 : vector<8x1xf32>
    %cst_154 = arith.constant 5.000000e-01 : f32
    %373 = vector.broadcast %cst_154 : f32 to vector<8x1xf32>
    %374 = arith.mulf %373, %372 : vector<8x1xf32>
    %375 = arith.mulf %361, %374 : vector<8x1xf32>
    %376 = math.tanh %375 : vector<8x1xf32>
    %cst_155 = arith.constant 0.995999991 : f32
    %377 = vector.broadcast %cst_155 : f32 to vector<8x1xf32>
    %378 = arith.minimumf %376, %377 : vector<8x1xf32>
    %cst_156 = arith.constant 1.000000e+00 : f32
    %379 = vector.broadcast %cst_156 : f32 to vector<8x1xf32>
    %380 = arith.divf %357, %379 : vector<8x1xf32>
    %381 = arith.mulf %378, %380 : vector<8x1xf32>
    %cst_157 = arith.constant 1.000000e+00 : f32
    %382 = vector.broadcast %cst_157 : f32 to vector<8x1xf32>
    %383 = arith.divf %378, %382 : vector<8x1xf32>
    %384 = arith.mulf %383, %383 : vector<8x1xf32>
    %cst_158 = arith.constant dense<0.000000e+00> : vector<8x1xf32>
    %385 = tpu.matmul %337, %343, %cst_158 {dimension_numbers = #tpu.dot_dimension_numbers<[1], [0], [0], [1], [0, 0, 1, 1], [], []>} : vector<8x32xf32>, vector<32x1xf32>, vector<8x1xf32> -> vector<8x1xf32>
    %386 = arith.mulf %381, %385 : vector<8x1xf32>
    %cst_159 = arith.constant 2.000000e+00 : f32
    %387 = vector.broadcast %cst_159 : f32 to vector<8x1xf32>
    %388 = arith.mulf %387, %386 : vector<8x1xf32>
    %cst_160 = arith.constant 1.000000e+00 : f32
    %389 = vector.broadcast %cst_160 : f32 to vector<8x1xf32>
    %390 = arith.addf %389, %388 : vector<8x1xf32>
    %cst_161 = arith.constant 1.000000e+00 : f32
    %391 = arith.mulf %cst_161, %344 : f32
    %392 = vector.broadcast %391 : f32 to vector<8x1xf32>
    %393 = arith.mulf %392, %384 : vector<8x1xf32>
    %394 = arith.addf %390, %393 : vector<8x1xf32>
    %cst_162 = arith.constant 1.000000e-15 : f32
    %395 = vector.broadcast %cst_162 : f32 to vector<8x1xf32>
    %396 = arith.maximumf %394, %395 : vector<8x1xf32>
    %397 = tpu.reciprocal %396 {approx = true} : vector<8x1xf32> -> vector<8x1xf32>
    %cst_163 = arith.constant 1.000000e+00 : f32
    %398 = vector.broadcast %cst_163 : f32 to vector<8x1xf32>
    %399 = arith.addf %398, %388 : vector<8x1xf32>
    %400 = vector.broadcast %344 : f32 to vector<8x1xf32>
    %401 = arith.addf %399, %400 : vector<8x1xf32>
    %402 = arith.mulf %381, %397 : vector<8x1xf32>
    %403 = arith.mulf %401, %402 : vector<8x1xf32>
    %404 = vector.broadcast %403 : vector<8x1xf32> to vector<8x32xf32>
    %405 = arith.mulf %404, %351 : vector<8x32xf32>
    %cst_164 = arith.constant 1.000000e+00 : f32
    %406 = vector.broadcast %cst_164 : f32 to vector<8x1xf32>
    %407 = arith.mulf %406, %384 : vector<8x1xf32>
    %cst_165 = arith.constant 1.000000e+00 : f32
    %408 = vector.broadcast %cst_165 : f32 to vector<8x1xf32>
    %409 = arith.subf %408, %407 : vector<8x1xf32>
    %410 = arith.mulf %409, %397 : vector<8x1xf32>
    %411 = vector.broadcast %410 : vector<8x1xf32> to vector<8x32xf32>
    %412 = vector.broadcast %342 : vector<1x32xf32> to vector<8x32xf32>
    %413 = arith.mulf %411, %412 : vector<8x32xf32>
    %414 = arith.addf %405, %413 : vector<8x32xf32>
    %415 = arith.mulf %414, %414 : vector<8x32xf32>
    %cst_166 = arith.constant 1.000000e+00 : f32
    %416 = vector.broadcast %cst_166 : f32 to vector<32x1xf32>
    %cst_167 = arith.constant dense<0.000000e+00> : vector<8x1xf32>
    %417 = tpu.matmul %415, %416, %cst_167 {dimension_numbers = #tpu.dot_dimension_numbers<[1], [0], [0], [1], [0, 0, 1, 1], [], []>} : vector<8x32xf32>, vector<32x1xf32>, vector<8x1xf32> -> vector<8x1xf32>
    %cst_168 = arith.constant 1.000000e-30 : f32
    %418 = vector.broadcast %cst_168 : f32 to vector<8x1xf32>
    %419 = arith.maximumf %417, %418 : vector<8x1xf32>
    %420 = math.rsqrt %419 : vector<8x1xf32>
    %421 = arith.mulf %417, %420 : vector<8x1xf32>
    %cst_169 = arith.constant 1.000000e-15 : f32
    %422 = vector.broadcast %cst_169 : f32 to vector<8x1xf32>
    %423 = arith.maximumf %421, %422 : vector<8x1xf32>
    %cst_170 = arith.constant 0.995999991 : f32
    %424 = vector.broadcast %cst_170 : f32 to vector<8x1xf32>
    %425 = arith.minimumf %423, %424 : vector<8x1xf32>
    %cst_171 = arith.constant 1.000000e+00 : f32
    %426 = vector.broadcast %cst_171 : f32 to vector<8x1xf32>
    %427 = arith.mulf %426, %425 : vector<8x1xf32>
    %cst_172 = arith.constant -0.99999988 : f32
    %cst_173 = arith.constant 0.99999988 : f32
    %428 = vector.broadcast %cst_172 : f32 to vector<8x1xf32>
    %429 = arith.maximumf %428, %427 : vector<8x1xf32>
    %430 = vector.broadcast %cst_173 : f32 to vector<8x1xf32>
    %431 = arith.minimumf %430, %429 : vector<8x1xf32>
    %432 = math.log1p %431 : vector<8x1xf32>
    %cst_174 = arith.constant 0.000000e+00 : f32
    %433 = vector.broadcast %cst_174 : f32 to vector<8x1xf32>
    %434 = arith.subf %433, %431 : vector<8x1xf32>
    %435 = math.log1p %434 : vector<8x1xf32>
    %436 = arith.subf %432, %435 : vector<8x1xf32>
    %cst_175 = arith.constant 5.000000e-01 : f32
    %437 = vector.broadcast %cst_175 : f32 to vector<8x1xf32>
    %438 = arith.mulf %437, %436 : vector<8x1xf32>
    %cst_176 = arith.constant 1.000000e+00 : f32
    %439 = vector.broadcast %cst_176 : f32 to vector<8x1xf32>
    %440 = arith.divf %420, %439 : vector<8x1xf32>
    %441 = arith.mulf %438, %440 : vector<8x1xf32>
    %442 = vector.broadcast %441 : vector<8x1xf32> to vector<8x32xf32>
    %443 = arith.mulf %442, %414 : vector<8x32xf32>
    %444 = arith.truncf %443 : vector<8x32xf32> to vector<8x32xbf16>
    %cst_177 = arith.constant dense<0.000000e+00> : vector<8x32xf32>
    %445 = tpu.matmul %0, %444, %cst_177 {dimension_numbers = #tpu.dot_dimension_numbers<[1], [0], [0], [1], [0, 0, 1, 1], [], []>} : vector<8x8xbf16>, vector<8x32xbf16>, vector<8x32xf32> -> vector<8x32xf32>
    %446 = arith.mulf %445, %445 : vector<8x32xf32>
    %cst_178 = arith.constant 1.000000e+00 : f32
    %447 = vector.broadcast %cst_178 : f32 to vector<32x1xf32>
    %cst_179 = arith.constant dense<0.000000e+00> : vector<8x1xf32>
    %448 = tpu.matmul %446, %447, %cst_179 {dimension_numbers = #tpu.dot_dimension_numbers<[1], [0], [0], [1], [0, 0, 1, 1], [], []>} : vector<8x32xf32>, vector<32x1xf32>, vector<8x1xf32> -> vector<8x1xf32>
    %cst_180 = arith.constant 1.000000e-30 : f32
    %449 = vector.broadcast %cst_180 : f32 to vector<8x1xf32>
    %450 = arith.maximumf %448, %449 : vector<8x1xf32>
    %451 = math.rsqrt %450 : vector<8x1xf32>
    %452 = arith.mulf %448, %451 : vector<8x1xf32>
    %cst_181 = arith.constant 1.000000e-15 : f32
    %453 = vector.broadcast %cst_181 : f32 to vector<8x1xf32>
    %454 = arith.maximumf %452, %453 : vector<8x1xf32>
    %cst_182 = arith.constant 1.000000e+00 : f32
    %455 = vector.broadcast %cst_182 : f32 to vector<8x1xf32>
    %456 = arith.mulf %455, %454 : vector<8x1xf32>
    %cst_183 = arith.constant 3.10630298 : f32
    %457 = vector.broadcast %cst_183 : f32 to vector<8x1xf32>
    %458 = arith.cmpf ogt, %456, %457 : vector<8x1xf32>
    %cst_184 = arith.constant 3.10630298 : f32
    %459 = vector.broadcast %cst_184 : f32 to vector<8x1xf32>
    %460 = arith.mulf %459, %451 : vector<8x1xf32>
    %cst_185 = arith.constant 1.000000e+00 : f32
    %461 = vector.broadcast %cst_185 : f32 to vector<8x1xf32>
    %462 = arith.select %458, %460, %461 : vector<8x1xi1>, vector<8x1xf32>
    %463 = vector.broadcast %462 : vector<8x1xf32> to vector<8x32xf32>
    %464 = arith.mulf %463, %445 : vector<8x32xf32>
    %cst_186 = arith.constant 0.000000e+00 : f32
    %465 = vector.broadcast %cst_186 : f32 to vector<8x32xf32>
    %466 = arith.maximumf %464, %465 : vector<8x32xf32>
    %467 = arith.mulf %466, %466 : vector<8x32xf32>
    %cst_187 = arith.constant 1.000000e+00 : f32
    %468 = vector.broadcast %cst_187 : f32 to vector<32x1xf32>
    %cst_188 = arith.constant dense<0.000000e+00> : vector<8x1xf32>
    %469 = tpu.matmul %467, %468, %cst_188 {dimension_numbers = #tpu.dot_dimension_numbers<[1], [0], [0], [1], [0, 0, 1, 1], [], []>} : vector<8x32xf32>, vector<32x1xf32>, vector<8x1xf32> -> vector<8x1xf32>
    %cst_189 = arith.constant 1.000000e-30 : f32
    %470 = vector.broadcast %cst_189 : f32 to vector<8x1xf32>
    %471 = arith.maximumf %469, %470 : vector<8x1xf32>
    %472 = math.rsqrt %471 : vector<8x1xf32>
    %473 = arith.mulf %469, %472 : vector<8x1xf32>
    %cst_190 = arith.constant 1.000000e-15 : f32
    %474 = vector.broadcast %cst_190 : f32 to vector<8x1xf32>
    %475 = arith.maximumf %473, %474 : vector<8x1xf32>
    %cst_191 = arith.constant 1.000000e+00 : f32
    %476 = vector.broadcast %cst_191 : f32 to vector<8x1xf32>
    %477 = arith.mulf %476, %475 : vector<8x1xf32>
    %cst_192 = arith.constant 3.10630298 : f32
    %478 = vector.broadcast %cst_192 : f32 to vector<8x1xf32>
    %479 = arith.cmpf ogt, %477, %478 : vector<8x1xf32>
    %cst_193 = arith.constant 3.10630298 : f32
    %480 = vector.broadcast %cst_193 : f32 to vector<8x1xf32>
    %481 = arith.mulf %480, %472 : vector<8x1xf32>
    %cst_194 = arith.constant 1.000000e+00 : f32
    %482 = vector.broadcast %cst_194 : f32 to vector<8x1xf32>
    %483 = arith.select %479, %481, %482 : vector<8x1xi1>, vector<8x1xf32>
    %484 = vector.broadcast %483 : vector<8x1xf32> to vector<8x32xf32>
    %485 = arith.mulf %484, %466 : vector<8x32xf32>
    %486 = arith.truncf %169 : vector<8x32xf32> to vector<8x32xbf16>
    %cst_195 = arith.constant dense<0.000000e+00> : vector<2x32xf32>
    %487 = tpu.matmul %1, %486, %cst_195 {dimension_numbers = #tpu.dot_dimension_numbers<[1], [0], [0], [1], [0, 0, 1, 1], [], []>} : vector<2x8xbf16>, vector<8x32xbf16>, vector<2x32xf32> -> vector<2x32xf32>
    %488 = arith.truncf %327 : vector<8x32xf32> to vector<8x32xbf16>
    %cst_196 = arith.constant dense<0.000000e+00> : vector<2x32xf32>
    %489 = tpu.matmul %1, %488, %cst_196 {dimension_numbers = #tpu.dot_dimension_numbers<[1], [0], [0], [1], [0, 0, 1, 1], [], []>} : vector<2x8xbf16>, vector<8x32xbf16>, vector<2x32xf32> -> vector<2x32xf32>
    %490 = arith.truncf %485 : vector<8x32xf32> to vector<8x32xbf16>
    %cst_197 = arith.constant dense<0.000000e+00> : vector<2x32xf32>
    %491 = tpu.matmul %1, %490, %cst_197 {dimension_numbers = #tpu.dot_dimension_numbers<[1], [0], [0], [1], [0, 0, 1, 1], [], []>} : vector<2x8xbf16>, vector<8x32xbf16>, vector<2x32xf32> -> vector<2x32xf32>
    %cst_198 = arith.constant 0.000000e+00 : f32
    %492 = vector.broadcast %cst_198 : f32 to vector<2x32xf32>
    %493 = arith.maximumf %487, %492 : vector<2x32xf32>
    %cst_199 = arith.constant 0.000000e+00 : f32
    %494 = vector.broadcast %cst_199 : f32 to vector<2x32xf32>
    %495 = arith.maximumf %489, %494 : vector<2x32xf32>
    %496 = arith.addf %493, %495 : vector<2x32xf32>
    %cst_200 = arith.constant 0.000000e+00 : f32
    %497 = vector.broadcast %cst_200 : f32 to vector<2x32xf32>
    %498 = arith.maximumf %491, %497 : vector<2x32xf32>
    %499 = arith.addf %496, %498 : vector<2x32xf32>
    %c0_201 = arith.constant 0 : index
    %c0_202 = arith.constant 0 : index
    %500 = vector.load %arg13[%c0_201, %c0_202] : memref<32x4xf32, #tpu.memory_space<vmem>>, vector<32x4xf32>
    %cst_203 = arith.constant dense<0.000000e+00> : vector<2x4xf32>
    %501 = tpu.matmul %499, %500, %cst_203 {dimension_numbers = #tpu.dot_dimension_numbers<[1], [0], [0], [1], [0, 0, 1, 1], [], []>} : vector<2x32xf32>, vector<32x4xf32>, vector<2x4xf32> -> vector<2x4xf32>
    %c0_204 = arith.constant 0 : index
    %c0_205 = arith.constant 0 : index
    %502 = vector.load %arg14[%c0_204, %c0_205] : memref<1x4xf32, #tpu.memory_space<vmem>>, vector<1x4xf32>
    %503 = vector.broadcast %502 : vector<1x4xf32> to vector<2x4xf32>
    %504 = arith.addf %501, %503 : vector<2x4xf32>
    %cst_206 = arith.constant dense<0xFF800000> : vector<2xf32>
    %505 = vector.multi_reduction <maximumf>, %504, %cst_206 [1] : vector<2x4xf32> to vector<2xf32>
    %506 = vector.shape_cast %505 : vector<2xf32> to vector<2x1xf32>
    %507 = vector.broadcast %506 : vector<2x1xf32> to vector<2x4xf32>
    %508 = arith.subf %504, %507 : vector<2x4xf32>
    %509 = math.exp %508 : vector<2x4xf32>
    %cst_207 = arith.constant dense<0.000000e+00> : vector<2xf32>
    %510 = vector.multi_reduction <add>, %509, %cst_207 [1] : vector<2x4xf32> to vector<2xf32>
    %511 = vector.shape_cast %510 : vector<2xf32> to vector<2x1xf32>
    %512 = math.log %511 : vector<2x1xf32>
    %513 = vector.broadcast %512 : vector<2x1xf32> to vector<2x4xf32>
    %514 = arith.subf %508, %513 : vector<2x4xf32>
    %c0_208 = arith.constant 0 : index
    %c0_209 = arith.constant 0 : index
    %515 = vector.load %arg15[%c0_208, %c0_209] : memref<2x4xf32, #tpu.memory_space<vmem>>, vector<2x4xf32>
    tpu.vector_store %arg15[%c0_208, %c0_209], %514 {strides = array<i32>} : memref<2x4xf32, #tpu.memory_space<vmem>>, vector<2x4xf32>,
    return
  }
}

</mosaic_0001>

<llo_original>
// kernel: tpu_custom_call.1
$region0: #{tpu_custom_call.1}
  #allocation0 [shape = 'u32[]', space=smem, size = 0x4, offset = 0x4, fixed_abs, tag = 'smem constant byte address 0x4 - core index']
  #allocation1 [shape = 'u32[144,128]{1,0:T(1,128)}', space=vmem, size = 0x12000, scoped, tag = 'internal scratch']
  %s0 = inlined_call_operand.vmem [shape: f32[3], index: 0, kind: input, shape index: {}]
  %s1 = inlined_call_operand.vmem [shape: f32[8,16], index: 1, kind: input, shape index: {}]
  %s2 = inlined_call_operand.vmem [shape: bf16[8,8], index: 2, kind: input, shape index: {}]
  %s3 = inlined_call_operand.vmem [shape: bf16[2,8], index: 3, kind: input, shape index: {}]
  %s4 = inlined_call_operand.vmem [shape: f32[16,32], index: 4, kind: input, shape index: {}]
  %s5 = inlined_call_operand.vmem [shape: f32[1,32], index: 5, kind: input, shape index: {}]
  %s6 = inlined_call_operand.vmem [shape: f32[16,1], index: 6, kind: input, shape index: {}]
  %s7 = inlined_call_operand.vmem [shape: f32[32,32], index: 7, kind: input, shape index: {}]
  %s8 = inlined_call_operand.vmem [shape: f32[1,32], index: 8, kind: input, shape index: {}]
  %s9 = inlined_call_operand.vmem [shape: f32[32,1], index: 9, kind: input, shape index: {}]
  %s10 = inlined_call_operand.vmem [shape: f32[32,32], index: 10, kind: input, shape index: {}]
  %s11 = inlined_call_operand.vmem [shape: f32[1,32], index: 11, kind: input, shape index: {}]
  %s12 = inlined_call_operand.vmem [shape: f32[32,1], index: 12, kind: input, shape index: {}]
  %s13 = inlined_call_operand.vmem [shape: f32[32,4], index: 13, kind: input, shape index: {}]
  %s14 = inlined_call_operand.vmem [shape: f32[1,4], index: 14, kind: input, shape index: {}]
  %s15 = inlined_call_operand.hbm [shape: f32[2,4], index: 15, kind: output, shape index: {}]
  %s16 = sld [smem:[#allocation0]]
  $region74: #{tpu_custom_call.1} parent=0
    _
  %s18 = ssub.s32 1, %s16
  %s19 = scalar_select 0, %s18, %s16
  $region1: #{tpu_custom_call.1} parent=0
    #allocation2 [shape = 'u8[512]{0}', space=smem, size = 0x200, scoped, tag = 'input window, operand 0, single buffered']
    #allocation3 [shape = 's32[1]{0}', space=sflag, size = 0x4, scoped, tag = 'scoped memory for tpu_custom_call.1']
    #allocation4 [shape = 's32[1]{0}', space=sflag, size = 0x4, scoped, tag = 'scoped memory for tpu_custom_call.1']
    #allocation5 [shape = 'u8[1024]{0}', space=vmem, size = 0x400, scoped, tag = 'output window, operand 0, single buffered']
    %20 = vsyncpa [#allocation4], 0
    %21 = vsyncpa [#allocation3], 0
    // Predicated region
    $region2: #{tpu_custom_call.1} parent=1 // pred_check
      _
    $region3: #{tpu_custom_call.1} parent=1 // pred_check_branch
      %23 = sbr.rel (0) target = $region5
    $region4: #{tpu_custom_call.1} parent=1 // pred_region
      %s25 = ssub.s32 16, 16
      %26 = vsyncadd [#allocation4], %s25
      %s28 = sshll.u32 %s0, 4
      %s29 = int_to_ptr.vmem [resolvable:$true] %s28
      %31 = dma.vmem_to_smem %s29, 16, [#allocation2], [#allocation4]
    $region5: #{tpu_custom_call.1} parent=1 // pred_fallthru
      _
    // Predicated region
    $region6: #{tpu_custom_call.1} parent=1 // pred_check
      _
    $region7: #{tpu_custom_call.1} parent=1 // pred_check_branch
      %33 = sbr.rel (0) target = $region9
    $region8: #{tpu_custom_call.1} parent=1 // pred_region
      _
    $region9: #{tpu_custom_call.1} parent=1 // pred_fallthru
      _
    // Predicated region
    $region10: #{tpu_custom_call.1} parent=1 // pred_check
      _
    $region11: #{tpu_custom_call.1} parent=1 // pred_check_branch
      %35 = sbr.rel (0) target = $region13
    $region12: #{tpu_custom_call.1} parent=1 // pred_region
      _
    $region13: #{tpu_custom_call.1} parent=1 // pred_fallthru
      _
    // Predicated region
    $region14: #{tpu_custom_call.1} parent=1 // pred_check
      _
    $region15: #{tpu_custom_call.1} parent=1 // pred_check_branch
      %37 = sbr.rel (0) target = $region17
    $region16: #{tpu_custom_call.1} parent=1 // pred_region
      _
    $region17: #{tpu_custom_call.1} parent=1 // pred_fallthru
      _
    // Predicated region
    $region18: #{tpu_custom_call.1} parent=1 // pred_check
      _
    $region19: #{tpu_custom_call.1} parent=1 // pred_check_branch
      %39 = sbr.rel (0) target = $region21
    $region20: #{tpu_custom_call.1} parent=1 // pred_region
      _
    $region21: #{tpu_custom_call.1} parent=1 // pred_fallthru
      _
    // Predicated region
    $region22: #{tpu_custom_call.1} parent=1 // pred_check
      _
    $region23: #{tpu_custom_call.1} parent=1 // pred_check_branch
      %41 = sbr.rel (0) target = $region25
    $region24: #{tpu_custom_call.1} parent=1 // pred_region
      _
    $region25: #{tpu_custom_call.1} parent=1 // pred_fallthru
      _
    // Predicated region
    $region26: #{tpu_custom_call.1} parent=1 // pred_check
      _
    $region27: #{tpu_custom_call.1} parent=1 // pred_check_branch
      %43 = sbr.rel (0) target = $region29
    $region28: #{tpu_custom_call.1} parent=1 // pred_region
      _
    $region29: #{tpu_custom_call.1} parent=1 // pred_fallthru
      _
    // Predicated region
    $region30: #{tpu_custom_call.1} parent=1 // pred_check
      _
    $region31: #{tpu_custom_call.1} parent=1 // pred_check_branch
      %45 = sbr.rel (0) target = $region33
    $region32: #{tpu_custom_call.1} parent=1 // pred_region
      _
    $region33: #{tpu_custom_call.1} parent=1 // pred_fallthru
      _
    // Predicated region
    $region34: #{tpu_custom_call.1} parent=1 // pred_check
      _
    $region35: #{tpu_custom_call.1} parent=1 // pred_check_branch
      %47 = sbr.rel (0) target = $region37
    $region36: #{tpu_custom_call.1} parent=1 // pred_region
      _
    $region37: #{tpu_custom_call.1} parent=1 // pred_fallthru
      _
    // Predicated region
    $region38: #{tpu_custom_call.1} parent=1 // pred_check
      _
    $region39: #{tpu_custom_call.1} parent=1 // pred_check_branch
      %49 = sbr.rel (0) target = $region41
    $region40: #{tpu_custom_call.1} parent=1 // pred_region
      _
    $region41: #{tpu_custom_call.1} parent=1 // pred_fallthru
      _
    // Predicated region
    $region42: #{tpu_custom_call.1} parent=1 // pred_check
      _
    $region43: #{tpu_custom_call.1} parent=1 // pred_check_branch
      %51 = sbr.rel (0) target = $region45
    $region44: #{tpu_custom_call.1} parent=1 // pred_region
      _
    $region45: #{tpu_custom_call.1} parent=1 // pred_fallthru
      _
    // Predicated region
    $region46: #{tpu_custom_call.1} parent=1 // pred_check
      _
    $region47: #{tpu_custom_call.1} parent=1 // pred_check_branch
      %53 = sbr.rel (0) target = $region49
    $region48: #{tpu_custom_call.1} parent=1 // pred_region
      _
    $region49: #{tpu_custom_call.1} parent=1 // pred_fallthru
      _
    // Predicated region
    $region50: #{tpu_custom_call.1} parent=1 // pred_check
      _
    $region51: #{tpu_custom_call.1} parent=1 // pred_check_branch
      %55 = sbr.rel (0) target = $region53
    $region52: #{tpu_custom_call.1} parent=1 // pred_region
      _
    $region53: #{tpu_custom_call.1} parent=1 // pred_fallthru
      _
    // Predicated region
    $region54: #{tpu_custom_call.1} parent=1 // pred_check
      _
    $region55: #{tpu_custom_call.1} parent=1 // pred_check_branch
      %57 = sbr.rel (0) target = $region57
    $region56: #{tpu_custom_call.1} parent=1 // pred_region
      _
    $region57: #{tpu_custom_call.1} parent=1 // pred_fallthru
      _
    // Predicated region
    $region58: #{tpu_custom_call.1} parent=1 // pred_check
      _
    $region59: #{tpu_custom_call.1} parent=1 // pred_check_branch
      %59 = sbr.rel (0) target = $region61
    $region60: #{tpu_custom_call.1} parent=1 // pred_region
      _
    $region61: #{tpu_custom_call.1} parent=1 // pred_fallthru
      _
    // Predicated region
    $region62: #{tpu_custom_call.1} parent=1 // pred_check
      _
    $region63: #{tpu_custom_call.1} parent=1 // pred_check_branch
      %61 = sbr.rel (0) target = $region65
    $region64: #{tpu_custom_call.1} parent=1 // pred_region
      %62 = dma.done [#allocation4], 16
    $region65: #{tpu_custom_call.1} parent=1 // pred_fallthru
      _
    %63 = sfence
    %v65 = vld [vmem:[%s2] sm:$0xf]
    %v66 = vld [vmem:[%s3] sm:$0x1]
    %v67 = vld [vmem:[%s1] sm:$0xff]
    %v68 = vmul.f32 %v67, %v67
    %vm69 = vcmask 130048
    %v71 = vsel %vm69, %v68, 0
    %73 = vmatprep.subr.mxu0 0.0
    %74 = vmatpush1.msra.mxu0 1.0
    %75 = vmatprep.subr.mxu0 0.0
    %76 = vmatpush1.msra.mxu0 1.0
    %77 = vmatprep.subr.mxu0 0.0
    %78 = vmatpush1.msra.mxu0 0.0
    %79 = vmatprep.subr.mxu0 0.0
    %80 = vmatpush1.msra.mxu0 0.0
    %81 = vmatprep.subr.mxu0 0.0
    %82 = vmatpush1.msra.mxu0 0.0
    %83 = vmatprep.subr.mxu0 0.0
    %84 = vmatpush1.msra.mxu0 0.0
    %85 = vmatprep.subr.mxu0 0.0
    %86 = vmatpush1.msra.mxu0 0.0
    %87 = vmatprep.subr.mxu0 0.0
    %88 = vmatpush1.msra.mxu0 0.0
    %89 = vmatprep.subr.mxu0 0.0
    %90 = vmatpush1.msra.mxu0 0.0
    %91 = vmatprep.subr.mxu0 0.0
    %92 = vmatpush1.msra.mxu0 0.0
    %93 = vmatprep.subr.mxu0 0.0
    %94 = vmatpush1.msra.mxu0 0.0
    %95 = vmatprep.subr.mxu0 0.0
    %96 = vmatpush1.msra.mxu0 0.0
    %97 = vmatprep.subr.mxu0 0.0
    %98 = vmatpush1.msra.mxu0 0.0
    %99 = vmatprep.subr.mxu0 0.0
    %100 = vmatpush1.msra.mxu0 0.0
    %101 = vmatprep.subr.mxu0 0.0
    %102 = vmatpush1.msra.mxu0 0.0
    %103 = vmatprep.subr.mxu0 0.0
    %104 = vmatpush1.msra.mxu0 0.0
    %105 = vmatprep.subr.mxu0 0.0
    %106 = vmatpush1.msra.mxu0 0.0
    %107 = vmatprep.subr.mxu0 0.0
    %108 = vmatpush1.msra.mxu0 0.0
    %109 = vmatprep.subr.mxu0 0.0
    %110 = vmatpush1.msra.mxu0 0.0
    %111 = vmatprep.subr.mxu0 0.0
    %112 = vmatpush1.msra.mxu0 0.0
    %113 = vmatprep.subr.mxu0 0.0
    %114 = vmatpush1.msra.mxu0 0.0
    %115 = vmatprep.subr.mxu0 0.0
    %116 = vmatpush1.msra.mxu0 0.0
    %117 = vmatprep.subr.mxu0 0.0
    %118 = vmatpush1.msra.mxu0 0.0
    %119 = vmatprep.subr.mxu0 0.0
    %120 = vmatpush1.msra.mxu0 0.0
    %121 = vmatprep.subr.mxu0 0.0
    %122 = vmatpush1.msra.mxu0 0.0
    %123 = vmatprep.subr.mxu0 0.0
    %124 = vmatpush1.msra.mxu0 0.0
    %125 = vmatprep.subr.mxu0 0.0
    %126 = vmatpush1.msra.mxu0 0.0
    %127 = vmatprep.subr.mxu0 0.0
    %128 = vmatpush1.msra.mxu0 0.0
    %129 = vmatprep.subr.mxu0 0.0
    %130 = vmatpush1.msra.mxu0 0.0
    %131 = vmatprep.subr.mxu0 0.0
    %132 = vmatpush1.msra.mxu0 0.0
    %133 = vmatprep.subr.mxu0 0.0
    %134 = vmatpush1.msra.mxu0 0.0
    %135 = vmatprep.subr.mxu0 0.0
    %136 = vmatpush1.msra.mxu0 0.0
    %137 = vmatprep.mubr.f32.mxu0 0.0
    %138 = vmatmul.mubr.f32.gmra.mrb[0].mxu0 %v71
    %v139 = vpop.f32.mrb[0].mxu0
    %v140 = vadd.f32 0.0, %v139
    %v141 = vpop.f32.mrb[0].mxu0
    %142 = vdwg.mxu0
    %v143 = vmax.f32 %v140, 1e-30
    %v144 = vrsqrt.pop %v143
    %v145 = vmul.f32 %v140, %v144
    %v146 = vmax.f32 %v145, 1e-15
    %v147 = vtanh.pop %v146
    %v148 = vmin.f32 %v147, 0.996
    %v149 = vmul.f32 %v148, %v144
    %151 = vset.pattern.permute.xlu0 0
    %152 = vperm.xlu0 %151, %v149
    %v153 = vpop.permute.xlu0 %152
    %v155 = vmul.f32 %v153, %v67
    %v156 = vmul.f32 %v148, %v148
    %v157 = vld [vmem:[%s4] sm:$0xff]
    %v158 = vld [vmem:[%s4 + $0x8] sm:$0xff]
    %v159 = vld [vmem:[%s5] sm:$0x1]
    %v160 = vld [vmem:[%s6] sm:$0xff]
    %v161 = vld [vmem:[%s6 + $0x8] sm:$0xff]
    %s162 = sld [smem:[#allocation2]]
    %v163 = vmax.f32 %v156, 1e-30
    %v164 = vrsqrt.pop %v163
    %v165 = vmul.f32 %v156, %v164
    %v166 = vmax.f32 %v165, 1e-15
    %v168 = vsel %vm69, %v155, 0
    %170 = vmatprep.subr.mxu0 0.0
    %171 = vmatpush1.msra.mxu0 %v157
    %172 = vmatprep.subr.mxu0 0.0
    %173 = vmatpush1.msra.mxu0 %v158
    %174 = vmatprep.subr.mxu0 0.0
    %175 = vmatpush1.msra.mxu0 0.0
    %176 = vmatprep.subr.mxu0 0.0
    %177 = vmatpush1.msra.mxu0 0.0
    %178 = vmatprep.subr.mxu0 0.0
    %179 = vmatpush1.msra.mxu0 0.0
    %180 = vmatprep.subr.mxu0 0.0
    %181 = vmatpush1.msra.mxu0 0.0
    %182 = vmatprep.subr.mxu0 0.0
    %183 = vmatpush1.msra.mxu0 0.0
    %184 = vmatprep.subr.mxu0 0.0
    %185 = vmatpush1.msra.mxu0 0.0
    %186 = vmatprep.subr.mxu0 0.0
    %187 = vmatpush1.msra.mxu0 0.0
    %188 = vmatprep.subr.mxu0 0.0
    %189 = vmatpush1.msra.mxu0 0.0
    %190 = vmatprep.subr.mxu0 0.0
    %191 = vmatpush1.msra.mxu0 0.0
    %192 = vmatprep.subr.mxu0 0.0
    %193 = vmatpush1.msra.mxu0 0.0
    %194 = vmatprep.subr.mxu0 0.0
    %195 = vmatpush1.msra.mxu0 0.0
    %196 = vmatprep.subr.mxu0 0.0
    %197 = vmatpush1.msra.mxu0 0.0
    %198 = vmatprep.subr.mxu0 0.0
    %199 = vmatpush1.msra.mxu0 0.0
    %200 = vmatprep.subr.mxu0 0.0
    %201 = vmatpush1.msra.mxu0 0.0
    %202 = vmatprep.subr.mxu0 0.0
    %203 = vmatpush1.msra.mxu0 0.0
    %204 = vmatprep.subr.mxu0 0.0
    %205 = vmatpush1.msra.mxu0 0.0
    %206 = vmatprep.subr.mxu0 0.0
    %207 = vmatpush1.msra.mxu0 0.0
    %208 = vmatprep.subr.mxu0 0.0
    %209 = vmatpush1.msra.mxu0 0.0
    %210 = vmatprep.subr.mxu0 0.0
    %211 = vmatpush1.msra.mxu0 0.0
    %212 = vmatprep.subr.mxu0 0.0
    %213 = vmatpush1.msra.mxu0 0.0
    %214 = vmatprep.subr.mxu0 0.0
    %215 = vmatpush1.msra.mxu0 0.0
    %216 = vmatprep.subr.mxu0 0.0
    %217 = vmatpush1.msra.mxu0 0.0
    %218 = vmatprep.subr.mxu0 0.0
    %219 = vmatpush1.msra.mxu0 0.0
    %220 = vmatprep.subr.mxu0 0.0
    %221 = vmatpush1.msra.mxu0 0.0
    %222 = vmatprep.subr.mxu0 0.0
    %223 = vmatpush1.msra.mxu0 0.0
    %224 = vmatprep.subr.mxu0 0.0
    %225 = vmatpush1.msra.mxu0 0.0
    %226 = vmatprep.subr.mxu0 0.0
    %227 = vmatpush1.msra.mxu0 0.0
    %228 = vmatprep.subr.mxu0 0.0
    %229 = vmatpush1.msra.mxu0 0.0
    %230 = vmatprep.subr.mxu0 0.0
    %231 = vmatpush1.msra.mxu0 0.0
    %232 = vmatprep.subr.mxu0 0.0
    %233 = vmatpush1.msra.mxu0 0.0
    %234 = vmatprep.mubr.f32.mxu0 0.0
    %235 = vmatmul.mubr.f32.gmra.mrb[0].mxu0 %v168
    %v236 = vpop.f32.mrb[0].mxu0
    %v237 = vadd.f32 0.0, %v236
    %v238 = vpop.f32.mrb[0].mxu0
    %239 = vdwg.mxu0
    %v240 = vmul.f32 %v237, %v237
    %vm241 = vcmask 261120
    %v243 = vsel %vm241, %v240, 0
    %245 = vmatprep.subr.mxu0 0.0
    %246 = vmatpush1.msra.mxu0 1.0
    %247 = vmatprep.subr.mxu0 0.0
    %248 = vmatpush1.msra.mxu0 1.0
    %249 = vmatprep.subr.mxu0 0.0
    %250 = vmatpush1.msra.mxu0 1.0
    %251 = vmatprep.subr.mxu0 0.0
    %252 = vmatpush1.msra.mxu0 1.0
    %253 = vmatprep.subr.mxu0 0.0
    %254 = vmatpush1.msra.mxu0 0.0
    %255 = vmatprep.subr.mxu0 0.0
    %256 = vmatpush1.msra.mxu0 0.0
    %257 = vmatprep.subr.mxu0 0.0
    %258 = vmatpush1.msra.mxu0 0.0
    %259 = vmatprep.subr.mxu0 0.0
    %260 = vmatpush1.msra.mxu0 0.0
    %261 = vmatprep.subr.mxu0 0.0
    %262 = vmatpush1.msra.mxu0 0.0
    %263 = vmatprep.subr.mxu0 0.0
    %264 = vmatpush1.msra.mxu0 0.0
    %265 = vmatprep.subr.mxu0 0.0
    %266 = vmatpush1.msra.mxu0 0.0
    %267 = vmatprep.subr.mxu0 0.0
    %268 = vmatpush1.msra.mxu0 0.0
    %269 = vmatprep.subr.mxu0 0.0
    %270 = vmatpush1.msra.mxu0 0.0
    %271 = vmatprep.subr.mxu0 0.0
    %272 = vmatpush1.msra.mxu0 0.0
    %273 = vmatprep.subr.mxu0 0.0
    %274 = vmatpush1.msra.mxu0 0.0
    %275 = vmatprep.subr.mxu0 0.0
    %276 = vmatpush1.msra.mxu0 0.0
    %277 = vmatprep.subr.mxu0 0.0
    %278 = vmatpush1.msra.mxu0 0.0
    %279 = vmatprep.subr.mxu0 0.0
    %280 = vmatpush1.msra.mxu0 0.0
    %281 = vmatprep.subr.mxu0 0.0
    %282 = vmatpush1.msra.mxu0 0.0
    %283 = vmatprep.subr.mxu0 0.0
    %284 = vmatpush1.msra.mxu0 0.0
    %285 = vmatprep.subr.mxu0 0.0
    %286 = vmatpush1.msra.mxu0 0.0
    %287 = vmatprep.subr.mxu0 0.0
    %288 = vmatpush1.msra.mxu0 0.0
    %289 = vmatprep.subr.mxu0 0.0
    %290 = vmatpush1.msra.mxu0 0.0
    %291 = vmatprep.subr.mxu0 0.0
    %292 = vmatpush1.msra.mxu0 0.0
    %293 = vmatprep.subr.mxu0 0.0
    %294 = vmatpush1.msra.mxu0 0.0
    %295 = vmatprep.subr.mxu0 0.0
    %296 = vmatpush1.msra.mxu0 0.0
    %297 = vmatprep.subr.mxu0 0.0
    %298 = vmatpush1.msra.mxu0 0.0
    %299 = vmatprep.subr.mxu0 0.0
    %300 = vmatpush1.msra.mxu0 0.0
    %301 = vmatprep.subr.mxu0 0.0
    %302 = vmatpush1.msra.mxu0 0.0
    %303 = vmatprep.subr.mxu0 0.0
    %304 = vmatpush1.msra.mxu0 0.0
    %305 = vmatprep.subr.mxu0 0.0
    %306 = vmatpush1.msra.mxu0 0.0
    %307 = vmatprep.subr.mxu0 0.0
    %308 = vmatpush1.msra.mxu0 0.0
    %309 = vmatprep.mubr.f32.mxu0 0.0
    %310 = vmatmul.mubr.f32.gmra.mrb[0].mxu0 %v243
    %v311 = vpop.f32.mrb[0].mxu0
    %v312 = vadd.f32 0.0, %v311
    %v313 = vpop.f32.mrb[0].mxu0
    %314 = vdwg.mxu0
    %v315 = vmax.f32 %v312, 1e-30
    %v316 = vrsqrt.pop %v315
    %v317 = vmul.f32 %v312, %v316
    %v318 = vmax.f32 %v317, 1e-15
    %v319 = vmul.f32 %v318, %v164
    %v320 = vmax.f32 %v166, -0.9999999
    %v321 = vmin.f32 %v320, 0.9999999
    %v322 = vadd.f32 %v321, 1.0
    %v323 = vlog2.pop %v322
    %v324 = vmul.f32 %v323, 0.6931472
    %v325 = vmul.f32 -0.5, %v321
    %v326 = vadd.f32 %v325, 1.0
    %v327 = vmul.f32 %v326, %v321
    %v328 = vand.u32 2147483647, %v321
    %vm329 = vcmp.lt.f32.partialorder %v328, 0.0004427343
    %v330 = vsel %vm329, %v327, %v324
    %v331 = vsub.f32 0.0, %v321
    %v332 = vadd.f32 %v331, 1.0
    %v333 = vlog2.pop %v332
    %v334 = vmul.f32 %v333, 0.6931472
    %v335 = vmul.f32 -0.5, %v331
    %v336 = vadd.f32 %v335, 1.0
    %v337 = vmul.f32 %v336, %v331
    %v338 = vand.u32 2147483647, %v331
    %vm339 = vcmp.lt.f32.partialorder %v338, 0.0004427343
    %v340 = vsel %vm339, %v337, %v334
    %v341 = vsub.f32 %v330, %v340
    %v342 = vmul.f32 %v341, 0.5
    %v343 = vmul.f32 %v319, %v342
    %v344 = vtanh.pop %v343
    %v345 = vmin.f32 %v344, 0.996
    %v346 = vmul.f32 %v345, %v316
    %v347 = vmul.f32 %v345, %v345
    %348 = vmatprep.subr.mxu0 0.0
    %349 = vmatpush1.msra.mxu0 %v160
    %350 = vmatprep.subr.mxu0 0.0
    %351 = vmatpush1.msra.mxu0 %v161
    %352 = vmatprep.subr.mxu0 0.0
    %353 = vmatpush1.msra.mxu0 0.0
    %354 = vmatprep.subr.mxu0 0.0
    %355 = vmatpush1.msra.mxu0 0.0
    %356 = vmatprep.subr.mxu0 0.0
    %357 = vmatpush1.msra.mxu0 0.0
    %358 = vmatprep.subr.mxu0 0.0
    %359 = vmatpush1.msra.mxu0 0.0
    %360 = vmatprep.subr.mxu0 0.0
    %361 = vmatpush1.msra.mxu0 0.0
    %362 = vmatprep.subr.mxu0 0.0
    %363 = vmatpush1.msra.mxu0 0.0
    %364 = vmatprep.subr.mxu0 0.0
    %365 = vmatpush1.msra.mxu0 0.0
    %366 = vmatprep.subr.mxu0 0.0
    %367 = vmatpush1.msra.mxu0 0.0
    %368 = vmatprep.subr.mxu0 0.0
    %369 = vmatpush1.msra.mxu0 0.0
    %370 = vmatprep.subr.mxu0 0.0
    %371 = vmatpush1.msra.mxu0 0.0
    %372 = vmatprep.subr.mxu0 0.0
    %373 = vmatpush1.msra.mxu0 0.0
    %374 = vmatprep.subr.mxu0 0.0
    %375 = vmatpush1.msra.mxu0 0.0
    %376 = vmatprep.subr.mxu0 0.0
    %377 = vmatpush1.msra.mxu0 0.0
    %378 = vmatprep.subr.mxu0 0.0
    %379 = vmatpush1.msra.mxu0 0.0
    %380 = vmatprep.subr.mxu0 0.0
    %381 = vmatpush1.msra.mxu0 0.0
    %382 = vmatprep.subr.mxu0 0.0
    %383 = vmatpush1.msra.mxu0 0.0
    %384 = vmatprep.subr.mxu0 0.0
    %385 = vmatpush1.msra.mxu0 0.0
    %386 = vmatprep.subr.mxu0 0.0
    %387 = vmatpush1.msra.mxu0 0.0
    %388 = vmatprep.subr.mxu0 0.0
    %389 = vmatpush1.msra.mxu0 0.0
    %390 = vmatprep.subr.mxu0 0.0
    %391 = vmatpush1.msra.mxu0 0.0
    %392 = vmatprep.subr.mxu0 0.0
    %393 = vmatpush1.msra.mxu0 0.0
    %394 = vmatprep.subr.mxu0 0.0
    %395 = vmatpush1.msra.mxu0 0.0
    %396 = vmatprep.subr.mxu0 0.0
    %397 = vmatpush1.msra.mxu0 0.0
    %398 = vmatprep.subr.mxu0 0.0
    %399 = vmatpush1.msra.mxu0 0.0
    %400 = vmatprep.subr.mxu0 0.0
    %401 = vmatpush1.msra.mxu0 0.0
    %402 = vmatprep.subr.mxu0 0.0
    %403 = vmatpush1.msra.mxu0 0.0
    %404 = vmatprep.subr.mxu0 0.0
    %405 = vmatpush1.msra.mxu0 0.0
    %406 = vmatprep.subr.mxu0 0.0
    %407 = vmatpush1.msra.mxu0 0.0
    %408 = vmatprep.subr.mxu0 0.0
    %409 = vmatpush1.msra.mxu0 0.0
    %410 = vmatprep.subr.mxu0 0.0
    %411 = vmatpush1.msra.mxu0 0.0
    %412 = vmatprep.mubr.f32.mxu0 0.0
    %413 = vmatmul.mubr.f32.gmra.mrb[0].mxu0 %v168
    %v414 = vpop.f32.mrb[0].mxu0
    %v415 = vadd.f32 0.0, %v414
    %v416 = vpop.f32.mrb[0].mxu0
    %417 = vdwg.mxu0
    %v418 = vmul.f32 %v346, %v415
    %v419 = vmul.f32 %v418, 2.0
    %v420 = vadd.f32 %v419, 1.0
    %v421 = vstv %s162
    %v422 = vmul.f32 %v421, %v347
    %v423 = vadd.f32 %v420, %v422
    %v424 = vmax.f32 %v423, 1e-15
    %v425 = vrcp.pop %v424
    %v426 = vadd.f32 %v420, %v421
    %v427 = vmul.f32 %v346, %v425
    %v428 = vmul.f32 %v426, %v427
    %430 = vset.pattern.permute.xlu0 0
    %431 = vperm.xlu0 %430, %v428
    %v432 = vpop.permute.xlu0 %431
    %v434 = vmul.f32 %v432, %v237
    %v435 = vsub.f32 1.0, %v347
    %v436 = vmul.f32 %v435, %v425
    %438 = vset.pattern.permute.xlu0 0
    %439 = vperm.xlu0 %438, %v436
    %v440 = vpop.permute.xlu0 %439
    %v443 = vlaneseq
    %v444 = vshrl.u32 %v443, 7
    %v445 = vsub.s32 0, %v444
    %v446 = vrot.slane %v159, %v445
    %v448 = vmul.f32 %v440, %v446
    %v449 = vadd.f32 %v434, %v448
    %v450 = vmul.f32 %v449, %v449
    %v452 = vsel %vm241, %v450, 0
    %454 = vmatprep.subr.mxu0 0.0
    %455 = vmatpush1.msra.mxu0 1.0
    %456 = vmatprep.subr.mxu0 0.0
    %457 = vmatpush1.msra.mxu0 1.0
    %458 = vmatprep.subr.mxu0 0.0
    %459 = vmatpush1.msra.mxu0 1.0
    %460 = vmatprep.subr.mxu0 0.0
    %461 = vmatpush1.msra.mxu0 1.0
    %462 = vmatprep.subr.mxu0 0.0
    %463 = vmatpush1.msra.mxu0 0.0
    %464 = vmatprep.subr.mxu0 0.0
    %465 = vmatpush1.msra.mxu0 0.0
    %466 = vmatprep.subr.mxu0 0.0
    %467 = vmatpush1.msra.mxu0 0.0
    %468 = vmatprep.subr.mxu0 0.0
    %469 = vmatpush1.msra.mxu0 0.0
    %470 = vmatprep.subr.mxu0 0.0
    %471 = vmatpush1.msra.mxu0 0.0
    %472 = vmatprep.subr.mxu0 0.0
    %473 = vmatpush1.msra.mxu0 0.0
    %474 = vmatprep.subr.mxu0 0.0
    %475 = vmatpush1.msra.mxu0 0.0
    %476 = vmatprep.subr.mxu0 0.0
    %477 = vmatpush1.msra.mxu0 0.0
    %478 = vmatprep.subr.mxu0 0.0
    %479 = vmatpush1.msra.mxu0 0.0
    %480 = vmatprep.subr.mxu0 0.0
    %481 = vmatpush1.msra.mxu0 0.0
    %482 = vmatprep.subr.mxu0 0.0
    %483 = vmatpush1.msra.mxu0 0.0
    %484 = vmatprep.subr.mxu0 0.0
    %485 = vmatpush1.msra.mxu0 0.0
    %486 = vmatprep.subr.mxu0 0.0
    %487 = vmatpush1.msra.mxu0 0.0
    %488 = vmatprep.subr.mxu0 0.0
    %489 = vmatpush1.msra.mxu0 0.0
    %490 = vmatprep.subr.mxu0 0.0
    %491 = vmatpush1.msra.mxu0 0.0
    %492 = vmatprep.subr.mxu0 0.0
    %493 = vmatpush1.msra.mxu0 0.0
    %494 = vmatprep.subr.mxu0 0.0
    %495 = vmatpush1.msra.mxu0 0.0
    %496 = vmatprep.subr.mxu0 0.0
    %497 = vmatpush1.msra.mxu0 0.0
    %498 = vmatprep.subr.mxu0 0.0
    %499 = vmatpush1.msra.mxu0 0.0
    %500 = vmatprep.subr.mxu0 0.0
    %501 = vmatpush1.msra.mxu0 0.0
    %502 = vmatprep.subr.mxu0 0.0
    %503 = vmatpush1.msra.mxu0 0.0
    %504 = vmatprep.subr.mxu0 0.0
    %505 = vmatpush1.msra.mxu0 0.0
    %506 = vmatprep.subr.mxu0 0.0
    %507 = vmatpush1.msra.mxu0 0.0
    %508 = vmatprep.subr.mxu0 0.0
    %509 = vmatpush1.msra.mxu0 0.0
    %510 = vmatprep.subr.mxu0 0.0
    %511 = vmatpush1.msra.mxu0 0.0
    %512 = vmatprep.subr.mxu0 0.0
    %513 = vmatpush1.msra.mxu0 0.0
    %514 = vmatprep.subr.mxu0 0.0
    %515 = vmatpush1.msra.mxu0 0.0
    %516 = vmatprep.subr.mxu0 0.0
    %517 = vmatpush1.msra.mxu0 0.0
    %518 = vmatprep.mubr.f32.mxu0 0.0
    %519 = vmatmul.mubr.f32.gmra.mrb[0].mxu0 %v452
    %v520 = vpop.f32.mrb[0].mxu0
    %v521 = vadd.f32 0.0, %v520
    %v522 = vpop.f32.mrb[0].mxu0
    %523 = vdwg.mxu0
    %v524 = vmax.f32 %v521, 1e-30
    %v525 = vrsqrt.pop %v524
    %v526 = vmul.f32 %v521, %v525
    %v527 = vmax.f32 %v526, 1e-15
    %v528 = vmin.f32 %v527, 0.996
    %v529 = vmax.f32 %v528, -0.9999999
    %v530 = vmin.f32 %v529, 0.9999999
    %v531 = vadd.f32 %v530, 1.0
    %v532 = vlog2.pop %v531
    %v533 = vmul.f32 %v532, 0.6931472
    %v534 = vmul.f32 -0.5, %v530
    %v535 = vadd.f32 %v534, 1.0
    %v536 = vmul.f32 %v535, %v530
    %v537 = vand.u32 2147483647, %v530
    %vm538 = vcmp.lt.f32.partialorder %v537, 0.0004427343
    %v539 = vsel %vm538, %v536, %v533
    %v540 = vsub.f32 0.0, %v530
    %v541 = vadd.f32 %v540, 1.0
    %v542 = vlog2.pop %v541
    %v543 = vmul.f32 %v542, 0.6931472
    %v544 = vmul.f32 -0.5, %v540
    %v545 = vadd.f32 %v544, 1.0
    %v546 = vmul.f32 %v545, %v540
    %v547 = vand.u32 2147483647, %v540
    %vm548 = vcmp.lt.f32.partialorder %v547, 0.0004427343
    %v549 = vsel %vm548, %v546, %v543
    %v550 = vsub.f32 %v539, %v549
    %v551 = vmul.f32 %v550, 0.5
    %v552 = vmul.f32 %v551, %v525
    %554 = vset.pattern.permute.xlu0 0
    %555 = vperm.xlu0 %554, %v552
    %v556 = vpop.permute.xlu0 %555
    %v558 = vmul.f32 %v556, %v449
    %v559 = vpack.c.bf16 %v558, %v558
    %vm560 = vcmask 64512
    %v562 = vsel %vm560, %v65, 0
    %vm564 = vcmask 1043456
    %v566 = vsel %vm564, %v559, 0
    %568 = vmatprep.subr.bf16.mxu0 0
    %569 = vmatpush1.bf16.msra.mxu0 %v566
    %570 = vmatprep.subr.bf16.mxu0 0
    %571 = vmatpush1.bf16.msra.mxu0 0
    %572 = vmatprep.subr.bf16.mxu0 0
    %573 = vmatpush1.bf16.msra.mxu0 0
    %574 = vmatprep.subr.bf16.mxu0 0
    %575 = vmatpush1.bf16.msra.mxu0 0
    %576 = vmatprep.subr.bf16.mxu0 0
    %577 = vmatpush1.bf16.msra.mxu0 0
    %578 = vmatprep.subr.bf16.mxu0 0
    %579 = vmatpush1.bf16.msra.mxu0 0
    %580 = vmatprep.subr.bf16.mxu0 0
    %581 = vmatpush1.bf16.msra.mxu0 0
    %582 = vmatprep.subr.bf16.mxu0 0
    %583 = vmatpush1.bf16.msra.mxu0 0
    %584 = vmatprep.subr.bf16.mxu0 0
    %585 = vmatpush1.bf16.msra.mxu0 0
    %586 = vmatprep.subr.bf16.mxu0 0
    %587 = vmatpush1.bf16.msra.mxu0 0
    %588 = vmatprep.subr.bf16.mxu0 0
    %589 = vmatpush1.bf16.msra.mxu0 0
    %590 = vmatprep.subr.bf16.mxu0 0
    %591 = vmatpush1.bf16.msra.mxu0 0
    %592 = vmatprep.subr.bf16.mxu0 0
    %593 = vmatpush1.bf16.msra.mxu0 0
    %594 = vmatprep.subr.bf16.mxu0 0
    %595 = vmatpush1.bf16.msra.mxu0 0
    %596 = vmatprep.subr.bf16.mxu0 0
    %597 = vmatpush1.bf16.msra.mxu0 0
    %598 = vmatprep.subr.bf16.mxu0 0
    %599 = vmatpush1.bf16.msra.mxu0 0
    %600 = vmatprep.mubr.bf16.mxu0 0
    %601 = vmatmul.mubr.bf16.gmra.mrb[0].mxu0 %v562
    %v602 = vpop.f32.mrb[0].mxu0
    %v603 = vadd.f32 0.0, %v602
    %v604 = vpop.f32.mrb[0].mxu0
    %v605 = vpop.f32.mrb[0].mxu0
    %v606 = vpop.f32.mrb[0].mxu0
    %607 = vdwg.mxu0
    %v608 = vmul.f32 %v603, %v603
    %v610 = vsel %vm241, %v608, 0
    %612 = vmatprep.subr.mxu0 0.0
    %613 = vmatpush1.msra.mxu0 1.0
    %614 = vmatprep.subr.mxu0 0.0
    %615 = vmatpush1.msra.mxu0 1.0
    %616 = vmatprep.subr.mxu0 0.0
    %617 = vmatpush1.msra.mxu0 1.0
    %618 = vmatprep.subr.mxu0 0.0
    %619 = vmatpush1.msra.mxu0 1.0
    %620 = vmatprep.subr.mxu0 0.0
    %621 = vmatpush1.msra.mxu0 0.0
    %622 = vmatprep.subr.mxu0 0.0
    %623 = vmatpush1.msra.mxu0 0.0
    %624 = vmatprep.subr.mxu0 0.0
    %625 = vmatpush1.msra.mxu0 0.0
    %626 = vmatprep.subr.mxu0 0.0
    %627 = vmatpush1.msra.mxu0 0.0
    %628 = vmatprep.subr.mxu0 0.0
    %629 = vmatpush1.msra.mxu0 0.0
    %630 = vmatprep.subr.mxu0 0.0
    %631 = vmatpush1.msra.mxu0 0.0
    %632 = vmatprep.subr.mxu0 0.0
    %633 = vmatpush1.msra.mxu0 0.0
    %634 = vmatprep.subr.mxu0 0.0
    %635 = vmatpush1.msra.mxu0 0.0
    %636 = vmatprep.subr.mxu0 0.0
    %637 = vmatpush1.msra.mxu0 0.0
    %638 = vmatprep.subr.mxu0 0.0
    %639 = vmatpush1.msra.mxu0 0.0
    %640 = vmatprep.subr.mxu0 0.0
    %641 = vmatpush1.msra.mxu0 0.0
    %642 = vmatprep.subr.mxu0 0.0
    %643 = vmatpush1.msra.mxu0 0.0
    %644 = vmatprep.subr.mxu0 0.0
    %645 = vmatpush1.msra.mxu0 0.0
    %646 = vmatprep.subr.mxu0 0.0
    %647 = vmatpush1.msra.mxu0 0.0
    %648 = vmatprep.subr.mxu0 0.0
    %649 = vmatpush1.msra.mxu0 0.0
    %650 = vmatprep.subr.mxu0 0.0
    %651 = vmatpush1.msra.mxu0 0.0
    %652 = vmatprep.subr.mxu0 0.0
    %653 = vmatpush1.msra.mxu0 0.0
    %654 = vmatprep.subr.mxu0 0.0
    %655 = vmatpush1.msra.mxu0 0.0
    %656 = vmatprep.subr.mxu0 0.0
    %657 = vmatpush1.msra.mxu0 0.0
    %658 = vmatprep.subr.mxu0 0.0
    %659 = vmatpush1.msra.mxu0 0.0
    %660 = vmatprep.subr.mxu0 0.0
    %661 = vmatpush1.msra.mxu0 0.0
    %662 = vmatprep.subr.mxu0 0.0
    %663 = vmatpush1.msra.mxu0 0.0
    %664 = vmatprep.subr.mxu0 0.0
    %665 = vmatpush1.msra.mxu0 0.0
    %666 = vmatprep.subr.mxu0 0.0
    %667 = vmatpush1.msra.mxu0 0.0
    %668 = vmatprep.subr.mxu0 0.0
    %669 = vmatpush1.msra.mxu0 0.0
    %670 = vmatprep.subr.mxu0 0.0
    %671 = vmatpush1.msra.mxu0 0.0
    %672 = vmatprep.subr.mxu0 0.0
    %673 = vmatpush1.msra.mxu0 0.0
    %674 = vmatprep.subr.mxu0 0.0
    %675 = vmatpush1.msra.mxu0 0.0
    %676 = vmatprep.mubr.f32.mxu0 0.0
    %677 = vmatmul.mubr.f32.gmra.mrb[0].mxu0 %v610
    %v678 = vpop.f32.mrb[0].mxu0
    %v679 = vadd.f32 0.0, %v678
    %v680 = vpop.f32.mrb[0].mxu0
    %681 = vdwg.mxu0
    %v682 = vmax.f32 %v679, 1e-30
    %v683 = vrsqrt.pop %v682
    %v684 = vmul.f32 %v679, %v683
    %v685 = vmax.f32 %v684, 1e-15
    %vm686 = vcmp.gt.f32.partialorder %v685, 3.106303
    %v687 = vmul.f32 %v683, 3.106303
    %v688 = vsel %vm686, %v687, 1.0
    %690 = vset.pattern.permute.xlu0 0
    %691 = vperm.xlu0 %690, %v688
    %v692 = vpop.permute.xlu0 %691
    %v694 = vmul.f32 %v692, %v603
    %v695 = vmax.f32 %v694, 0.0
    %v696 = vmul.f32 %v695, %v695
    %v698 = vsel %vm241, %v696, 0
    %700 = vmatprep.subr.mxu0 0.0
    %701 = vmatpush1.msra.mxu0 1.0
    %702 = vmatprep.subr.mxu0 0.0
    %703 = vmatpush1.msra.mxu0 1.0
    %704 = vmatprep.subr.mxu0 0.0
    %705 = vmatpush1.msra.mxu0 1.0
    %706 = vmatprep.subr.mxu0 0.0
    %707 = vmatpush1.msra.mxu0 1.0
    %708 = vmatprep.subr.mxu0 0.0
    %709 = vmatpush1.msra.mxu0 0.0
    %710 = vmatprep.subr.mxu0 0.0
    %711 = vmatpush1.msra.mxu0 0.0
    %712 = vmatprep.subr.mxu0 0.0
    %713 = vmatpush1.msra.mxu0 0.0
    %714 = vmatprep.subr.mxu0 0.0
    %715 = vmatpush1.msra.mxu0 0.0
    %716 = vmatprep.subr.mxu0 0.0
    %717 = vmatpush1.msra.mxu0 0.0
    %718 = vmatprep.subr.mxu0 0.0
    %719 = vmatpush1.msra.mxu0 0.0
    %720 = vmatprep.subr.mxu0 0.0
    %721 = vmatpush1.msra.mxu0 0.0
    %722 = vmatprep.subr.mxu0 0.0
    %723 = vmatpush1.msra.mxu0 0.0
    %724 = vmatprep.subr.mxu0 0.0
    %725 = vmatpush1.msra.mxu0 0.0
    %726 = vmatprep.subr.mxu0 0.0
    %727 = vmatpush1.msra.mxu0 0.0
    %728 = vmatprep.subr.mxu0 0.0
    %729 = vmatpush1.msra.mxu0 0.0
    %730 = vmatprep.subr.mxu0 0.0
    %731 = vmatpush1.msra.mxu0 0.0
    %732 = vmatprep.subr.mxu0 0.0
    %733 = vmatpush1.msra.mxu0 0.0
    %734 = vmatprep.subr.mxu0 0.0
    %735 = vmatpush1.msra.mxu0 0.0
    %736 = vmatprep.subr.mxu0 0.0
    %737 = vmatpush1.msra.mxu0 0.0
    %738 = vmatprep.subr.mxu0 0.0
    %739 = vmatpush1.msra.mxu0 0.0
    %740 = vmatprep.subr.mxu0 0.0
    %741 = vmatpush1.msra.mxu0 0.0
    %742 = vmatprep.subr.mxu0 0.0
    %743 = vmatpush1.msra.mxu0 0.0
    %744 = vmatprep.subr.mxu0 0.0
    %745 = vmatpush1.msra.mxu0 0.0
    %746 = vmatprep.subr.mxu0 0.0
    %747 = vmatpush1.msra.mxu0 0.0
    %748 = vmatprep.subr.mxu0 0.0
    %749 = vmatpush1.msra.mxu0 0.0
    %750 = vmatprep.subr.mxu0 0.0
    %751 = vmatpush1.msra.mxu0 0.0
    %752 = vmatprep.subr.mxu0 0.0
    %753 = vmatpush1.msra.mxu0 0.0
    %754 = vmatprep.subr.mxu0 0.0
    %755 = vmatpush1.msra.mxu0 0.0
    %756 = vmatprep.subr.mxu0 0.0
    %757 = vmatpush1.msra.mxu0 0.0
    %758 = vmatprep.subr.mxu0 0.0
    %759 = vmatpush1.msra.mxu0 0.0
    %760 = vmatprep.subr.mxu0 0.0
    %761 = vmatpush1.msra.mxu0 0.0
    %762 = vmatprep.subr.mxu0 0.0
    %763 = vmatpush1.msra.mxu0 0.0
    %764 = vmatprep.mubr.f32.mxu0 0.0
    %765 = vmatmul.mubr.f32.gmra.mrb[0].mxu0 %v698
    %v766 = vpop.f32.mrb[0].mxu0
    %v767 = vadd.f32 0.0, %v766
    %v768 = vpop.f32.mrb[0].mxu0
    %769 = vdwg.mxu0
    %v770 = vmax.f32 %v767, 1e-30
    %v771 = vrsqrt.pop %v770
    %v772 = vmul.f32 %v767, %v771
    %v773 = vmax.f32 %v772, 1e-15
    %vm774 = vcmp.gt.f32.partialorder %v773, 3.106303
    %v775 = vmul.f32 %v771, 3.106303
    %v776 = vsel %vm774, %v775, 1.0
    %778 = vset.pattern.permute.xlu0 0
    %779 = vperm.xlu0 %778, %v776
    %v780 = vpop.permute.xlu0 %779
    %v782 = vmul.f32 %v780, %v695
    %v783 = vtanh.pop %v773
    %v784 = vmin.f32 %v783, 0.996
    %v785 = vmul.f32 %v784, %v771
    %787 = vset.pattern.permute.xlu0 0
    %788 = vperm.xlu0 %787, %v785
    %v789 = vpop.permute.xlu0 %788
    %v791 = vmul.f32 %v789, %v695
    %v792 = vmul.f32 %v784, %v784
    %v793 = vld [vmem:[%s7] sm:$0xff]
    %v794 = vld [vmem:[%s7 + $0x8] sm:$0xff]
    %v795 = vld [vmem:[%s7 + $0x10] sm:$0xff]
    %v796 = vld [vmem:[%s7 + $0x18] sm:$0xff]
    %v797 = vld [vmem:[%s8] sm:$0x1]
    %v798 = vld [vmem:[%s9] sm:$0xff]
    %v799 = vld [vmem:[%s9 + $0x8] sm:$0xff]
    %v800 = vld [vmem:[%s9 + $0x10] sm:$0xff]
    %v801 = vld [vmem:[%s9 + $0x18] sm:$0xff]
    %s802 = sld [smem:[#allocation2 + $0x1]]
    %v803 = vmax.f32 %v792, 1e-30
    %v804 = vrsqrt.pop %v803
    %v805 = vmul.f32 %v792, %v804
    %v806 = vmax.f32 %v805, 1e-15
    %v808 = vsel %vm241, %v791, 0
    %810 = vmatprep.subr.mxu0 0.0
    %811 = vmatpush1.msra.mxu0 %v793
    %812 = vmatprep.subr.mxu0 0.0
    %813 = vmatpush1.msra.mxu0 %v794
    %814 = vmatprep.subr.mxu0 0.0
    %815 = vmatpush1.msra.mxu0 %v795
    %816 = vmatprep.subr.mxu0 0.0
    %817 = vmatpush1.msra.mxu0 %v796
    %818 = vmatprep.subr.mxu0 0.0
    %819 = vmatpush1.msra.mxu0 0.0
    %820 = vmatprep.subr.mxu0 0.0
    %821 = vmatpush1.msra.mxu0 0.0
    %822 = vmatprep.subr.mxu0 0.0
    %823 = vmatpush1.msra.mxu0 0.0
    %824 = vmatprep.subr.mxu0 0.0
    %825 = vmatpush1.msra.mxu0 0.0
    %826 = vmatprep.subr.mxu0 0.0
    %827 = vmatpush1.msra.mxu0 0.0
    %828 = vmatprep.subr.mxu0 0.0
    %829 = vmatpush1.msra.mxu0 0.0
    %830 = vmatprep.subr.mxu0 0.0
    %831 = vmatpush1.msra.mxu0 0.0
    %832 = vmatprep.subr.mxu0 0.0
    %833 = vmatpush1.msra.mxu0 0.0
    %834 = vmatprep.subr.mxu0 0.0
    %835 = vmatpush1.msra.mxu0 0.0
    %836 = vmatprep.subr.mxu0 0.0
    %837 = vmatpush1.msra.mxu0 0.0
    %838 = vmatprep.subr.mxu0 0.0
    %839 = vmatpush1.msra.mxu0 0.0
    %840 = vmatprep.subr.mxu0 0.0
    %841 = vmatpush1.msra.mxu0 0.0
    %842 = vmatprep.subr.mxu0 0.0
    %843 = vmatpush1.msra.mxu0 0.0
    %844 = vmatprep.subr.mxu0 0.0
    %845 = vmatpush1.msra.mxu0 0.0
    %846 = vmatprep.subr.mxu0 0.0
    %847 = vmatpush1.msra.mxu0 0.0
    %848 = vmatprep.subr.mxu0 0.0
    %849 = vmatpush1.msra.mxu0 0.0
    %850 = vmatprep.subr.mxu0 0.0
    %851 = vmatpush1.msra.mxu0 0.0
    %852 = vmatprep.subr.mxu0 0.0
    %853 = vmatpush1.msra.mxu0 0.0
    %854 = vmatprep.subr.mxu0 0.0
    %855 = vmatpush1.msra.mxu0 0.0
    %856 = vmatprep.subr.mxu0 0.0
    %857 = vmatpush1.msra.mxu0 0.0
    %858 = vmatprep.subr.mxu0 0.0
    %859 = vmatpush1.msra.mxu0 0.0
    %860 = vmatprep.subr.mxu0 0.0
    %861 = vmatpush1.msra.mxu0 0.0
    %862 = vmatprep.subr.mxu0 0.0
    %863 = vmatpush1.msra.mxu0 0.0
    %864 = vmatprep.subr.mxu0 0.0
    %865 = vmatpush1.msra.mxu0 0.0
    %866 = vmatprep.subr.mxu0 0.0
    %867 = vmatpush1.msra.mxu0 0.0
    %868 = vmatprep.subr.mxu0 0.0
    %869 = vmatpush1.msra.mxu0 0.0
    %870 = vmatprep.subr.mxu0 0.0
    %871 = vmatpush1.msra.mxu0 0.0
    %872 = vmatprep.subr.mxu0 0.0
    %873 = vmatpush1.msra.mxu0 0.0
    %874 = vmatprep.mubr.f32.mxu0 0.0
    %875 = vmatmul.mubr.f32.gmra.mrb[0].mxu0 %v808
    %v876 = vpop.f32.mrb[0].mxu0
    %v877 = vadd.f32 0.0, %v876
    %v878 = vpop.f32.mrb[0].mxu0
    %879 = vdwg.mxu0
    %v880 = vmul.f32 %v877, %v877
    %v882 = vsel %vm241, %v880, 0
    %884 = vmatprep.subr.mxu0 0.0
    %885 = vmatpush1.msra.mxu0 1.0
    %886 = vmatprep.subr.mxu0 0.0
    %887 = vmatpush1.msra.mxu0 1.0
    %888 = vmatprep.subr.mxu0 0.0
    %889 = vmatpush1.msra.mxu0 1.0
    %890 = vmatprep.subr.mxu0 0.0
    %891 = vmatpush1.msra.mxu0 1.0
    %892 = vmatprep.subr.mxu0 0.0
    %893 = vmatpush1.msra.mxu0 0.0
    %894 = vmatprep.subr.mxu0 0.0
    %895 = vmatpush1.msra.mxu0 0.0
    %896 = vmatprep.subr.mxu0 0.0
    %897 = vmatpush1.msra.mxu0 0.0
    %898 = vmatprep.subr.mxu0 0.0
    %899 = vmatpush1.msra.mxu0 0.0
    %900 = vmatprep.subr.mxu0 0.0
    %901 = vmatpush1.msra.mxu0 0.0
    %902 = vmatprep.subr.mxu0 0.0
    %903 = vmatpush1.msra.mxu0 0.0
    %904 = vmatprep.subr.mxu0 0.0
    %905 = vmatpush1.msra.mxu0 0.0
    %906 = vmatprep.subr.mxu0 0.0
    %907 = vmatpush1.msra.mxu0 0.0
    %908 = vmatprep.subr.mxu0 0.0
    %909 = vmatpush1.msra.mxu0 0.0
    %910 = vmatprep.subr.mxu0 0.0
    %911 = vmatpush1.msra.mxu0 0.0
    %912 = vmatprep.subr.mxu0 0.0
    %913 = vmatpush1.msra.mxu0 0.0
    %914 = vmatprep.subr.mxu0 0.0
    %915 = vmatpush1.msra.mxu0 0.0
    %916 = vmatprep.subr.mxu0 0.0
    %917 = vmatpush1.msra.mxu0 0.0
    %918 = vmatprep.subr.mxu0 0.0
    %919 = vmatpush1.msra.mxu0 0.0
    %920 = vmatprep.subr.mxu0 0.0
    %921 = vmatpush1.msra.mxu0 0.0
    %922 = vmatprep.subr.mxu0 0.0
    %923 = vmatpush1.msra.mxu0 0.0
    %924 = vmatprep.subr.mxu0 0.0
    %925 = vmatpush1.msra.mxu0 0.0
    %926 = vmatprep.subr.mxu0 0.0
    %927 = vmatpush1.msra.mxu0 0.0
    %928 = vmatprep.subr.mxu0 0.0
    %929 = vmatpush1.msra.mxu0 0.0
    %930 = vmatprep.subr.mxu0 0.0
    %931 = vmatpush1.msra.mxu0 0.0
    %932 = vmatprep.subr.mxu0 0.0
    %933 = vmatpush1.msra.mxu0 0.0
    %934 = vmatprep.subr.mxu0 0.0
    %935 = vmatpush1.msra.mxu0 0.0
    %936 = vmatprep.subr.mxu0 0.0
    %937 = vmatpush1.msra.mxu0 0.0
    %938 = vmatprep.subr.mxu0 0.0
    %939 = vmatpush1.msra.mxu0 0.0
    %940 = vmatprep.subr.mxu0 0.0
    %941 = vmatpush1.msra.mxu0 0.0
    %942 = vmatprep.subr.mxu0 0.0
    %943 = vmatpush1.msra.mxu0 0.0
    %944 = vmatprep.subr.mxu0 0.0
    %945 = vmatpush1.msra.mxu0 0.0
    %946 = vmatprep.subr.mxu0 0.0
    %947 = vmatpush1.msra.mxu0 0.0
    %948 = vmatprep.mubr.f32.mxu0 0.0
    %949 = vmatmul.mubr.f32.gmra.mrb[0].mxu0 %v882
    %v950 = vpop.f32.mrb[0].mxu0
    %v951 = vadd.f32 0.0, %v950
    %v952 = vpop.f32.mrb[0].mxu0
    %953 = vdwg.mxu0
    %v954 = vmax.f32 %v951, 1e-30
    %v955 = vrsqrt.pop %v954
    %v956 = vmul.f32 %v951, %v955
    %v957 = vmax.f32 %v956, 1e-15
    %v958 = vmul.f32 %v957, %v804
    %v959 = vmax.f32 %v806, -0.9999999
    %v960 = vmin.f32 %v959, 0.9999999
    %v961 = vadd.f32 %v960, 1.0
    %v962 = vlog2.pop %v961
    %v963 = vmul.f32 %v962, 0.6931472
    %v964 = vmul.f32 -0.5, %v960
    %v965 = vadd.f32 %v964, 1.0
    %v966 = vmul.f32 %v965, %v960
    %v967 = vand.u32 2147483647, %v960
    %vm968 = vcmp.lt.f32.partialorder %v967, 0.0004427343
    %v969 = vsel %vm968, %v966, %v963
    %v970 = vsub.f32 0.0, %v960
    %v971 = vadd.f32 %v970, 1.0
    %v972 = vlog2.pop %v971
    %v973 = vmul.f32 %v972, 0.6931472
    %v974 = vmul.f32 -0.5, %v970
    %v975 = vadd.f32 %v974, 1.0
    %v976 = vmul.f32 %v975, %v970
    %v977 = vand.u32 2147483647, %v970
    %vm978 = vcmp.lt.f32.partialorder %v977, 0.0004427343
    %v979 = vsel %vm978, %v976, %v973
    %v980 = vsub.f32 %v969, %v979
    %v981 = vmul.f32 %v980, 0.5
    %v982 = vmul.f32 %v958, %v981
    %v983 = vtanh.pop %v982
    %v984 = vmin.f32 %v983, 0.996
    %v985 = vmul.f32 %v984, %v955
    %v986 = vmul.f32 %v984, %v984
    %987 = vmatprep.subr.mxu0 0.0
    %988 = vmatpush1.msra.mxu0 %v798
    %989 = vmatprep.subr.mxu0 0.0
    %990 = vmatpush1.msra.mxu0 %v799
    %991 = vmatprep.subr.mxu0 0.0
    %992 = vmatpush1.msra.mxu0 %v800
    %993 = vmatprep.subr.mxu0 0.0
    %994 = vmatpush1.msra.mxu0 %v801
    %995 = vmatprep.subr.mxu0 0.0
    %996 = vmatpush1.msra.mxu0 0.0
    %997 = vmatprep.subr.mxu0 0.0
    %998 = vmatpush1.msra.mxu0 0.0
    %999 = vmatprep.subr.mxu0 0.0
    %1000 = vmatpush1.msra.mxu0 0.0
    %1001 = vmatprep.subr.mxu0 0.0
    %1002 = vmatpush1.msra.mxu0 0.0
    %1003 = vmatprep.subr.mxu0 0.0
    %1004 = vmatpush1.msra.mxu0 0.0
    %1005 = vmatprep.subr.mxu0 0.0
    %1006 = vmatpush1.msra.mxu0 0.0
    %1007 = vmatprep.subr.mxu0 0.0
    %1008 = vmatpush1.msra.mxu0 0.0
    %1009 = vmatprep.subr.mxu0 0.0
    %1010 = vmatpush1.msra.mxu0 0.0
    %1011 = vmatprep.subr.mxu0 0.0
    %1012 = vmatpush1.msra.mxu0 0.0
    %1013 = vmatprep.subr.mxu0 0.0
    %1014 = vmatpush1.msra.mxu0 0.0
    %1015 = vmatprep.subr.mxu0 0.0
    %1016 = vmatpush1.msra.mxu0 0.0
    %1017 = vmatprep.subr.mxu0 0.0
    %1018 = vmatpush1.msra.mxu0 0.0
    %1019 = vmatprep.subr.mxu0 0.0
    %1020 = vmatpush1.msra.mxu0 0.0
    %1021 = vmatprep.subr.mxu0 0.0
    %1022 = vmatpush1.msra.mxu0 0.0
    %1023 = vmatprep.subr.mxu0 0.0
    %1024 = vmatpush1.msra.mxu0 0.0
    %1025 = vmatprep.subr.mxu0 0.0
    %1026 = vmatpush1.msra.mxu0 0.0
    %1027 = vmatprep.subr.mxu0 0.0
    %1028 = vmatpush1.msra.mxu0 0.0
    %1029 = vmatprep.subr.mxu0 0.0
    %1030 = vmatpush1.msra.mxu0 0.0
    %1031 = vmatprep.subr.mxu0 0.0
    %1032 = vmatpush1.msra.mxu0 0.0
    %1033 = vmatprep.subr.mxu0 0.0
    %1034 = vmatpush1.msra.mxu0 0.0
    %1035 = vmatprep.subr.mxu0 0.0
    %1036 = vmatpush1.msra.mxu0 0.0
    %1037 = vmatprep.subr.mxu0 0.0
    %1038 = vmatpush1.msra.mxu0 0.0
    %1039 = vmatprep.subr.mxu0 0.0
    %1040 = vmatpush1.msra.mxu0 0.0
    %1041 = vmatprep.subr.mxu0 0.0
    %1042 = vmatpush1.msra.mxu0 0.0
    %1043 = vmatprep.subr.mxu0 0.0
    %1044 = vmatpush1.msra.mxu0 0.0
    %1045 = vmatprep.subr.mxu0 0.0
    %1046 = vmatpush1.msra.mxu0 0.0
    %1047 = vmatprep.subr.mxu0 0.0
    %1048 = vmatpush1.msra.mxu0 0.0
    %1049 = vmatprep.subr.mxu0 0.0
    %1050 = vmatpush1.msra.mxu0 0.0
    %1051 = vmatprep.mubr.f32.mxu0 0.0
    %1052 = vmatmul.mubr.f32.gmra.mrb[0].mxu0 %v808
    %v1053 = vpop.f32.mrb[0].mxu0
    %v1054 = vadd.f32 0.0, %v1053
    %v1055 = vpop.f32.mrb[0].mxu0
    %1056 = vdwg.mxu0
    %v1057 = vmul.f32 %v985, %v1054
    %v1058 = vmul.f32 %v1057, 2.0
    %v1059 = vadd.f32 %v1058, 1.0
    %v1060 = vstv %s802
    %v1061 = vmul.f32 %v1060, %v986
    %v1062 = vadd.f32 %v1059, %v1061
    %v1063 = vmax.f32 %v1062, 1e-15
    %v1064 = vrcp.pop %v1063
    %v1065 = vadd.f32 %v1059, %v1060
    %v1066 = vmul.f32 %v985, %v1064
    %v1067 = vmul.f32 %v1065, %v1066
    %1069 = vset.pattern.permute.xlu0 0
    %1070 = vperm.xlu0 %1069, %v1067
    %v1071 = vpop.permute.xlu0 %1070
    %v1073 = vmul.f32 %v1071, %v877
    %v1074 = vsub.f32 1.0, %v986
    %v1075 = vmul.f32 %v1074, %v1064
    %1077 = vset.pattern.permute.xlu0 0
    %1078 = vperm.xlu0 %1077, %v1075
    %v1079 = vpop.permute.xlu0 %1078
    %v1082 = vlaneseq
    %v1083 = vshrl.u32 %v1082, 7
    %v1084 = vsub.s32 0, %v1083
    %v1085 = vrot.slane %v797, %v1084
    %v1087 = vmul.f32 %v1079, %v1085
    %v1088 = vadd.f32 %v1073, %v1087
    %v1089 = vmul.f32 %v1088, %v1088
    %v1091 = vsel %vm241, %v1089, 0
    %1093 = vmatprep.subr.mxu0 0.0
    %1094 = vmatpush1.msra.mxu0 1.0
    %1095 = vmatprep.subr.mxu0 0.0
    %1096 = vmatpush1.msra.mxu0 1.0
    %1097 = vmatprep.subr.mxu0 0.0
    %1098 = vmatpush1.msra.mxu0 1.0
    %1099 = vmatprep.subr.mxu0 0.0
    %1100 = vmatpush1.msra.mxu0 1.0
    %1101 = vmatprep.subr.mxu0 0.0
    %1102 = vmatpush1.msra.mxu0 0.0
    %1103 = vmatprep.subr.mxu0 0.0
    %1104 = vmatpush1.msra.mxu0 0.0
    %1105 = vmatprep.subr.mxu0 0.0
    %1106 = vmatpush1.msra.mxu0 0.0
    %1107 = vmatprep.subr.mxu0 0.0
    %1108 = vmatpush1.msra.mxu0 0.0
    %1109 = vmatprep.subr.mxu0 0.0
    %1110 = vmatpush1.msra.mxu0 0.0
    %1111 = vmatprep.subr.mxu0 0.0
    %1112 = vmatpush1.msra.mxu0 0.0
    %1113 = vmatprep.subr.mxu0 0.0
    %1114 = vmatpush1.msra.mxu0 0.0
    %1115 = vmatprep.subr.mxu0 0.0
    %1116 = vmatpush1.msra.mxu0 0.0
    %1117 = vmatprep.subr.mxu0 0.0
    %1118 = vmatpush1.msra.mxu0 0.0
    %1119 = vmatprep.subr.mxu0 0.0
    %1120 = vmatpush1.msra.mxu0 0.0
    %1121 = vmatprep.subr.mxu0 0.0
    %1122 = vmatpush1.msra.mxu0 0.0
    %1123 = vmatprep.subr.mxu0 0.0
    %1124 = vmatpush1.msra.mxu0 0.0
    %1125 = vmatprep.subr.mxu0 0.0
    %1126 = vmatpush1.msra.mxu0 0.0
    %1127 = vmatprep.subr.mxu0 0.0
    %1128 = vmatpush1.msra.mxu0 0.0
    %1129 = vmatprep.subr.mxu0 0.0
    %1130 = vmatpush1.msra.mxu0 0.0
    %1131 = vmatprep.subr.mxu0 0.0
    %1132 = vmatpush1.msra.mxu0 0.0
    %1133 = vmatprep.subr.mxu0 0.0
    %1134 = vmatpush1.msra.mxu0 0.0
    %1135 = vmatprep.subr.mxu0 0.0
    %1136 = vmatpush1.msra.mxu0 0.0
    %1137 = vmatprep.subr.mxu0 0.0
    %1138 = vmatpush1.msra.mxu0 0.0
    %1139 = vmatprep.subr.mxu0 0.0
    %1140 = vmatpush1.msra.mxu0 0.0
    %1141 = vmatprep.subr.mxu0 0.0
    %1142 = vmatpush1.msra.mxu0 0.0
    %1143 = vmatprep.subr.mxu0 0.0
    %1144 = vmatpush1.msra.mxu0 0.0
    %1145 = vmatprep.subr.mxu0 0.0
    %1146 = vmatpush1.msra.mxu0 0.0
    %1147 = vmatprep.subr.mxu0 0.0
    %1148 = vmatpush1.msra.mxu0 0.0
    %1149 = vmatprep.subr.mxu0 0.0
    %1150 = vmatpush1.msra.mxu0 0.0
    %1151 = vmatprep.subr.mxu0 0.0
    %1152 = vmatpush1.msra.mxu0 0.0
    %1153 = vmatprep.subr.mxu0 0.0
    %1154 = vmatpush1.msra.mxu0 0.0
    %1155 = vmatprep.subr.mxu0 0.0
    %1156 = vmatpush1.msra.mxu0 0.0
    %1157 = vmatprep.mubr.f32.mxu0 0.0
    %1158 = vmatmul.mubr.f32.gmra.mrb[0].mxu0 %v1091
    %v1159 = vpop.f32.mrb[0].mxu0
    %v1160 = vadd.f32 0.0, %v1159
    %v1161 = vpop.f32.mrb[0].mxu0
    %1162 = vdwg.mxu0
    %v1163 = vmax.f32 %v1160, 1e-30
    %v1164 = vrsqrt.pop %v1163
    %v1165 = vmul.f32 %v1160, %v1164
    %v1166 = vmax.f32 %v1165, 1e-15
    %v1167 = vmin.f32 %v1166, 0.996
    %v1168 = vmax.f32 %v1167, -0.9999999
    %v1169 = vmin.f32 %v1168, 0.9999999
    %v1170 = vadd.f32 %v1169, 1.0
    %v1171 = vlog2.pop %v1170
    %v1172 = vmul.f32 %v1171, 0.6931472
    %v1173 = vmul.f32 -0.5, %v1169
    %v1174 = vadd.f32 %v1173, 1.0
    %v1175 = vmul.f32 %v1174, %v1169
    %v1176 = vand.u32 2147483647, %v1169
    %vm1177 = vcmp.lt.f32.partialorder %v1176, 0.0004427343
    %v1178 = vsel %vm1177, %v1175, %v1172
    %v1179 = vsub.f32 0.0, %v1169
    %v1180 = vadd.f32 %v1179, 1.0
    %v1181 = vlog2.pop %v1180
    %v1182 = vmul.f32 %v1181, 0.6931472
    %v1183 = vmul.f32 -0.5, %v1179
    %v1184 = vadd.f32 %v1183, 1.0
    %v1185 = vmul.f32 %v1184, %v1179
    %v1186 = vand.u32 2147483647, %v1179
    %vm1187 = vcmp.lt.f32.partialorder %v1186, 0.0004427343
    %v1188 = vsel %vm1187, %v1185, %v1182
    %v1189 = vsub.f32 %v1178, %v1188
    %v1190 = vmul.f32 %v1189, 0.5
    %v1191 = vmul.f32 %v1190, %v1164
    %1193 = vset.pattern.permute.xlu0 0
    %1194 = vperm.xlu0 %1193, %v1191
    %v1195 = vpop.permute.xlu0 %1194
    %v1197 = vmul.f32 %v1195, %v1088
    %v1198 = vpack.c.bf16 %v1197, %v1197
    %v1200 = vsel %vm564, %v1198, 0
    %1202 = vmatprep.subr.bf16.mxu0 0
    %1203 = vmatpush1.bf16.msra.mxu0 %v1200
    %1204 = vmatprep.subr.bf16.mxu0 0
    %1205 = vmatpush1.bf16.msra.mxu0 0
    %1206 = vmatprep.subr.bf16.mxu0 0
    %1207 = vmatpush1.bf16.msra.mxu0 0
    %1208 = vmatprep.subr.bf16.mxu0 0
    %1209 = vmatpush1.bf16.msra.mxu0 0
    %1210 = vmatprep.subr.bf16.mxu0 0
    %1211 = vmatpush1.bf16.msra.mxu0 0
    %1212 = vmatprep.subr.bf16.mxu0 0
    %1213 = vmatpush1.bf16.msra.mxu0 0
    %1214 = vmatprep.subr.bf16.mxu0 0
    %1215 = vmatpush1.bf16.msra.mxu0 0
    %1216 = vmatprep.subr.bf16.mxu0 0
    %1217 = vmatpush1.bf16.msra.mxu0 0
    %1218 = vmatprep.subr.bf16.mxu0 0
    %1219 = vmatpush1.bf16.msra.mxu0 0
    %1220 = vmatprep.subr.bf16.mxu0 0
    %1221 = vmatpush1.bf16.msra.mxu0 0
    %1222 = vmatprep.subr.bf16.mxu0 0
    %1223 = vmatpush1.bf16.msra.mxu0 0
    %1224 = vmatprep.subr.bf16.mxu0 0
    %1225 = vmatpush1.bf16.msra.mxu0 0
    %1226 = vmatprep.subr.bf16.mxu0 0
    %1227 = vmatpush1.bf16.msra.mxu0 0
    %1228 = vmatprep.subr.bf16.mxu0 0
    %1229 = vmatpush1.bf16.msra.mxu0 0
    %1230 = vmatprep.subr.bf16.mxu0 0
    %1231 = vmatpush1.bf16.msra.mxu0 0
    %1232 = vmatprep.subr.bf16.mxu0 0
    %1233 = vmatpush1.bf16.msra.mxu0 0
    %1234 = vmatprep.mubr.bf16.mxu0 0
    %1235 = vmatmul.mubr.bf16.gmra.mrb[0].mxu0 %v562
    %v1236 = vpop.f32.mrb[0].mxu0
    %v1237 = vadd.f32 0.0, %v1236
    %v1238 = vpop.f32.mrb[0].mxu0
    %v1239 = vpop.f32.mrb[0].mxu0
    %v1240 = vpop.f32.mrb[0].mxu0
    %1241 = vdwg.mxu0
    %v1242 = vmul.f32 %v1237, %v1237
    %v1244 = vsel %vm241, %v1242, 0
    %1246 = vmatprep.subr.mxu0 0.0
    %1247 = vmatpush1.msra.mxu0 1.0
    %1248 = vmatprep.subr.mxu0 0.0
    %1249 = vmatpush1.msra.mxu0 1.0
    %1250 = vmatprep.subr.mxu0 0.0
    %1251 = vmatpush1.msra.mxu0 1.0
    %1252 = vmatprep.subr.mxu0 0.0
    %1253 = vmatpush1.msra.mxu0 1.0
    %1254 = vmatprep.subr.mxu0 0.0
    %1255 = vmatpush1.msra.mxu0 0.0
    %1256 = vmatprep.subr.mxu0 0.0
    %1257 = vmatpush1.msra.mxu0 0.0
    %1258 = vmatprep.subr.mxu0 0.0
    %1259 = vmatpush1.msra.mxu0 0.0
    %1260 = vmatprep.subr.mxu0 0.0
    %1261 = vmatpush1.msra.mxu0 0.0
    %1262 = vmatprep.subr.mxu0 0.0
    %1263 = vmatpush1.msra.mxu0 0.0
    %1264 = vmatprep.subr.mxu0 0.0
    %1265 = vmatpush1.msra.mxu0 0.0
    %1266 = vmatprep.subr.mxu0 0.0
    %1267 = vmatpush1.msra.mxu0 0.0
    %1268 = vmatprep.subr.mxu0 0.0
    %1269 = vmatpush1.msra.mxu0 0.0
    %1270 = vmatprep.subr.mxu0 0.0
    %1271 = vmatpush1.msra.mxu0 0.0
    %1272 = vmatprep.subr.mxu0 0.0
    %1273 = vmatpush1.msra.mxu0 0.0
    %1274 = vmatprep.subr.mxu0 0.0
    %1275 = vmatpush1.msra.mxu0 0.0
    %1276 = vmatprep.subr.mxu0 0.0
    %1277 = vmatpush1.msra.mxu0 0.0
    %1278 = vmatprep.subr.mxu0 0.0
    %1279 = vmatpush1.msra.mxu0 0.0
    %1280 = vmatprep.subr.mxu0 0.0
    %1281 = vmatpush1.msra.mxu0 0.0
    %1282 = vmatprep.subr.mxu0 0.0
    %1283 = vmatpush1.msra.mxu0 0.0
    %1284 = vmatprep.subr.mxu0 0.0
    %1285 = vmatpush1.msra.mxu0 0.0
    %1286 = vmatprep.subr.mxu0 0.0
    %1287 = vmatpush1.msra.mxu0 0.0
    %1288 = vmatprep.subr.mxu0 0.0
    %1289 = vmatpush1.msra.mxu0 0.0
    %1290 = vmatprep.subr.mxu0 0.0
    %1291 = vmatpush1.msra.mxu0 0.0
    %1292 = vmatprep.subr.mxu0 0.0
    %1293 = vmatpush1.msra.mxu0 0.0
    %1294 = vmatprep.subr.mxu0 0.0
    %1295 = vmatpush1.msra.mxu0 0.0
    %1296 = vmatprep.subr.mxu0 0.0
    %1297 = vmatpush1.msra.mxu0 0.0
    %1298 = vmatprep.subr.mxu0 0.0
    %1299 = vmatpush1.msra.mxu0 0.0
    %1300 = vmatprep.subr.mxu0 0.0
    %1301 = vmatpush1.msra.mxu0 0.0
    %1302 = vmatprep.subr.mxu0 0.0
    %1303 = vmatpush1.msra.mxu0 0.0
    %1304 = vmatprep.subr.mxu0 0.0
    %1305 = vmatpush1.msra.mxu0 0.0
    %1306 = vmatprep.subr.mxu0 0.0
    %1307 = vmatpush1.msra.mxu0 0.0
    %1308 = vmatprep.subr.mxu0 0.0
    %1309 = vmatpush1.msra.mxu0 0.0
    %1310 = vmatprep.mubr.f32.mxu0 0.0
    %1311 = vmatmul.mubr.f32.gmra.mrb[0].mxu0 %v1244
    %v1312 = vpop.f32.mrb[0].mxu0
    %v1313 = vadd.f32 0.0, %v1312
    %v1314 = vpop.f32.mrb[0].mxu0
    %1315 = vdwg.mxu0
    %v1316 = vmax.f32 %v1313, 1e-30
    %v1317 = vrsqrt.pop %v1316
    %v1318 = vmul.f32 %v1313, %v1317
    %v1319 = vmax.f32 %v1318, 1e-15
    %vm1320 = vcmp.gt.f32.partialorder %v1319, 3.106303
    %v1321 = vmul.f32 %v1317, 3.106303
    %v1322 = vsel %vm1320, %v1321, 1.0
    %1324 = vset.pattern.permute.xlu0 0
    %1325 = vperm.xlu0 %1324, %v1322
    %v1326 = vpop.permute.xlu0 %1325
    %v1328 = vmul.f32 %v1326, %v1237
    %v1329 = vmax.f32 %v1328, 0.0
    %v1330 = vmul.f32 %v1329, %v1329
    %v1332 = vsel %vm241, %v1330, 0
    %1334 = vmatprep.subr.mxu0 0.0
    %1335 = vmatpush1.msra.mxu0 1.0
    %1336 = vmatprep.subr.mxu0 0.0
    %1337 = vmatpush1.msra.mxu0 1.0
    %1338 = vmatprep.subr.mxu0 0.0
    %1339 = vmatpush1.msra.mxu0 1.0
    %1340 = vmatprep.subr.mxu0 0.0
    %1341 = vmatpush1.msra.mxu0 1.0
    %1342 = vmatprep.subr.mxu0 0.0
    %1343 = vmatpush1.msra.mxu0 0.0
    %1344 = vmatprep.subr.mxu0 0.0
    %1345 = vmatpush1.msra.mxu0 0.0
    %1346 = vmatprep.subr.mxu0 0.0
    %1347 = vmatpush1.msra.mxu0 0.0
    %1348 = vmatprep.subr.mxu0 0.0
    %1349 = vmatpush1.msra.mxu0 0.0
    %1350 = vmatprep.subr.mxu0 0.0
    %1351 = vmatpush1.msra.mxu0 0.0
    %1352 = vmatprep.subr.mxu0 0.0
    %1353 = vmatpush1.msra.mxu0 0.0
    %1354 = vmatprep.subr.mxu0 0.0
    %1355 = vmatpush1.msra.mxu0 0.0
    %1356 = vmatprep.subr.mxu0 0.0
    %1357 = vmatpush1.msra.mxu0 0.0
    %1358 = vmatprep.subr.mxu0 0.0
    %1359 = vmatpush1.msra.mxu0 0.0
    %1360 = vmatprep.subr.mxu0 0.0
    %1361 = vmatpush1.msra.mxu0 0.0
    %1362 = vmatprep.subr.mxu0 0.0
    %1363 = vmatpush1.msra.mxu0 0.0
    %1364 = vmatprep.subr.mxu0 0.0
    %1365 = vmatpush1.msra.mxu0 0.0
    %1366 = vmatprep.subr.mxu0 0.0
    %1367 = vmatpush1.msra.mxu0 0.0
    %1368 = vmatprep.subr.mxu0 0.0
    %1369 = vmatpush1.msra.mxu0 0.0
    %1370 = vmatprep.subr.mxu0 0.0
    %1371 = vmatpush1.msra.mxu0 0.0
    %1372 = vmatprep.subr.mxu0 0.0
    %1373 = vmatpush1.msra.mxu0 0.0
    %1374 = vmatprep.subr.mxu0 0.0
    %1375 = vmatpush1.msra.mxu0 0.0
    %1376 = vmatprep.subr.mxu0 0.0
    %1377 = vmatpush1.msra.mxu0 0.0
    %1378 = vmatprep.subr.mxu0 0.0
    %1379 = vmatpush1.msra.mxu0 0.0
    %1380 = vmatprep.subr.mxu0 0.0
    %1381 = vmatpush1.msra.mxu0 0.0
    %1382 = vmatprep.subr.mxu0 0.0
    %1383 = vmatpush1.msra.mxu0 0.0
    %1384 = vmatprep.subr.mxu0 0.0
    %1385 = vmatpush1.msra.mxu0 0.0
    %1386 = vmatprep.subr.mxu0 0.0
    %1387 = vmatpush1.msra.mxu0 0.0
    %1388 = vmatprep.subr.mxu0 0.0
    %1389 = vmatpush1.msra.mxu0 0.0
    %1390 = vmatprep.subr.mxu0 0.0
    %1391 = vmatpush1.msra.mxu0 0.0
    %1392 = vmatprep.subr.mxu0 0.0
    %1393 = vmatpush1.msra.mxu0 0.0
    %1394 = vmatprep.subr.mxu0 0.0
    %1395 = vmatpush1.msra.mxu0 0.0
    %1396 = vmatprep.subr.mxu0 0.0
    %1397 = vmatpush1.msra.mxu0 0.0
    %1398 = vmatprep.mubr.f32.mxu0 0.0
    %1399 = vmatmul.mubr.f32.gmra.mrb[0].mxu0 %v1332
    %v1400 = vpop.f32.mrb[0].mxu0
    %v1401 = vadd.f32 0.0, %v1400
    %v1402 = vpop.f32.mrb[0].mxu0
    %1403 = vdwg.mxu0
    %v1404 = vmax.f32 %v1401, 1e-30
    %v1405 = vrsqrt.pop %v1404
    %v1406 = vmul.f32 %v1401, %v1405
    %v1407 = vmax.f32 %v1406, 1e-15
    %vm1408 = vcmp.gt.f32.partialorder %v1407, 3.106303
    %v1409 = vmul.f32 %v1405, 3.106303
    %v1410 = vsel %vm1408, %v1409, 1.0
    %1412 = vset.pattern.permute.xlu0 0
    %1413 = vperm.xlu0 %1412, %v1410
    %v1414 = vpop.permute.xlu0 %1413
    %v1416 = vmul.f32 %v1414, %v1329
    %v1417 = vtanh.pop %v1407
    %v1418 = vmin.f32 %v1417, 0.996
    %v1419 = vmul.f32 %v1418, %v1405
    %1421 = vset.pattern.permute.xlu0 0
    %1422 = vperm.xlu0 %1421, %v1419
    %v1423 = vpop.permute.xlu0 %1422
    %v1425 = vmul.f32 %v1423, %v1329
    %v1426 = vmul.f32 %v1418, %v1418
    %v1427 = vld [vmem:[%s10] sm:$0xff]
    %v1428 = vld [vmem:[%s10 + $0x8] sm:$0xff]
    %v1429 = vld [vmem:[%s10 + $0x10] sm:$0xff]
    %v1430 = vld [vmem:[%s10 + $0x18] sm:$0xff]
    %v1431 = vld [vmem:[%s11] sm:$0x1]
    %v1432 = vld [vmem:[%s12] sm:$0xff]
    %v1433 = vld [vmem:[%s12 + $0x8] sm:$0xff]
    %v1434 = vld [vmem:[%s12 + $0x10] sm:$0xff]
    %v1435 = vld [vmem:[%s12 + $0x18] sm:$0xff]
    %s1436 = sld [smem:[#allocation2 + $0x2]]
    %v1437 = vmax.f32 %v1426, 1e-30
    %v1438 = vrsqrt.pop %v1437
    %v1439 = vmul.f32 %v1426, %v1438
    %v1440 = vmax.f32 %v1439, 1e-15
    %v1442 = vsel %vm241, %v1425, 0
    %1444 = vmatprep.subr.mxu0 0.0
    %1445 = vmatpush1.msra.mxu0 %v1427
    %1446 = vmatprep.subr.mxu0 0.0
    %1447 = vmatpush1.msra.mxu0 %v1428
    %1448 = vmatprep.subr.mxu0 0.0
    %1449 = vmatpush1.msra.mxu0 %v1429
    %1450 = vmatprep.subr.mxu0 0.0
    %1451 = vmatpush1.msra.mxu0 %v1430
    %1452 = vmatprep.subr.mxu0 0.0
    %1453 = vmatpush1.msra.mxu0 0.0
    %1454 = vmatprep.subr.mxu0 0.0
    %1455 = vmatpush1.msra.mxu0 0.0
    %1456 = vmatprep.subr.mxu0 0.0
    %1457 = vmatpush1.msra.mxu0 0.0
    %1458 = vmatprep.subr.mxu0 0.0
    %1459 = vmatpush1.msra.mxu0 0.0
    %1460 = vmatprep.subr.mxu0 0.0
    %1461 = vmatpush1.msra.mxu0 0.0
    %1462 = vmatprep.subr.mxu0 0.0
    %1463 = vmatpush1.msra.mxu0 0.0
    %1464 = vmatprep.subr.mxu0 0.0
    %1465 = vmatpush1.msra.mxu0 0.0
    %1466 = vmatprep.subr.mxu0 0.0
    %1467 = vmatpush1.msra.mxu0 0.0
    %1468 = vmatprep.subr.mxu0 0.0
    %1469 = vmatpush1.msra.mxu0 0.0
    %1470 = vmatprep.subr.mxu0 0.0
    %1471 = vmatpush1.msra.mxu0 0.0
    %1472 = vmatprep.subr.mxu0 0.0
    %1473 = vmatpush1.msra.mxu0 0.0
    %1474 = vmatprep.subr.mxu0 0.0
    %1475 = vmatpush1.msra.mxu0 0.0
    %1476 = vmatprep.subr.mxu0 0.0
    %1477 = vmatpush1.msra.mxu0 0.0
    %1478 = vmatprep.subr.mxu0 0.0
    %1479 = vmatpush1.msra.mxu0 0.0
    %1480 = vmatprep.subr.mxu0 0.0
    %1481 = vmatpush1.msra.mxu0 0.0
    %1482 = vmatprep.subr.mxu0 0.0
    %1483 = vmatpush1.msra.mxu0 0.0
    %1484 = vmatprep.subr.mxu0 0.0
    %1485 = vmatpush1.msra.mxu0 0.0
    %1486 = vmatprep.subr.mxu0 0.0
    %1487 = vmatpush1.msra.mxu0 0.0
    %1488 = vmatprep.subr.mxu0 0.0
    %1489 = vmatpush1.msra.mxu0 0.0
    %1490 = vmatprep.subr.mxu0 0.0
    %1491 = vmatpush1.msra.mxu0 0.0
    %1492 = vmatprep.subr.mxu0 0.0
    %1493 = vmatpush1.msra.mxu0 0.0
    %1494 = vmatprep.subr.mxu0 0.0
    %1495 = vmatpush1.msra.mxu0 0.0
    %1496 = vmatprep.subr.mxu0 0.0
    %1497 = vmatpush1.msra.mxu0 0.0
    %1498 = vmatprep.subr.mxu0 0.0
    %1499 = vmatpush1.msra.mxu0 0.0
    %1500 = vmatprep.subr.mxu0 0.0
    %1501 = vmatpush1.msra.mxu0 0.0
    %1502 = vmatprep.subr.mxu0 0.0
    %1503 = vmatpush1.msra.mxu0 0.0
    %1504 = vmatprep.subr.mxu0 0.0
    %1505 = vmatpush1.msra.mxu0 0.0
    %1506 = vmatprep.subr.mxu0 0.0
    %1507 = vmatpush1.msra.mxu0 0.0
    %1508 = vmatprep.mubr.f32.mxu0 0.0
    %1509 = vmatmul.mubr.f32.gmra.mrb[0].mxu0 %v1442
    %v1510 = vpop.f32.mrb[0].mxu0
    %v1511 = vadd.f32 0.0, %v1510
    %v1512 = vpop.f32.mrb[0].mxu0
    %1513 = vdwg.mxu0
    %v1514 = vmul.f32 %v1511, %v1511
    %v1516 = vsel %vm241, %v1514, 0
    %1518 = vmatprep.subr.mxu0 0.0
    %1519 = vmatpush1.msra.mxu0 1.0
    %1520 = vmatprep.subr.mxu0 0.0
    %1521 = vmatpush1.msra.mxu0 1.0
    %1522 = vmatprep.subr.mxu0 0.0
    %1523 = vmatpush1.msra.mxu0 1.0
    %1524 = vmatprep.subr.mxu0 0.0
    %1525 = vmatpush1.msra.mxu0 1.0
    %1526 = vmatprep.subr.mxu0 0.0
    %1527 = vmatpush1.msra.mxu0 0.0
    %1528 = vmatprep.subr.mxu0 0.0
    %1529 = vmatpush1.msra.mxu0 0.0
    %1530 = vmatprep.subr.mxu0 0.0
    %1531 = vmatpush1.msra.mxu0 0.0
    %1532 = vmatprep.subr.mxu0 0.0
    %1533 = vmatpush1.msra.mxu0 0.0
    %1534 = vmatprep.subr.mxu0 0.0
    %1535 = vmatpush1.msra.mxu0 0.0
    %1536 = vmatprep.subr.mxu0 0.0
    %1537 = vmatpush1.msra.mxu0 0.0
    %1538 = vmatprep.subr.mxu0 0.0
    %1539 = vmatpush1.msra.mxu0 0.0
    %1540 = vmatprep.subr.mxu0 0.0
    %1541 = vmatpush1.msra.mxu0 0.0
    %1542 = vmatprep.subr.mxu0 0.0
    %1543 = vmatpush1.msra.mxu0 0.0
    %1544 = vmatprep.subr.mxu0 0.0
    %1545 = vmatpush1.msra.mxu0 0.0
    %1546 = vmatprep.subr.mxu0 0.0
    %1547 = vmatpush1.msra.mxu0 0.0
    %1548 = vmatprep.subr.mxu0 0.0
    %1549 = vmatpush1.msra.mxu0 0.0
    %1550 = vmatprep.subr.mxu0 0.0
    %1551 = vmatpush1.msra.mxu0 0.0
    %1552 = vmatprep.subr.mxu0 0.0
    %1553 = vmatpush1.msra.mxu0 0.0
    %1554 = vmatprep.subr.mxu0 0.0
    %1555 = vmatpush1.msra.mxu0 0.0
    %1556 = vmatprep.subr.mxu0 0.0
    %1557 = vmatpush1.msra.mxu0 0.0
    %1558 = vmatprep.subr.mxu0 0.0
    %1559 = vmatpush1.msra.mxu0 0.0
    %1560 = vmatprep.subr.mxu0 0.0
    %1561 = vmatpush1.msra.mxu0 0.0
    %1562 = vmatprep.subr.mxu0 0.0
    %1563 = vmatpush1.msra.mxu0 0.0
    %1564 = vmatprep.subr.mxu0 0.0
    %1565 = vmatpush1.msra.mxu0 0.0
    %1566 = vmatprep.subr.mxu0 0.0
    %1567 = vmatpush1.msra.mxu0 0.0
    %1568 = vmatprep.subr.mxu0 0.0
    %1569 = vmatpush1.msra.mxu0 0.0
    %1570 = vmatprep.subr.mxu0 0.0
    %1571 = vmatpush1.msra.mxu0 0.0
    %1572 = vmatprep.subr.mxu0 0.0
    %1573 = vmatpush1.msra.mxu0 0.0
    %1574 = vmatprep.subr.mxu0 0.0
    %1575 = vmatpush1.msra.mxu0 0.0
    %1576 = vmatprep.subr.mxu0 0.0
    %1577 = vmatpush1.msra.mxu0 0.0
    %1578 = vmatprep.subr.mxu0 0.0
    %1579 = vmatpush1.msra.mxu0 0.0
    %1580 = vmatprep.subr.mxu0 0.0
    %1581 = vmatpush1.msra.mxu0 0.0
    %1582 = vmatprep.mubr.f32.mxu0 0.0
    %1583 = vmatmul.mubr.f32.gmra.mrb[0].mxu0 %v1516
    %v1584 = vpop.f32.mrb[0].mxu0
    %v1585 = vadd.f32 0.0, %v1584
    %v1586 = vpop.f32.mrb[0].mxu0
    %1587 = vdwg.mxu0
    %v1588 = vmax.f32 %v1585, 1e-30
    %v1589 = vrsqrt.pop %v1588
    %v1590 = vmul.f32 %v1585, %v1589
    %v1591 = vmax.f32 %v1590, 1e-15
    %v1592 = vmul.f32 %v1591, %v1438
    %v1593 = vmax.f32 %v1440, -0.9999999
    %v1594 = vmin.f32 %v1593, 0.9999999
    %v1595 = vadd.f32 %v1594, 1.0
    %v1596 = vlog2.pop %v1595
    %v1597 = vmul.f32 %v1596, 0.6931472
    %v1598 = vmul.f32 -0.5, %v1594
    %v1599 = vadd.f32 %v1598, 1.0
    %v1600 = vmul.f32 %v1599, %v1594
    %v1601 = vand.u32 2147483647, %v1594
    %vm1602 = vcmp.lt.f32.partialorder %v1601, 0.0004427343
    %v1603 = vsel %vm1602, %v1600, %v1597
    %v1604 = vsub.f32 0.0, %v1594
    %v1605 = vadd.f32 %v1604, 1.0
    %v1606 = vlog2.pop %v1605
    %v1607 = vmul.f32 %v1606, 0.6931472
    %v1608 = vmul.f32 -0.5, %v1604
    %v1609 = vadd.f32 %v1608, 1.0
    %v1610 = vmul.f32 %v1609, %v1604
    %v1611 = vand.u32 2147483647, %v1604
    %vm1612 = vcmp.lt.f32.partialorder %v1611, 0.0004427343
    %v1613 = vsel %vm1612, %v1610, %v1607
    %v1614 = vsub.f32 %v1603, %v1613
    %v1615 = vmul.f32 %v1614, 0.5
    %v1616 = vmul.f32 %v1592, %v1615
    %v1617 = vtanh.pop %v1616
    %v1618 = vmin.f32 %v1617, 0.996
    %v1619 = vmul.f32 %v1618, %v1589
    %v1620 = vmul.f32 %v1618, %v1618
    %1621 = vmatprep.subr.mxu0 0.0
    %1622 = vmatpush1.msra.mxu0 %v1432
    %1623 = vmatprep.subr.mxu0 0.0
    %1624 = vmatpush1.msra.mxu0 %v1433
    %1625 = vmatprep.subr.mxu0 0.0
    %1626 = vmatpush1.msra.mxu0 %v1434
    %1627 = vmatprep.subr.mxu0 0.0
    %1628 = vmatpush1.msra.mxu0 %v1435
    %1629 = vmatprep.subr.mxu0 0.0
    %1630 = vmatpush1.msra.mxu0 0.0
    %1631 = vmatprep.subr.mxu0 0.0
    %1632 = vmatpush1.msra.mxu0 0.0
    %1633 = vmatprep.subr.mxu0 0.0
    %1634 = vmatpush1.msra.mxu0 0.0
    %1635 = vmatprep.subr.mxu0 0.0
    %1636 = vmatpush1.msra.mxu0 0.0
    %1637 = vmatprep.subr.mxu0 0.0
    %1638 = vmatpush1.msra.mxu0 0.0
    %1639 = vmatprep.subr.mxu0 0.0
    %1640 = vmatpush1.msra.mxu0 0.0
    %1641 = vmatprep.subr.mxu0 0.0
    %1642 = vmatpush1.msra.mxu0 0.0
    %1643 = vmatprep.subr.mxu0 0.0
    %1644 = vmatpush1.msra.mxu0 0.0
    %1645 = vmatprep.subr.mxu0 0.0
    %1646 = vmatpush1.msra.mxu0 0.0
    %1647 = vmatprep.subr.mxu0 0.0
    %1648 = vmatpush1.msra.mxu0 0.0
    %1649 = vmatprep.subr.mxu0 0.0
    %1650 = vmatpush1.msra.mxu0 0.0
    %1651 = vmatprep.subr.mxu0 0.0
    %1652 = vmatpush1.msra.mxu0 0.0
    %1653 = vmatprep.subr.mxu0 0.0
    %1654 = vmatpush1.msra.mxu0 0.0
    %1655 = vmatprep.subr.mxu0 0.0
    %1656 = vmatpush1.msra.mxu0 0.0
    %1657 = vmatprep.subr.mxu0 0.0
    %1658 = vmatpush1.msra.mxu0 0.0
    %1659 = vmatprep.subr.mxu0 0.0
    %1660 = vmatpush1.msra.mxu0 0.0
    %1661 = vmatprep.subr.mxu0 0.0
    %1662 = vmatpush1.msra.mxu0 0.0
    %1663 = vmatprep.subr.mxu0 0.0
    %1664 = vmatpush1.msra.mxu0 0.0
    %1665 = vmatprep.subr.mxu0 0.0
    %1666 = vmatpush1.msra.mxu0 0.0
    %1667 = vmatprep.subr.mxu0 0.0
    %1668 = vmatpush1.msra.mxu0 0.0
    %1669 = vmatprep.subr.mxu0 0.0
    %1670 = vmatpush1.msra.mxu0 0.0
    %1671 = vmatprep.subr.mxu0 0.0
    %1672 = vmatpush1.msra.mxu0 0.0
    %1673 = vmatprep.subr.mxu0 0.0
    %1674 = vmatpush1.msra.mxu0 0.0
    %1675 = vmatprep.subr.mxu0 0.0
    %1676 = vmatpush1.msra.mxu0 0.0
    %1677 = vmatprep.subr.mxu0 0.0
    %1678 = vmatpush1.msra.mxu0 0.0
    %1679 = vmatprep.subr.mxu0 0.0
    %1680 = vmatpush1.msra.mxu0 0.0
    %1681 = vmatprep.subr.mxu0 0.0
    %1682 = vmatpush1.msra.mxu0 0.0
    %1683 = vmatprep.subr.mxu0 0.0
    %1684 = vmatpush1.msra.mxu0 0.0
    %1685 = vmatprep.mubr.f32.mxu0 0.0
    %1686 = vmatmul.mubr.f32.gmra.mrb[0].mxu0 %v1442
    %v1687 = vpop.f32.mrb[0].mxu0
    %v1688 = vadd.f32 0.0, %v1687
    %v1689 = vpop.f32.mrb[0].mxu0
    %1690 = vdwg.mxu0
    %v1691 = vmul.f32 %v1619, %v1688
    %v1692 = vmul.f32 %v1691, 2.0
    %v1693 = vadd.f32 %v1692, 1.0
    %v1694 = vstv %s1436
    %v1695 = vmul.f32 %v1694, %v1620
    %v1696 = vadd.f32 %v1693, %v1695
    %v1697 = vmax.f32 %v1696, 1e-15
    %v1698 = vrcp.pop %v1697
    %v1699 = vadd.f32 %v1693, %v1694
    %v1700 = vmul.f32 %v1619, %v1698
    %v1701 = vmul.f32 %v1699, %v1700
    %1703 = vset.pattern.permute.xlu0 0
    %1704 = vperm.xlu0 %1703, %v1701
    %v1705 = vpop.permute.xlu0 %1704
    %v1707 = vmul.f32 %v1705, %v1511
    %v1708 = vsub.f32 1.0, %v1620
    %v1709 = vmul.f32 %v1708, %v1698
    %1711 = vset.pattern.permute.xlu0 0
    %1712 = vperm.xlu0 %1711, %v1709
    %v1713 = vpop.permute.xlu0 %1712
    %v1716 = vlaneseq
    %v1717 = vshrl.u32 %v1716, 7
    %v1718 = vsub.s32 0, %v1717
    %v1719 = vrot.slane %v1431, %v1718
    %v1721 = vmul.f32 %v1713, %v1719
    %v1722 = vadd.f32 %v1707, %v1721
    %v1723 = vmul.f32 %v1722, %v1722
    %v1725 = vsel %vm241, %v1723, 0
    %1727 = vmatprep.subr.mxu0 0.0
    %1728 = vmatpush1.msra.mxu0 1.0
    %1729 = vmatprep.subr.mxu0 0.0
    %1730 = vmatpush1.msra.mxu0 1.0
    %1731 = vmatprep.subr.mxu0 0.0
    %1732 = vmatpush1.msra.mxu0 1.0
    %1733 = vmatprep.subr.mxu0 0.0
    %1734 = vmatpush1.msra.mxu0 1.0
    %1735 = vmatprep.subr.mxu0 0.0
    %1736 = vmatpush1.msra.mxu0 0.0
    %1737 = vmatprep.subr.mxu0 0.0
    %1738 = vmatpush1.msra.mxu0 0.0
    %1739 = vmatprep.subr.mxu0 0.0
    %1740 = vmatpush1.msra.mxu0 0.0
    %1741 = vmatprep.subr.mxu0 0.0
    %1742 = vmatpush1.msra.mxu0 0.0
    %1743 = vmatprep.subr.mxu0 0.0
    %1744 = vmatpush1.msra.mxu0 0.0
    %1745 = vmatprep.subr.mxu0 0.0
    %1746 = vmatpush1.msra.mxu0 0.0
    %1747 = vmatprep.subr.mxu0 0.0
    %1748 = vmatpush1.msra.mxu0 0.0
    %1749 = vmatprep.subr.mxu0 0.0
    %1750 = vmatpush1.msra.mxu0 0.0
    %1751 = vmatprep.subr.mxu0 0.0
    %1752 = vmatpush1.msra.mxu0 0.0
    %1753 = vmatprep.subr.mxu0 0.0
    %1754 = vmatpush1.msra.mxu0 0.0
    %1755 = vmatprep.subr.mxu0 0.0
    %1756 = vmatpush1.msra.mxu0 0.0
    %1757 = vmatprep.subr.mxu0 0.0
    %1758 = vmatpush1.msra.mxu0 0.0
    %1759 = vmatprep.subr.mxu0 0.0
    %1760 = vmatpush1.msra.mxu0 0.0
    %1761 = vmatprep.subr.mxu0 0.0
    %1762 = vmatpush1.msra.mxu0 0.0
    %1763 = vmatprep.subr.mxu0 0.0
    %1764 = vmatpush1.msra.mxu0 0.0
    %1765 = vmatprep.subr.mxu0 0.0
    %1766 = vmatpush1.msra.mxu0 0.0
    %1767 = vmatprep.subr.mxu0 0.0
    %1768 = vmatpush1.msra.mxu0 0.0
    %1769 = vmatprep.subr.mxu0 0.0
    %1770 = vmatpush1.msra.mxu0 0.0
    %1771 = vmatprep.subr.mxu0 0.0
    %1772 = vmatpush1.msra.mxu0 0.0
    %1773 = vmatprep.subr.mxu0 0.0
    %1774 = vmatpush1.msra.mxu0 0.0
    %1775 = vmatprep.subr.mxu0 0.0
    %1776 = vmatpush1.msra.mxu0 0.0
    %1777 = vmatprep.subr.mxu0 0.0
    %1778 = vmatpush1.msra.mxu0 0.0
    %1779 = vmatprep.subr.mxu0 0.0
    %1780 = vmatpush1.msra.mxu0 0.0
    %1781 = vmatprep.subr.mxu0 0.0
    %1782 = vmatpush1.msra.mxu0 0.0
    %1783 = vmatprep.subr.mxu0 0.0
    %1784 = vmatpush1.msra.mxu0 0.0
    %1785 = vmatprep.subr.mxu0 0.0
    %1786 = vmatpush1.msra.mxu0 0.0
    %1787 = vmatprep.subr.mxu0 0.0
    %1788 = vmatpush1.msra.mxu0 0.0
    %1789 = vmatprep.subr.mxu0 0.0
    %1790 = vmatpush1.msra.mxu0 0.0
    %1791 = vmatprep.mubr.f32.mxu0 0.0
    %1792 = vmatmul.mubr.f32.gmra.mrb[0].mxu0 %v1725
    %v1793 = vpop.f32.mrb[0].mxu0
    %v1794 = vadd.f32 0.0, %v1793
    %v1795 = vpop.f32.mrb[0].mxu0
    %1796 = vdwg.mxu0
    %v1797 = vmax.f32 %v1794, 1e-30
    %v1798 = vrsqrt.pop %v1797
    %v1799 = vmul.f32 %v1794, %v1798
    %v1800 = vmax.f32 %v1799, 1e-15
    %v1801 = vmin.f32 %v1800, 0.996
    %v1802 = vmax.f32 %v1801, -0.9999999
    %v1803 = vmin.f32 %v1802, 0.9999999
    %v1804 = vadd.f32 %v1803, 1.0
    %v1805 = vlog2.pop %v1804
    %v1806 = vmul.f32 %v1805, 0.6931472
    %v1807 = vmul.f32 -0.5, %v1803
    %v1808 = vadd.f32 %v1807, 1.0
    %v1809 = vmul.f32 %v1808, %v1803
    %v1810 = vand.u32 2147483647, %v1803
    %vm1811 = vcmp.lt.f32.partialorder %v1810, 0.0004427343
    %v1812 = vsel %vm1811, %v1809, %v1806
    %v1813 = vsub.f32 0.0, %v1803
    %v1814 = vadd.f32 %v1813, 1.0
    %v1815 = vlog2.pop %v1814
    %v1816 = vmul.f32 %v1815, 0.6931472
    %v1817 = vmul.f32 -0.5, %v1813
    %v1818 = vadd.f32 %v1817, 1.0
    %v1819 = vmul.f32 %v1818, %v1813
    %v1820 = vand.u32 2147483647, %v1813
    %vm1821 = vcmp.lt.f32.partialorder %v1820, 0.0004427343
    %v1822 = vsel %vm1821, %v1819, %v1816
    %v1823 = vsub.f32 %v1812, %v1822
    %v1824 = vmul.f32 %v1823, 0.5
    %v1825 = vmul.f32 %v1824, %v1798
    %1827 = vset.pattern.permute.xlu0 0
    %1828 = vperm.xlu0 %1827, %v1825
    %v1829 = vpop.permute.xlu0 %1828
    %v1831 = vmul.f32 %v1829, %v1722
    %v1832 = vpack.c.bf16 %v1831, %v1831
    %v1834 = vsel %vm564, %v1832, 0
    %1836 = vmatprep.subr.bf16.mxu0 0
    %1837 = vmatpush1.bf16.msra.mxu0 %v1834
    %1838 = vmatprep.subr.bf16.mxu0 0
    %1839 = vmatpush1.bf16.msra.mxu0 0
    %1840 = vmatprep.subr.bf16.mxu0 0
    %1841 = vmatpush1.bf16.msra.mxu0 0
    %1842 = vmatprep.subr.bf16.mxu0 0
    %1843 = vmatpush1.bf16.msra.mxu0 0
    %1844 = vmatprep.subr.bf16.mxu0 0
    %1845 = vmatpush1.bf16.msra.mxu0 0
    %1846 = vmatprep.subr.bf16.mxu0 0
    %1847 = vmatpush1.bf16.msra.mxu0 0
    %1848 = vmatprep.subr.bf16.mxu0 0
    %1849 = vmatpush1.bf16.msra.mxu0 0
    %1850 = vmatprep.subr.bf16.mxu0 0
    %1851 = vmatpush1.bf16.msra.mxu0 0
    %1852 = vmatprep.subr.bf16.mxu0 0
    %1853 = vmatpush1.bf16.msra.mxu0 0
    %1854 = vmatprep.subr.bf16.mxu0 0
    %1855 = vmatpush1.bf16.msra.mxu0 0
    %1856 = vmatprep.subr.bf16.mxu0 0
    %1857 = vmatpush1.bf16.msra.mxu0 0
    %1858 = vmatprep.subr.bf16.mxu0 0
    %1859 = vmatpush1.bf16.msra.mxu0 0
    %1860 = vmatprep.subr.bf16.mxu0 0
    %1861 = vmatpush1.bf16.msra.mxu0 0
    %1862 = vmatprep.subr.bf16.mxu0 0
    %1863 = vmatpush1.bf16.msra.mxu0 0
    %1864 = vmatprep.subr.bf16.mxu0 0
    %1865 = vmatpush1.bf16.msra.mxu0 0
    %1866 = vmatprep.subr.bf16.mxu0 0
    %1867 = vmatpush1.bf16.msra.mxu0 0
    %1868 = vmatprep.mubr.bf16.mxu0 0
    %1869 = vmatmul.mubr.bf16.gmra.mrb[0].mxu0 %v562
    %v1870 = vpop.f32.mrb[0].mxu0
    %v1871 = vadd.f32 0.0, %v1870
    %v1872 = vpop.f32.mrb[0].mxu0
    %v1873 = vpop.f32.mrb[0].mxu0
    %v1874 = vpop.f32.mrb[0].mxu0
    %1875 = vdwg.mxu0
    %v1876 = vmul.f32 %v1871, %v1871
    %v1878 = vsel %vm241, %v1876, 0
    %1880 = vmatprep.subr.mxu0 0.0
    %1881 = vmatpush1.msra.mxu0 1.0
    %1882 = vmatprep.subr.mxu0 0.0
    %1883 = vmatpush1.msra.mxu0 1.0
    %1884 = vmatprep.subr.mxu0 0.0
    %1885 = vmatpush1.msra.mxu0 1.0
    %1886 = vmatprep.subr.mxu0 0.0
    %1887 = vmatpush1.msra.mxu0 1.0
    %1888 = vmatprep.subr.mxu0 0.0
    %1889 = vmatpush1.msra.mxu0 0.0
    %1890 = vmatprep.subr.mxu0 0.0
    %1891 = vmatpush1.msra.mxu0 0.0
    %1892 = vmatprep.subr.mxu0 0.0
    %1893 = vmatpush1.msra.mxu0 0.0
    %1894 = vmatprep.subr.mxu0 0.0
    %1895 = vmatpush1.msra.mxu0 0.0
    %1896 = vmatprep.subr.mxu0 0.0
    %1897 = vmatpush1.msra.mxu0 0.0
    %1898 = vmatprep.subr.mxu0 0.0
    %1899 = vmatpush1.msra.mxu0 0.0
    %1900 = vmatprep.subr.mxu0 0.0
    %1901 = vmatpush1.msra.mxu0 0.0
    %1902 = vmatprep.subr.mxu0 0.0
    %1903 = vmatpush1.msra.mxu0 0.0
    %1904 = vmatprep.subr.mxu0 0.0
    %1905 = vmatpush1.msra.mxu0 0.0
    %1906 = vmatprep.subr.mxu0 0.0
    %1907 = vmatpush1.msra.mxu0 0.0
    %1908 = vmatprep.subr.mxu0 0.0
    %1909 = vmatpush1.msra.mxu0 0.0
    %1910 = vmatprep.subr.mxu0 0.0
    %1911 = vmatpush1.msra.mxu0 0.0
    %1912 = vmatprep.subr.mxu0 0.0
    %1913 = vmatpush1.msra.mxu0 0.0
    %1914 = vmatprep.subr.mxu0 0.0
    %1915 = vmatpush1.msra.mxu0 0.0
    %1916 = vmatprep.subr.mxu0 0.0
    %1917 = vmatpush1.msra.mxu0 0.0
    %1918 = vmatprep.subr.mxu0 0.0
    %1919 = vmatpush1.msra.mxu0 0.0
    %1920 = vmatprep.subr.mxu0 0.0
    %1921 = vmatpush1.msra.mxu0 0.0
    %1922 = vmatprep.subr.mxu0 0.0
    %1923 = vmatpush1.msra.mxu0 0.0
    %1924 = vmatprep.subr.mxu0 0.0
    %1925 = vmatpush1.msra.mxu0 0.0
    %1926 = vmatprep.subr.mxu0 0.0
    %1927 = vmatpush1.msra.mxu0 0.0
    %1928 = vmatprep.subr.mxu0 0.0
    %1929 = vmatpush1.msra.mxu0 0.0
    %1930 = vmatprep.subr.mxu0 0.0
    %1931 = vmatpush1.msra.mxu0 0.0
    %1932 = vmatprep.subr.mxu0 0.0
    %1933 = vmatpush1.msra.mxu0 0.0
    %1934 = vmatprep.subr.mxu0 0.0
    %1935 = vmatpush1.msra.mxu0 0.0
    %1936 = vmatprep.subr.mxu0 0.0
    %1937 = vmatpush1.msra.mxu0 0.0
    %1938 = vmatprep.subr.mxu0 0.0
    %1939 = vmatpush1.msra.mxu0 0.0
    %1940 = vmatprep.subr.mxu0 0.0
    %1941 = vmatpush1.msra.mxu0 0.0
    %1942 = vmatprep.subr.mxu0 0.0
    %1943 = vmatpush1.msra.mxu0 0.0
    %1944 = vmatprep.mubr.f32.mxu0 0.0
    %1945 = vmatmul.mubr.f32.gmra.mrb[0].mxu0 %v1878
    %v1946 = vpop.f32.mrb[0].mxu0
    %v1947 = vadd.f32 0.0, %v1946
    %v1948 = vpop.f32.mrb[0].mxu0
    %1949 = vdwg.mxu0
    %v1950 = vmax.f32 %v1947, 1e-30
    %v1951 = vrsqrt.pop %v1950
    %v1952 = vmul.f32 %v1947, %v1951
    %v1953 = vmax.f32 %v1952, 1e-15
    %vm1954 = vcmp.gt.f32.partialorder %v1953, 3.106303
    %v1955 = vmul.f32 %v1951, 3.106303
    %v1956 = vsel %vm1954, %v1955, 1.0
    %1958 = vset.pattern.permute.xlu0 0
    %1959 = vperm.xlu0 %1958, %v1956
    %v1960 = vpop.permute.xlu0 %1959
    %v1962 = vmul.f32 %v1960, %v1871
    %v1963 = vmax.f32 %v1962, 0.0
    %v1964 = vmul.f32 %v1963, %v1963
    %v1966 = vsel %vm241, %v1964, 0
    %1968 = vmatprep.subr.mxu0 0.0
    %1969 = vmatpush1.msra.mxu0 1.0
    %1970 = vmatprep.subr.mxu0 0.0
    %1971 = vmatpush1.msra.mxu0 1.0
    %1972 = vmatprep.subr.mxu0 0.0
    %1973 = vmatpush1.msra.mxu0 1.0
    %1974 = vmatprep.subr.mxu0 0.0
    %1975 = vmatpush1.msra.mxu0 1.0
    %1976 = vmatprep.subr.mxu0 0.0
    %1977 = vmatpush1.msra.mxu0 0.0
    %1978 = vmatprep.subr.mxu0 0.0
    %1979 = vmatpush1.msra.mxu0 0.0
    %1980 = vmatprep.subr.mxu0 0.0
    %1981 = vmatpush1.msra.mxu0 0.0
    %1982 = vmatprep.subr.mxu0 0.0
    %1983 = vmatpush1.msra.mxu0 0.0
    %1984 = vmatprep.subr.mxu0 0.0
    %1985 = vmatpush1.msra.mxu0 0.0
    %1986 = vmatprep.subr.mxu0 0.0
    %1987 = vmatpush1.msra.mxu0 0.0
    %1988 = vmatprep.subr.mxu0 0.0
    %1989 = vmatpush1.msra.mxu0 0.0
    %1990 = vmatprep.subr.mxu0 0.0
    %1991 = vmatpush1.msra.mxu0 0.0
    %1992 = vmatprep.subr.mxu0 0.0
    %1993 = vmatpush1.msra.mxu0 0.0
    %1994 = vmatprep.subr.mxu0 0.0
    %1995 = vmatpush1.msra.mxu0 0.0
    %1996 = vmatprep.subr.mxu0 0.0
    %1997 = vmatpush1.msra.mxu0 0.0
    %1998 = vmatprep.subr.mxu0 0.0
    %1999 = vmatpush1.msra.mxu0 0.0
    %2000 = vmatprep.subr.mxu0 0.0
    %2001 = vmatpush1.msra.mxu0 0.0
    %2002 = vmatprep.subr.mxu0 0.0
    %2003 = vmatpush1.msra.mxu0 0.0
    %2004 = vmatprep.subr.mxu0 0.0
    %2005 = vmatpush1.msra.mxu0 0.0
    %2006 = vmatprep.subr.mxu0 0.0
    %2007 = vmatpush1.msra.mxu0 0.0
    %2008 = vmatprep.subr.mxu0 0.0
    %2009 = vmatpush1.msra.mxu0 0.0
    %2010 = vmatprep.subr.mxu0 0.0
    %2011 = vmatpush1.msra.mxu0 0.0
    %2012 = vmatprep.subr.mxu0 0.0
    %2013 = vmatpush1.msra.mxu0 0.0
    %2014 = vmatprep.subr.mxu0 0.0
    %2015 = vmatpush1.msra.mxu0 0.0
    %2016 = vmatprep.subr.mxu0 0.0
    %2017 = vmatpush1.msra.mxu0 0.0
    %2018 = vmatprep.subr.mxu0 0.0
    %2019 = vmatpush1.msra.mxu0 0.0
    %2020 = vmatprep.subr.mxu0 0.0
    %2021 = vmatpush1.msra.mxu0 0.0
    %2022 = vmatprep.subr.mxu0 0.0
    %2023 = vmatpush1.msra.mxu0 0.0
    %2024 = vmatprep.subr.mxu0 0.0
    %2025 = vmatpush1.msra.mxu0 0.0
    %2026 = vmatprep.subr.mxu0 0.0
    %2027 = vmatpush1.msra.mxu0 0.0
    %2028 = vmatprep.subr.mxu0 0.0
    %2029 = vmatpush1.msra.mxu0 0.0
    %2030 = vmatprep.subr.mxu0 0.0
    %2031 = vmatpush1.msra.mxu0 0.0
    %2032 = vmatprep.mubr.f32.mxu0 0.0
    %2033 = vmatmul.mubr.f32.gmra.mrb[0].mxu0 %v1966
    %v2034 = vpop.f32.mrb[0].mxu0
    %v2035 = vadd.f32 0.0, %v2034
    %v2036 = vpop.f32.mrb[0].mxu0
    %2037 = vdwg.mxu0
    %v2038 = vmax.f32 %v2035, 1e-30
    %v2039 = vrsqrt.pop %v2038
    %v2040 = vmul.f32 %v2035, %v2039
    %v2041 = vmax.f32 %v2040, 1e-15
    %vm2042 = vcmp.gt.f32.partialorder %v2041, 3.106303
    %v2043 = vmul.f32 %v2039, 3.106303
    %v2044 = vsel %vm2042, %v2043, 1.0
    %2046 = vset.pattern.permute.xlu0 0
    %2047 = vperm.xlu0 %2046, %v2044
    %v2048 = vpop.permute.xlu0 %2047
    %v2050 = vmul.f32 %v2048, %v1963
    %v2051 = vpack.c.bf16 %v782, %v782
    %v2053 = vsel %vm560, %v66, 0
    %v2056 = vsel %vm564, %v2051, 0
    %2058 = vmatprep.subr.bf16.mxu0 0
    %2059 = vmatpush1.bf16.msra.mxu0 %v2056
    %2060 = vmatprep.subr.bf16.mxu0 0
    %2061 = vmatpush1.bf16.msra.mxu0 0
    %2062 = vmatprep.subr.bf16.mxu0 0
    %2063 = vmatpush1.bf16.msra.mxu0 0
    %2064 = vmatprep.subr.bf16.mxu0 0
    %2065 = vmatpush1.bf16.msra.mxu0 0
    %2066 = vmatprep.subr.bf16.mxu0 0
    %2067 = vmatpush1.bf16.msra.mxu0 0
    %2068 = vmatprep.subr.bf16.mxu0 0
    %2069 = vmatpush1.bf16.msra.mxu0 0
    %2070 = vmatprep.subr.bf16.mxu0 0
    %2071 = vmatpush1.bf16.msra.mxu0 0
    %2072 = vmatprep.subr.bf16.mxu0 0
    %2073 = vmatpush1.bf16.msra.mxu0 0
    %2074 = vmatprep.subr.bf16.mxu0 0
    %2075 = vmatpush1.bf16.msra.mxu0 0
    %2076 = vmatprep.subr.bf16.mxu0 0
    %2077 = vmatpush1.bf16.msra.mxu0 0
    %2078 = vmatprep.subr.bf16.mxu0 0
    %2079 = vmatpush1.bf16.msra.mxu0 0
    %2080 = vmatprep.subr.bf16.mxu0 0
    %2081 = vmatpush1.bf16.msra.mxu0 0
    %2082 = vmatprep.subr.bf16.mxu0 0
    %2083 = vmatpush1.bf16.msra.mxu0 0
    %2084 = vmatprep.subr.bf16.mxu0 0
    %2085 = vmatpush1.bf16.msra.mxu0 0
    %2086 = vmatprep.subr.bf16.mxu0 0
    %2087 = vmatpush1.bf16.msra.mxu0 0
    %2088 = vmatprep.subr.bf16.mxu0 0
    %2089 = vmatpush1.bf16.msra.mxu0 0
    %2090 = vmatprep.mubr.bf16.mxu0 0
    %2091 = vmatmul.mubr.bf16.gmra.mrb[0].mxu0 %v2053
    %v2092 = vpop.f32.mrb[0].mxu0
    %v2093 = vadd.f32 0.0, %v2092
    %v2094 = vpop.f32.mrb[0].mxu0
    %v2095 = vpop.f32.mrb[0].mxu0
    %v2096 = vpop.f32.mrb[0].mxu0
    %2097 = vdwg.mxu0
    %v2098 = vpack.c.bf16 %v1416, %v1416
    %v2100 = vsel %vm564, %v2098, 0
    %2102 = vmatprep.subr.bf16.mxu0 0
    %2103 = vmatpush1.bf16.msra.mxu0 %v2100
    %2104 = vmatprep.subr.bf16.mxu0 0
    %2105 = vmatpush1.bf16.msra.mxu0 0
    %2106 = vmatprep.subr.bf16.mxu0 0
    %2107 = vmatpush1.bf16.msra.mxu0 0
    %2108 = vmatprep.subr.bf16.mxu0 0
    %2109 = vmatpush1.bf16.msra.mxu0 0
    %2110 = vmatprep.subr.bf16.mxu0 0
    %2111 = vmatpush1.bf16.msra.mxu0 0
    %2112 = vmatprep.subr.bf16.mxu0 0
    %2113 = vmatpush1.bf16.msra.mxu0 0
    %2114 = vmatprep.subr.bf16.mxu0 0
    %2115 = vmatpush1.bf16.msra.mxu0 0
    %2116 = vmatprep.subr.bf16.mxu0 0
    %2117 = vmatpush1.bf16.msra.mxu0 0
    %2118 = vmatprep.subr.bf16.mxu0 0
    %2119 = vmatpush1.bf16.msra.mxu0 0
    %2120 = vmatprep.subr.bf16.mxu0 0
    %2121 = vmatpush1.bf16.msra.mxu0 0
    %2122 = vmatprep.subr.bf16.mxu0 0
    %2123 = vmatpush1.bf16.msra.mxu0 0
    %2124 = vmatprep.subr.bf16.mxu0 0
    %2125 = vmatpush1.bf16.msra.mxu0 0
    %2126 = vmatprep.subr.bf16.mxu0 0
    %2127 = vmatpush1.bf16.msra.mxu0 0
    %2128 = vmatprep.subr.bf16.mxu0 0
    %2129 = vmatpush1.bf16.msra.mxu0 0
    %2130 = vmatprep.subr.bf16.mxu0 0
    %2131 = vmatpush1.bf16.msra.mxu0 0
    %2132 = vmatprep.subr.bf16.mxu0 0
    %2133 = vmatpush1.bf16.msra.mxu0 0
    %2134 = vmatprep.mubr.bf16.mxu0 0
    %2135 = vmatmul.mubr.bf16.gmra.mrb[0].mxu0 %v2053
    %v2136 = vpop.f32.mrb[0].mxu0
    %v2137 = vadd.f32 0.0, %v2136
    %v2138 = vpop.f32.mrb[0].mxu0
    %v2139 = vpop.f32.mrb[0].mxu0
    %v2140 = vpop.f32.mrb[0].mxu0
    %2141 = vdwg.mxu0
    %v2142 = vpack.c.bf16 %v2050, %v2050
    %v2144 = vsel %vm564, %v2142, 0
    %2146 = vmatprep.subr.bf16.mxu0 0
    %2147 = vmatpush1.bf16.msra.mxu0 %v2144
    %2148 = vmatprep.subr.bf16.mxu0 0
    %2149 = vmatpush1.bf16.msra.mxu0 0
    %2150 = vmatprep.subr.bf16.mxu0 0
    %2151 = vmatpush1.bf16.msra.mxu0 0
    %2152 = vmatprep.subr.bf16.mxu0 0
    %2153 = vmatpush1.bf16.msra.mxu0 0
    %2154 = vmatprep.subr.bf16.mxu0 0
    %2155 = vmatpush1.bf16.msra.mxu0 0
    %2156 = vmatprep.subr.bf16.mxu0 0
    %2157 = vmatpush1.bf16.msra.mxu0 0
    %2158 = vmatprep.subr.bf16.mxu0 0
    %2159 = vmatpush1.bf16.msra.mxu0 0
    %2160 = vmatprep.subr.bf16.mxu0 0
    %2161 = vmatpush1.bf16.msra.mxu0 0
    %2162 = vmatprep.subr.bf16.mxu0 0
    %2163 = vmatpush1.bf16.msra.mxu0 0
    %2164 = vmatprep.subr.bf16.mxu0 0
    %2165 = vmatpush1.bf16.msra.mxu0 0
    %2166 = vmatprep.subr.bf16.mxu0 0
    %2167 = vmatpush1.bf16.msra.mxu0 0
    %2168 = vmatprep.subr.bf16.mxu0 0
    %2169 = vmatpush1.bf16.msra.mxu0 0
    %2170 = vmatprep.subr.bf16.mxu0 0
    %2171 = vmatpush1.bf16.msra.mxu0 0
    %2172 = vmatprep.subr.bf16.mxu0 0
    %2173 = vmatpush1.bf16.msra.mxu0 0
    %2174 = vmatprep.subr.bf16.mxu0 0
    %2175 = vmatpush1.bf16.msra.mxu0 0
    %2176 = vmatprep.subr.bf16.mxu0 0
    %2177 = vmatpush1.bf16.msra.mxu0 0
    %2178 = vmatprep.mubr.bf16.mxu0 0
    %2179 = vmatmul.mubr.bf16.gmra.mrb[0].mxu0 %v2053
    %v2180 = vpop.f32.mrb[0].mxu0
    %v2181 = vadd.f32 0.0, %v2180
    %v2182 = vpop.f32.mrb[0].mxu0
    %v2183 = vpop.f32.mrb[0].mxu0
    %v2184 = vpop.f32.mrb[0].mxu0
    %2185 = vdwg.mxu0
    %v2186 = vmax.f32 %v2093, 0.0
    %v2187 = vmax.f32 %v2137, 0.0
    %v2188 = vadd.f32 %v2186, %v2187
    %v2189 = vmax.f32 %v2181, 0.0
    %v2190 = vadd.f32 %v2188, %v2189
    %v2191 = vld [vmem:[%s13] sm:$0xff]
    %v2192 = vld [vmem:[%s13 + $0x8] sm:$0xff]
    %v2193 = vld [vmem:[%s13 + $0x10] sm:$0xff]
    %v2194 = vld [vmem:[%s13 + $0x18] sm:$0xff]
    %v2195 = vld [vmem:[%s14] sm:$0x1]
    %v2197 = vlaneseq
    %v2198 = vshrl.u32 %v2197, 7
    %v2199 = vsub.s32 0, %v2198
    %v2200 = vrot.slane %v2195, %v2199
    %v2203 = vsel %vm241, %v2190, 0
    %2205 = vmatprep.subr.mxu0 0.0
    %2206 = vmatpush1.msra.mxu0 %v2191
    %2207 = vmatprep.subr.mxu0 0.0
    %2208 = vmatpush1.msra.mxu0 %v2192
    %2209 = vmatprep.subr.mxu0 0.0
    %2210 = vmatpush1.msra.mxu0 %v2193
    %2211 = vmatprep.subr.mxu0 0.0
    %2212 = vmatpush1.msra.mxu0 %v2194
    %2213 = vmatprep.subr.mxu0 0.0
    %2214 = vmatpush1.msra.mxu0 0.0
    %2215 = vmatprep.subr.mxu0 0.0
    %2216 = vmatpush1.msra.mxu0 0.0
    %2217 = vmatprep.subr.mxu0 0.0
    %2218 = vmatpush1.msra.mxu0 0.0
    %2219 = vmatprep.subr.mxu0 0.0
    %2220 = vmatpush1.msra.mxu0 0.0
    %2221 = vmatprep.subr.mxu0 0.0
    %2222 = vmatpush1.msra.mxu0 0.0
    %2223 = vmatprep.subr.mxu0 0.0
    %2224 = vmatpush1.msra.mxu0 0.0
    %2225 = vmatprep.subr.mxu0 0.0
    %2226 = vmatpush1.msra.mxu0 0.0
    %2227 = vmatprep.subr.mxu0 0.0
    %2228 = vmatpush1.msra.mxu0 0.0
    %2229 = vmatprep.subr.mxu0 0.0
    %2230 = vmatpush1.msra.mxu0 0.0
    %2231 = vmatprep.subr.mxu0 0.0
    %2232 = vmatpush1.msra.mxu0 0.0
    %2233 = vmatprep.subr.mxu0 0.0
    %2234 = vmatpush1.msra.mxu0 0.0
    %2235 = vmatprep.subr.mxu0 0.0
    %2236 = vmatpush1.msra.mxu0 0.0
    %2237 = vmatprep.subr.mxu0 0.0
    %2238 = vmatpush1.msra.mxu0 0.0
    %2239 = vmatprep.subr.mxu0 0.0
    %2240 = vmatpush1.msra.mxu0 0.0
    %2241 = vmatprep.subr.mxu0 0.0
    %2242 = vmatpush1.msra.mxu0 0.0
    %2243 = vmatprep.subr.mxu0 0.0
    %2244 = vmatpush1.msra.mxu0 0.0
    %2245 = vmatprep.subr.mxu0 0.0
    %2246 = vmatpush1.msra.mxu0 0.0
    %2247 = vmatprep.subr.mxu0 0.0
    %2248 = vmatpush1.msra.mxu0 0.0
    %2249 = vmatprep.subr.mxu0 0.0
    %2250 = vmatpush1.msra.mxu0 0.0
    %2251 = vmatprep.subr.mxu0 0.0
    %2252 = vmatpush1.msra.mxu0 0.0
    %2253 = vmatprep.subr.mxu0 0.0
    %2254 = vmatpush1.msra.mxu0 0.0
    %2255 = vmatprep.subr.mxu0 0.0
    %2256 = vmatpush1.msra.mxu0 0.0
    %2257 = vmatprep.subr.mxu0 0.0
    %2258 = vmatpush1.msra.mxu0 0.0
    %2259 = vmatprep.subr.mxu0 0.0
    %2260 = vmatpush1.msra.mxu0 0.0
    %2261 = vmatprep.subr.mxu0 0.0
    %2262 = vmatpush1.msra.mxu0 0.0
    %2263 = vmatprep.subr.mxu0 0.0
    %2264 = vmatpush1.msra.mxu0 0.0
    %2265 = vmatprep.subr.mxu0 0.0
    %2266 = vmatpush1.msra.mxu0 0.0
    %2267 = vmatprep.subr.mxu0 0.0
    %2268 = vmatpush1.msra.mxu0 0.0
    %2269 = vmatprep.mubr.f32.mxu0 0.0
    %2270 = vmatmul.mubr.f32.gmra.mrb[0].mxu0 %v2203
    %v2271 = vpop.f32.mrb[0].mxu0
    %v2272 = vadd.f32 %v2200, %v2271
    %v2273 = vpop.f32.mrb[0].mxu0
    %2274 = vdwg.mxu0
    %vm2275 = vcmask 25600
    %v2276 = vsel %vm2275, %v2272, -inf
    %2277 = vmax.xlane.f32.xlu0 %v2276
    %v2278 = vpop.xlane.xlu0 %2277
    %v2279 = vsub.f32 %v2272, %v2278
    %v2280 = vmul.f32 %v2279, 1.442695
    %v2281 = vpow.pop %v2280
    %v2282 = vsel %vm2275, %v2281, 0.0
    %2283 = vadd.xlane.f32.xlu0 %v2282
    %v2284 = vpop.xlane.xlu0 %2283
    %v2285 = vlog2.pop %v2284
    %v2286 = vmul.f32 %v2285, 0.6931472
    %v2287 = vsub.f32 %v2279, %v2286
    %2288 = vst.msk [vmem:[#allocation5] sm:$0x3] %vm2275, %v2287
    // Predicated region
    $region66: #{tpu_custom_call.1} parent=1 // pred_check
      _
    $region67: #{tpu_custom_call.1} parent=1 // pred_check_branch
      %2290 = sbr.rel (0) target = $region69
    $region68: #{tpu_custom_call.1} parent=1 // pred_region
      %s2292 = ssub.s32 32, 32
      %2293 = vsyncadd [#allocation3], %s2292
      %s2295 = sshll.u32 [#allocation5], 4
      %s2296 = int_to_ptr.vmem [resolvable:$true] %s2295
      %2298 = dma.vmem_to_hbm [thread:$0]  %s2296, 32, %s15, [#allocation3]
    $region69: #{tpu_custom_call.1} parent=1 // pred_fallthru
      _
    // Predicated region
    $region70: #{tpu_custom_call.1} parent=1 // pred_check
      _
    $region71: #{tpu_custom_call.1} parent=1 // pred_check_branch
      %2300 = sbr.rel (0) target = $region73
    $region72: #{tpu_custom_call.1} parent=1 // pred_region
      %2301 = dma.done [#allocation3], 32
    $region73: #{tpu_custom_call.1} parent=1 // pred_fallthru
      _
    %2302 = vsyncpa [#allocation3], 1
    %2303 = vsyncpa [#allocation4], 1

</llo_original>
